<compile_context>
chip_gen: v7x
topology: tpu7x:2x2x1
jax: 0.10.0
libtpu: 0.0.40
codegen_flags: <defaults>
</compile_context>

<pallas_src>
import functools

import jax
import jax.numpy as jnp
from jax.experimental import pallas as pl
from jax.experimental.pallas import tpu as pltpu

# keep f32 matmuls at full precision (host-side folding + pure-JAX reference)
jax.config.update("jax_default_matmul_precision", "highest")

_SQRT_HALF = 0.7071067811865476
_BN_EPS = 1e-5
_LANE = 128          # lane-dense width for the final store
_M = 40              # template count / FC width, fixed by Linear(40, 40)


# ---------------------------------------------------------------------------
# small math helpers usable inside the Pallas kernel
# ---------------------------------------------------------------------------
def _erf_approx(x):
    # Abramowitz & Stegun 7.1.26 (max abs err ~1.5e-7); only exp/abs/where.
    p = 0.3275911
    a1, a2, a3, a4, a5 = 0.254829592, -0.284496736, 1.421413741, -1.453152027, 1.061405429
    sgn = jnp.where(x >= 0, 1.0, -1.0)
    ax = jnp.abs(x)
    t = 1.0 / (1.0 + p * ax)
    poly = ((((a5 * t + a4) * t + a3) * t + a2) * t + a1) * t
    return sgn * (1.0 - poly * jnp.exp(-ax * ax))


def _gelu(x):  # exact (erf-based) GELU, matching torch.nn.GELU default
    return 0.5 * x * (1.0 + _erf_approx(x * _SQRT_HALF))


# ---------------------------------------------------------------------------
# single fused Pallas kernel (invoked once; no grid; no per-batch loop)
# ---------------------------------------------------------------------------
def fused_kernel(sig_bc_ref, sig_flat_ref, temp_ref, ref_ref,
                 w1_ref, b1_ref, w2_ref, b2_ref, w13t_ref, amean_ref, gm_ref,
                 band21c_ref, bias21c_ref, band31c_ref, bias31c_ref,
                 fcw_ref, fcb_ref, selmask_ref, sc_ref, out_ref):
    f32 = jnp.float32
    B = out_ref.shape[0]

    # ---- time branch: conv11+BN -> gelu -> conv12+BN -> gelu -> conv13 -> mean_C
    # (BN affine pre-folded into w1/b1, w2/b2; all B*C rows processed at once) ----
    x = sig_bc_ref[...]                                                 # (B*C, T)
    h = _gelu(jnp.dot(x, w1_ref[...], preferred_element_type=f32) + b1_ref[...])
    h = _gelu(jnp.dot(h, w2_ref[...], preferred_element_type=f32) + b2_ref[...])
    hm = jnp.dot(amean_ref[...], h, preferred_element_type=f32)        # (B, 8T)
    xt = jnp.dot(hm, w13t_ref[...], preferred_element_type=f32) + sc_ref[0]   # (B, T)

    # ---- frequency branch: rfft -> complex filter -> irfft -> combine -> mean_C,
    # all folded into ONE precomputed (C*T, T) linear map gm ----
    xf = jnp.dot(sig_flat_ref[...], gm_ref[...], preferred_element_type=f32) + sc_ref[1]  # (B, T)

    # ---- template / reference feature convs, batched over B along the lane axis ----
    tfeat = (jnp.dot(band21c_ref[...], temp_ref[...], preferred_element_type=f32)
             + bias21c_ref[...])                                        # (T, B*M)
    rfeat = (jnp.dot(band31c_ref[...], ref_ref[...], preferred_element_type=f32)
             + bias31c_ref[...])                                        # (T, B*M)

    # ---- SE fusion gate, vectorized over the batch (hoisted) ----
    hg = _gelu(jnp.mean(xt, axis=1, keepdims=True) * sc_ref[3]
               + jnp.mean(xf, axis=1, keepdims=True) * sc_ref[4])       # (B, 1)
    sw_t = jax.nn.sigmoid(hg * sc_ref[5])                               # (B, 1)
    sw_f = jax.nn.sigmoid(hg * sc_ref[6])                               # (B, 1)

    # ---- correlations: batched numerators, hoisted norms, rsqrt instead of div/sqrt ----
    sigs = jnp.concatenate([xt, xf], axis=0)                            # (2B, T)
    inv_sig = jax.lax.rsqrt(jnp.sum(sigs * sigs, axis=1, keepdims=True))  # (2B, 1)
    inv_t = jax.lax.rsqrt(jnp.sum(tfeat * tfeat, axis=0, keepdims=True))  # (1, B*M)
    inv_r = jax.lax.rsqrt(jnp.sum(rfeat * rfeat, axis=0, keepdims=True))  # (1, B*M)
    num_t = jnp.dot(sigs, tfeat, preferred_element_type=f32)            # (2B, B*M)
    num_r = jnp.dot(sigs, rfeat, preferred_element_type=f32)            # (2B, B*M)
    alpha = sc_ref[2]
    cmix = (alpha * (num_t * inv_t) + (1.0 - alpha) * (num_r * inv_r)) * inv_sig  # (2B, B*M)

    # gate the time rows vs. the freq rows and fold them
    # TODO(synk): CorrGateFusion's output is dead code in the reference forward
    # (computed then immediately overwritten), so it is not evaluated here.
    s1 = cmix[:B, :] * sw_t + cmix[B:, :] * sw_f                        # (B, B*M)

    # ---- diagonal-block selection + Linear(40,40) as ONE lane-dense matmul;
    # the single HBM store of the kernel is an unmasked (B, 128) tile ----
    out_ref[...] = (jnp.dot(s1 * selmask_ref[...], fcw_ref[...],
                            preferred_element_type=f32) + fcb_ref[...])


# ---------------------------------------------------------------------------
# host-side weight folding (done ONCE, outside the forward)
# ---------------------------------------------------------------------------
def band_matrix(w, T):
    """w: (Cout, Cin, K) taps along T, 'same' padding, K odd.
    Returns (Cout*T, Cin*T) with row index (o*T + t_out), col index (i*T + t_in)."""
    Cout, Cin, K = w.shape
    P = K // 2
    t_out = jnp.arange(T)[:, None]
    t_in = jnp.arange(T)[None, :]
    k = t_in - t_out + P
    valid = ((k >= 0) & (k < K)).astype(w.dtype)
    kc = jnp.clip(k, 0, K - 1)
    band = w[:, :, kc] * valid[None, None, :, :]            # (Cout, Cin, T, T)
    return band.transpose(0, 2, 1, 3).reshape(Cout * T, Cin * T)


def fold_params(p, B, C, T):
    f32 = jnp.float32
    F = T // 2 + 1

    # --- time branch: band matrices with eval-mode BN folded into weights/biases ---
    # TODO(synk): assumes running_mean=0 / running_var=1 (fresh module in eval mode);
    # fold trained running stats here for a real checkpoint.
    band11t = band_matrix(p["w11"], T).T                              # (T, 8T)
    band12t = band_matrix(p["w12"], T).T                              # (8T, 8T)
    bnsc_row = jnp.repeat(p["bn_gamma"] / jnp.sqrt(1.0 + _BN_EPS), T)[None, :]
    bnsh_row = jnp.repeat(p["bn_beta"], T)[None, :]
    b11row = jnp.repeat(p["b11"], T)[None, :]
    b12row = jnp.repeat(p["b12"], T)[None, :]
    w1 = band11t * bnsc_row
    b1 = b11row * bnsc_row + bnsh_row
    w2 = band12t * bnsc_row
    b2 = b12row * bnsc_row + bnsh_row
    w13t = jnp.kron(p["w13"].reshape(-1, 1), jnp.eye(T, dtype=f32))   # (8T, T)
    amean = jnp.kron(jnp.eye(B, dtype=f32), jnp.full((1, C), 1.0 / C, f32))  # (B, B*C)

    # --- frequency branch: rfft -> complex filter -> irfft -> 1x1 combine -> mean_C,
    #     folded into one (C*T, T) linear map gm ---
    t_idx = jnp.arange(T, dtype=f32)
    f_idx = jnp.arange(F, dtype=f32)
    ang = 2.0 * jnp.pi * jnp.outer(t_idx, f_idx) / T                  # (T, F)
    cr = jnp.cos(ang)
    ci = -jnp.sin(ang)
    scale = jnp.full((F,), 2.0, f32).at[0].set(1.0)
    if T % 2 == 0:
        scale = scale.at[F - 1].set(1.0)
    br = (scale[:, None] / T) * jnp.cos(ang.T)                        # (F, T)
    bi = -(scale[:, None] / T) * jnp.sin(ang.T)
    awr = jnp.einsum("d,dcf->cf", p["wcomb"], p["wr"])
    awi = jnp.einsum("d,dcf->cf", p["wcomb"], p["wi"])
    coef_r = jnp.einsum("cf,ft->cft", awr, br) + jnp.einsum("cf,ft->cft", awi, bi)
    coef_i = jnp.einsum("cf,ft->cft", awr, bi) - jnp.einsum("cf,ft->cft", awi, br)
    g = jnp.einsum("tf,cfs->cts", cr, coef_r) + jnp.einsum("tf,cfs->cts", ci, coef_i)
    gm = g.reshape(C * T, T) / C                                      # (C*T, T)

    # --- template/reference feature convs: compose the two linear convs (exact) ---
    band21 = band_matrix(p["w21"], T)                                 # (40T, C*T)
    band22 = band_matrix(p["w22"], T)                                 # (T, 40T)
    band21c = band22 @ band21                                         # (T, C*T)
    bias21c = band22 @ jnp.repeat(p["b21"], T)[:, None] + p["b22"][0, 0]   # (T, 1)
    band31 = band_matrix(p["w31"], T)                                 # (40T, (C+1)*T)
    band32 = band_matrix(p["w32"], T)                                 # (T, 40T)
    band31c = band32 @ band31                                         # (T, (C+1)*T)
    bias31c = band32 @ jnp.repeat(p["b31"], T)[:, None] + p["b32"][0, 0]   # (T, 1)

    # --- final Linear(40,40): zero-pad to 128 lanes and replicate per batch block
    #     so diagonal-block select + fc is one (B, B*M) x (B*M, 128) matmul ---
    fcw_pad = jnp.zeros((_M, _LANE), f32).at[:, :_M].set(p["fc_w"].T)
    fcw_fold = jnp.tile(fcw_pad, (B, 1))                              # (B*M, 128)
    fcb_pad = jnp.zeros((1, _LANE), f32).at[0, :_M].set(p["fc_b"])
    selmask = jnp.kron(jnp.eye(B, dtype=f32), jnp.ones((1, _M), f32))  # (B, B*M)

    # --- all scalars packed into one SMEM vector ---
    scal = jnp.concatenate([
        p["b13"].reshape(1), p["bcomb"].reshape(1), p["alpha"].reshape(1),
        p["se_w1"].reshape(-1), p["se_w2"].reshape(-1),
        jnp.zeros((1,), f32)]).astype(f32)                            # (8,)

    return {"w1": w1, "b1": b1, "w2": w2, "b2": b2, "w13t": w13t, "amean": amean,
            "gm": gm, "band21c": band21c, "bias21c": bias21c,
            "band31c": band31c, "bias31c": bias31c,
            "fcw_fold": fcw_fold, "fcb_pad": fcb_pad, "selmask": selmask,
            "scal": scal}


# ---------------------------------------------------------------------------
# forward: minimal input relayout + one pallas_call
# ---------------------------------------------------------------------------
def conv_fft_ca_forward(folded, signal, temp, ref_in):
    f32 = jnp.float32
    B, _, T, C = signal.shape
    M = temp.shape[-1]

    # one tiny transpose; both kernel views of it are free bitcast reshapes
    sig_ct = jnp.transpose(signal[:, 0], (0, 2, 1)).astype(f32)       # (B, C, T)
    sig_bc = sig_ct.reshape(B * C, T)                                 # (B*C, T)
    sig_flat = sig_ct.reshape(B, C * T)                               # (B, C*T)
    # lane-concat the batch so each feature conv is ONE 80-lane matmul in-kernel
    temp_cat = jnp.transpose(temp.astype(f32), (1, 2, 0, 3)).reshape(C * T, B * M)
    ref_cat = jnp.transpose(ref_in.astype(f32), (1, 2, 0, 3)).reshape((C + 1) * T, B * M)

    args = (sig_bc, sig_flat, temp_cat, ref_cat,
            folded["w1"], folded["b1"], folded["w2"], folded["b2"],
            folded["w13t"], folded["amean"], folded["gm"],
            folded["band21c"], folded["bias21c"], folded["band31c"], folded["bias31c"],
            folded["fcw_fold"], folded["fcb_pad"], folded["selmask"], folded["scal"])

    vmem = pl.BlockSpec(memory_space=pltpu.MemorySpace.VMEM)
    smem = pl.BlockSpec(memory_space=pltpu.MemorySpace.SMEM)

    out_pad = pl.pallas_call(
        fused_kernel,
        out_shape=jax.ShapeDtypeStruct((B, _LANE), f32),
        in_specs=[vmem] * (len(args) - 1) + [smem],
        out_specs=vmem,
    )(*args)
    return out_pad[:, :M]                                             # (B, 40)


model_forward = jax.jit(conv_fft_ca_forward)


# ---------------------------------------------------------------------------
# pure-JAX reference (direct convs + jnp.fft), for validation only
# ---------------------------------------------------------------------------
def reference_forward(p, signal, temp, ref_in):
    B, _, T, C = signal.shape
    gelu = functools.partial(jax.nn.gelu, approximate=False)

    def conv_t(x, w, b):  # x: (B, Cin, T, W), w: (Cout, Cin, K), b: (Cout,)
        K = w.shape[-1]
        P = K // 2
        xp = jnp.pad(x, ((0, 0), (0, 0), (P, P), (0, 0)))
        out = sum(jnp.einsum("bitw,oi->botw", xp[:, :, k:k + T, :], w[:, :, k])
                  for k in range(K))
        return out + b[None, :, None, None]

    bnsc = p["bn_gamma"] / jnp.sqrt(1.0 + _BN_EPS)
    bnsh = p["bn_beta"]
    bn = lambda x: x * bnsc[None, :, None, None] + bnsh[None, :, None, None]

    # time branch
    h = gelu(bn(conv_t(signal, p["w11"], p["b11"])))
    h = gelu(bn(conv_t(h, p["w12"], p["b12"])))
    y3 = jnp.einsum("botc,o->btc", h, p["w13"]) + p["b13"][0, 0]
    xt = y3.mean(axis=2)                                              # (B, T)

    # freq branch
    X = signal[:, 0].transpose(0, 2, 1)                               # (B, C, T)
    Xf = jnp.fft.rfft(X, n=T, axis=-1)
    Yf = Xf[:, None, :, :] * (p["wr"] + 1j * p["wi"])[None]
    y = jnp.fft.irfft(Yf, n=T, axis=-1)                               # (B, D, C, T)
    z = jnp.einsum("bdct,d->btc", y, p["wcomb"]) + p["bcomb"][0, 0]
    xf = z.mean(axis=2)                                               # (B, T)

    # SE fusion weights
    s = jnp.stack([xt.mean(axis=1), xf.mean(axis=1)], axis=1)         # (B, 2)
    hg = gelu(s @ p["se_w1"].T)
    wse = jax.nn.sigmoid(hg @ p["se_w2"].T)                           # (B, 2)

    tfeat = conv_t(conv_t(temp, p["w21"], p["b21"]), p["w22"], p["b22"].reshape(1))[:, 0]
    rfeat = conv_t(conv_t(ref_in, p["w31"], p["b31"]), p["w32"], p["b32"].reshape(1))[:, 0]

    def corr(sig, tpl):
        num = jnp.einsum("bt,btm->bm", sig, tpl)
        xx = jnp.einsum("bt,bt->b", sig, sig)
        tt = jnp.sum(tpl * tpl, axis=1)
        return num / jnp.sqrt(xx)[:, None] / jnp.sqrt(tt)

    a = p["alpha"][0, 0]
    ct = a * corr(xt, tfeat) + (1.0 - a) * corr(xt, rfeat)
    cf = a * corr(xf, tfeat) + (1.0 - a) * corr(xf, rfeat)
    c = wse[:, 0:1] * ct + wse[:, 1:2] * cf
    return c @ p["fc_w"].T + p["fc_b"][None, :]


# ---------------------------------------------------------------------------
# main
# ---------------------------------------------------------------------------
def make_params(key, C, T, D):
    F = T // 2 + 1
    ks = jax.random.split(key, 24)
    rn = lambda k, shape, s=0.1: (s * jax.random.normal(k, shape)).astype(jnp.float32)
    return {
        "w11": rn(ks[0], (8, 1, 9)), "b11": rn(ks[1], (8,), 0.05),
        "w12": rn(ks[2], (8, 8, 9)), "b12": rn(ks[3], (8,), 0.05),
        "w13": rn(ks[4], (8,)), "b13": rn(ks[5], (1, 1), 0.05),
        "bn_gamma": 1.0 + rn(ks[6], (8,)), "bn_beta": rn(ks[7], (8,), 0.05),
        "wr": rn(ks[8], (D, C, F), 0.01), "wi": rn(ks[9], (D, C, F), 0.01),
        "wcomb": rn(ks[10], (D,)), "bcomb": rn(ks[11], (1, 1), 0.05),
        "se_w1": rn(ks[12], (1, 2), 0.5), "se_w2": rn(ks[13], (2, 1), 0.5),
        "w21": rn(ks[14], (40, C, 9)), "b21": rn(ks[15], (40,), 0.05),
        "w22": rn(ks[16], (1, 40, 9)), "b22": rn(ks[17], (1, 1), 0.05),
        "w31": rn(ks[18], (40, C + 1, 9)), "b31": rn(ks[19], (40,), 0.05),
        "w32": rn(ks[20], (1, 40, 9)), "b32": rn(ks[21], (1, 1), 0.05),
        "alpha": jnp.full((1, 1), 0.5, jnp.float32),
        "fc_w": rn(ks[22], (40, 40)), "fc_b": rn(ks[23], (40,), 0.05),
    }


if __name__ == "__main__":
    B, T, C, D, M = 2, 16, 4, 8, 40   # M=40 templates (fixed by Linear(40,40))
    key = jax.random.PRNGKey(0)
    kp, k1, k2, k3 = jax.random.split(key, 4)
    params = make_params(kp, C, T, D)

    signal = jax.random.normal(k1, (B, 1, T, C), jnp.float32)
    temp = jax.random.normal(k2, (B, C, T, M), jnp.float32)
    ref_in = jax.random.normal(k3, (B, C + 1, T, M), jnp.float32)

    # one-time weight folding (hoisted out of the forward pass)
    folded = fold_params(params, B, C, T)
    folded = jax.tree_util.tree_map(jax.block_until_ready, folded)

    out = model_forward(folded, signal, temp, ref_in)
    out = jax.block_until_ready(out)

    assert out.shape == (B, 40)
    assert bool(jnp.all(jnp.isfinite(out)))

    ref_out = reference_forward(params, signal, temp, ref_in)
    max_err = float(jnp.max(jnp.abs(out - ref_out)))
    assert max_err < 5e-3, f"max abs error vs pure-JAX reference: {max_err}"

    print("KERNEL_OK")
</pallas_src>

<mosaic_0001>
module attributes {stable_mosaic.version = 11 : i64} {
  func.func @fused_kernel(%arg0: memref<8x16xf32, #tpu.memory_space<vmem>>, %arg1: memref<2x64xf32, #tpu.memory_space<vmem>>, %arg2: memref<64x80xf32, #tpu.memory_space<vmem>>, %arg3: memref<80x80xf32, #tpu.memory_space<vmem>>, %arg4: memref<16x128xf32, #tpu.memory_space<vmem>>, %arg5: memref<1x128xf32, #tpu.memory_space<vmem>>, %arg6: memref<128x128xf32, #tpu.memory_space<vmem>>, %arg7: memref<1x128xf32, #tpu.memory_space<vmem>>, %arg8: memref<128x16xf32, #tpu.memory_space<vmem>>, %arg9: memref<2x8xf32, #tpu.memory_space<vmem>>, %arg10: memref<64x16xf32, #tpu.memory_space<vmem>>, %arg11: memref<16x64xf32, #tpu.memory_space<vmem>>, %arg12: memref<16x1xf32, #tpu.memory_space<vmem>>, %arg13: memref<16x80xf32, #tpu.memory_space<vmem>>, %arg14: memref<16x1xf32, #tpu.memory_space<vmem>>, %arg15: memref<80x128xf32, #tpu.memory_space<vmem>>, %arg16: memref<1x128xf32, #tpu.memory_space<vmem>>, %arg17: memref<2x80xf32, #tpu.memory_space<vmem>>, %arg18: memref<8xf32, #tpu.memory_space<smem>>, %arg19: memref<2x128xf32, #tpu.memory_space<vmem>>) attributes {dimension_semantics = [], scalar_prefetch = 0 : i64, scratch_operands = 0 : i64, tpu.core_type = #tpu.core_type<tc>} {
    %c0 = arith.constant 0 : index
    %c0_0 = arith.constant 0 : index
    %0 = vector.load %arg0[%c0, %c0_0] : memref<8x16xf32, #tpu.memory_space<vmem>>, vector<8x16xf32>
    %c0_1 = arith.constant 0 : index
    %c0_2 = arith.constant 0 : index
    %1 = vector.load %arg4[%c0_1, %c0_2] : memref<16x128xf32, #tpu.memory_space<vmem>>, vector<16x128xf32>
    %cst = arith.constant dense<0.000000e+00> : vector<8x128xf32>
    %2 = tpu.matmul %0, %1, %cst {dimension_numbers = #tpu.dot_dimension_numbers<[1], [0], [0], [1], [0, 0, 1, 1], [], []>, precision = #tpu.contract_precision<fp32>} : vector<8x16xf32>, vector<16x128xf32>, vector<8x128xf32> -> vector<8x128xf32>
    %c0_3 = arith.constant 0 : index
    %c0_4 = arith.constant 0 : index
    %3 = vector.load %arg5[%c0_3, %c0_4] : memref<1x128xf32, #tpu.memory_space<vmem>>, vector<1x128xf32>
    %4 = vector.broadcast %3 : vector<1x128xf32> to vector<8x128xf32>
    %5 = arith.addf %2, %4 : vector<8x128xf32>
    %cst_5 = arith.constant 5.000000e-01 : f32
    %6 = vector.broadcast %cst_5 : f32 to vector<8x128xf32>
    %7 = arith.mulf %6, %5 : vector<8x128xf32>
    %cst_6 = arith.constant 0.707106769 : f32
    %8 = vector.broadcast %cst_6 : f32 to vector<8x128xf32>
    %9 = arith.mulf %5, %8 : vector<8x128xf32>
    %cst_7 = arith.constant 0.000000e+00 : f32
    %10 = vector.broadcast %cst_7 : f32 to vector<8x128xf32>
    %11 = arith.cmpf oge, %9, %10 : vector<8x128xf32>
    %cst_8 = arith.constant 1.000000e+00 : f32
    %cst_9 = arith.constant -1.000000e+00 : f32
    %12 = vector.broadcast %cst_8 : f32 to vector<8x128xf32>
    %13 = vector.broadcast %cst_9 : f32 to vector<8x128xf32>
    %14 = arith.select %11, %12, %13 : vector<8x128xi1>, vector<8x128xf32>
    %15 = math.absf %9 : vector<8x128xf32>
    %cst_10 = arith.constant 0.327591091 : f32
    %16 = vector.broadcast %cst_10 : f32 to vector<8x128xf32>
    %17 = arith.mulf %16, %15 : vector<8x128xf32>
    %cst_11 = arith.constant 1.000000e+00 : f32
    %18 = vector.broadcast %cst_11 : f32 to vector<8x128xf32>
    %19 = arith.addf %18, %17 : vector<8x128xf32>
    %cst_12 = arith.constant 1.000000e+00 : f32
    %20 = vector.broadcast %cst_12 : f32 to vector<8x128xf32>
    %21 = arith.divf %20, %19 : vector<8x128xf32>
    %cst_13 = arith.constant 1.06140542 : f32
    %22 = vector.broadcast %cst_13 : f32 to vector<8x128xf32>
    %23 = arith.mulf %22, %21 : vector<8x128xf32>
    %cst_14 = arith.constant -1.45315206 : f32
    %24 = vector.broadcast %cst_14 : f32 to vector<8x128xf32>
    %25 = arith.addf %23, %24 : vector<8x128xf32>
    %26 = arith.mulf %25, %21 : vector<8x128xf32>
    %cst_15 = arith.constant 1.42141378 : f32
    %27 = vector.broadcast %cst_15 : f32 to vector<8x128xf32>
    %28 = arith.addf %26, %27 : vector<8x128xf32>
    %29 = arith.mulf %28, %21 : vector<8x128xf32>
    %cst_16 = arith.constant -0.284496725 : f32
    %30 = vector.broadcast %cst_16 : f32 to vector<8x128xf32>
    %31 = arith.addf %29, %30 : vector<8x128xf32>
    %32 = arith.mulf %31, %21 : vector<8x128xf32>
    %cst_17 = arith.constant 0.254829586 : f32
    %33 = vector.broadcast %cst_17 : f32 to vector<8x128xf32>
    %34 = arith.addf %32, %33 : vector<8x128xf32>
    %35 = arith.mulf %34, %21 : vector<8x128xf32>
    %cst_18 = arith.constant 0.000000e+00 : f32
    %36 = vector.broadcast %cst_18 : f32 to vector<8x128xf32>
    %37 = arith.subf %36, %15 : vector<8x128xf32>
    %38 = arith.mulf %37, %15 : vector<8x128xf32>
    %39 = math.exp %38 : vector<8x128xf32>
    %40 = arith.mulf %35, %39 : vector<8x128xf32>
    %cst_19 = arith.constant 1.000000e+00 : f32
    %41 = vector.broadcast %cst_19 : f32 to vector<8x128xf32>
    %42 = arith.subf %41, %40 : vector<8x128xf32>
    %43 = arith.mulf %14, %42 : vector<8x128xf32>
    %cst_20 = arith.constant 1.000000e+00 : f32
    %44 = vector.broadcast %cst_20 : f32 to vector<8x128xf32>
    %45 = arith.addf %44, %43 : vector<8x128xf32>
    %46 = arith.mulf %7, %45 : vector<8x128xf32>
    %c0_21 = arith.constant 0 : index
    %c0_22 = arith.constant 0 : index
    %47 = vector.load %arg6[%c0_21, %c0_22] : memref<128x128xf32, #tpu.memory_space<vmem>>, vector<128x128xf32>
    %cst_23 = arith.constant dense<0.000000e+00> : vector<8x128xf32>
    %48 = tpu.matmul %46, %47, %cst_23 {dimension_numbers = #tpu.dot_dimension_numbers<[1], [0], [0], [1], [0, 0, 1, 1], [], []>, precision = #tpu.contract_precision<fp32>} : vector<8x128xf32>, vector<128x128xf32>, vector<8x128xf32> -> vector<8x128xf32>
    %c0_24 = arith.constant 0 : index
    %c0_25 = arith.constant 0 : index
    %49 = vector.load %arg7[%c0_24, %c0_25] : memref<1x128xf32, #tpu.memory_space<vmem>>, vector<1x128xf32>
    %50 = vector.broadcast %49 : vector<1x128xf32> to vector<8x128xf32>
    %51 = arith.addf %48, %50 : vector<8x128xf32>
    %cst_26 = arith.constant 5.000000e-01 : f32
    %52 = vector.broadcast %cst_26 : f32 to vector<8x128xf32>
    %53 = arith.mulf %52, %51 : vector<8x128xf32>
    %cst_27 = arith.constant 0.707106769 : f32
    %54 = vector.broadcast %cst_27 : f32 to vector<8x128xf32>
    %55 = arith.mulf %51, %54 : vector<8x128xf32>
    %cst_28 = arith.constant 0.000000e+00 : f32
    %56 = vector.broadcast %cst_28 : f32 to vector<8x128xf32>
    %57 = arith.cmpf oge, %55, %56 : vector<8x128xf32>
    %cst_29 = arith.constant 1.000000e+00 : f32
    %cst_30 = arith.constant -1.000000e+00 : f32
    %58 = vector.broadcast %cst_29 : f32 to vector<8x128xf32>
    %59 = vector.broadcast %cst_30 : f32 to vector<8x128xf32>
    %60 = arith.select %57, %58, %59 : vector<8x128xi1>, vector<8x128xf32>
    %61 = math.absf %55 : vector<8x128xf32>
    %cst_31 = arith.constant 0.327591091 : f32
    %62 = vector.broadcast %cst_31 : f32 to vector<8x128xf32>
    %63 = arith.mulf %62, %61 : vector<8x128xf32>
    %cst_32 = arith.constant 1.000000e+00 : f32
    %64 = vector.broadcast %cst_32 : f32 to vector<8x128xf32>
    %65 = arith.addf %64, %63 : vector<8x128xf32>
    %cst_33 = arith.constant 1.000000e+00 : f32
    %66 = vector.broadcast %cst_33 : f32 to vector<8x128xf32>
    %67 = arith.divf %66, %65 : vector<8x128xf32>
    %cst_34 = arith.constant 1.06140542 : f32
    %68 = vector.broadcast %cst_34 : f32 to vector<8x128xf32>
    %69 = arith.mulf %68, %67 : vector<8x128xf32>
    %cst_35 = arith.constant -1.45315206 : f32
    %70 = vector.broadcast %cst_35 : f32 to vector<8x128xf32>
    %71 = arith.addf %69, %70 : vector<8x128xf32>
    %72 = arith.mulf %71, %67 : vector<8x128xf32>
    %cst_36 = arith.constant 1.42141378 : f32
    %73 = vector.broadcast %cst_36 : f32 to vector<8x128xf32>
    %74 = arith.addf %72, %73 : vector<8x128xf32>
    %75 = arith.mulf %74, %67 : vector<8x128xf32>
    %cst_37 = arith.constant -0.284496725 : f32
    %76 = vector.broadcast %cst_37 : f32 to vector<8x128xf32>
    %77 = arith.addf %75, %76 : vector<8x128xf32>
    %78 = arith.mulf %77, %67 : vector<8x128xf32>
    %cst_38 = arith.constant 0.254829586 : f32
    %79 = vector.broadcast %cst_38 : f32 to vector<8x128xf32>
    %80 = arith.addf %78, %79 : vector<8x128xf32>
    %81 = arith.mulf %80, %67 : vector<8x128xf32>
    %cst_39 = arith.constant 0.000000e+00 : f32
    %82 = vector.broadcast %cst_39 : f32 to vector<8x128xf32>
    %83 = arith.subf %82, %61 : vector<8x128xf32>
    %84 = arith.mulf %83, %61 : vector<8x128xf32>
    %85 = math.exp %84 : vector<8x128xf32>
    %86 = arith.mulf %81, %85 : vector<8x128xf32>
    %cst_40 = arith.constant 1.000000e+00 : f32
    %87 = vector.broadcast %cst_40 : f32 to vector<8x128xf32>
    %88 = arith.subf %87, %86 : vector<8x128xf32>
    %89 = arith.mulf %60, %88 : vector<8x128xf32>
    %cst_41 = arith.constant 1.000000e+00 : f32
    %90 = vector.broadcast %cst_41 : f32 to vector<8x128xf32>
    %91 = arith.addf %90, %89 : vector<8x128xf32>
    %92 = arith.mulf %53, %91 : vector<8x128xf32>
    %c0_42 = arith.constant 0 : index
    %c0_43 = arith.constant 0 : index
    %93 = vector.load %arg9[%c0_42, %c0_43] : memref<2x8xf32, #tpu.memory_space<vmem>>, vector<2x8xf32>
    %cst_44 = arith.constant dense<0.000000e+00> : vector<2x128xf32>
    %94 = tpu.matmul %93, %92, %cst_44 {dimension_numbers = #tpu.dot_dimension_numbers<[1], [0], [0], [1], [0, 0, 1, 1], [], []>, precision = #tpu.contract_precision<fp32>} : vector<2x8xf32>, vector<8x128xf32>, vector<2x128xf32> -> vector<2x128xf32>
    %c0_45 = arith.constant 0 : index
    %c0_46 = arith.constant 0 : index
    %95 = vector.load %arg8[%c0_45, %c0_46] : memref<128x16xf32, #tpu.memory_space<vmem>>, vector<128x16xf32>
    %cst_47 = arith.constant dense<0.000000e+00> : vector<2x16xf32>
    %96 = tpu.matmul %94, %95, %cst_47 {dimension_numbers = #tpu.dot_dimension_numbers<[1], [0], [0], [1], [0, 0, 1, 1], [], []>, precision = #tpu.contract_precision<fp32>} : vector<2x128xf32>, vector<128x16xf32>, vector<2x16xf32> -> vector<2x16xf32>
    %c0_48 = arith.constant 0 : index
    %97 = memref.load %arg18[%c0_48] : memref<8xf32, #tpu.memory_space<smem>>
    %98 = vector.broadcast %97 : f32 to vector<2x16xf32>
    %99 = arith.addf %96, %98 : vector<2x16xf32>
    %c0_49 = arith.constant 0 : index
    %c0_50 = arith.constant 0 : index
    %100 = vector.load %arg1[%c0_49, %c0_50] : memref<2x64xf32, #tpu.memory_space<vmem>>, vector<2x64xf32>
    %c0_51 = arith.constant 0 : index
    %c0_52 = arith.constant 0 : index
    %101 = vector.load %arg10[%c0_51, %c0_52] : memref<64x16xf32, #tpu.memory_space<vmem>>, vector<64x16xf32>
    %cst_53 = arith.constant dense<0.000000e+00> : vector<2x16xf32>
    %102 = tpu.matmul %100, %101, %cst_53 {dimension_numbers = #tpu.dot_dimension_numbers<[1], [0], [0], [1], [0, 0, 1, 1], [], []>, precision = #tpu.contract_precision<fp32>} : vector<2x64xf32>, vector<64x16xf32>, vector<2x16xf32> -> vector<2x16xf32>
    %c1 = arith.constant 1 : index
    %103 = memref.load %arg18[%c1] : memref<8xf32, #tpu.memory_space<smem>>
    %104 = vector.broadcast %103 : f32 to vector<2x16xf32>
    %105 = arith.addf %102, %104 : vector<2x16xf32>
    %c0_54 = arith.constant 0 : index
    %c0_55 = arith.constant 0 : index
    %106 = vector.load %arg11[%c0_54, %c0_55] : memref<16x64xf32, #tpu.memory_space<vmem>>, vector<16x64xf32>
    %c0_56 = arith.constant 0 : index
    %c0_57 = arith.constant 0 : index
    %107 = vector.load %arg2[%c0_56, %c0_57] : memref<64x80xf32, #tpu.memory_space<vmem>>, vector<64x80xf32>
    %cst_58 = arith.constant dense<0.000000e+00> : vector<16x80xf32>
    %108 = tpu.matmul %106, %107, %cst_58 {dimension_numbers = #tpu.dot_dimension_numbers<[1], [0], [0], [1], [0, 0, 1, 1], [], []>, precision = #tpu.contract_precision<fp32>} : vector<16x64xf32>, vector<64x80xf32>, vector<16x80xf32> -> vector<16x80xf32>
    %c0_59 = arith.constant 0 : index
    %c0_60 = arith.constant 0 : index
    %109 = vector.load %arg12[%c0_59, %c0_60] : memref<16x1xf32, #tpu.memory_space<vmem>>, vector<16x1xf32>
    %110 = vector.broadcast %109 : vector<16x1xf32> to vector<16x80xf32>
    %111 = arith.addf %108, %110 : vector<16x80xf32>
    %c0_61 = arith.constant 0 : index
    %c0_62 = arith.constant 0 : index
    %112 = vector.load %arg13[%c0_61, %c0_62] : memref<16x80xf32, #tpu.memory_space<vmem>>, vector<16x80xf32>
    %c0_63 = arith.constant 0 : index
    %c0_64 = arith.constant 0 : index
    %113 = vector.load %arg3[%c0_63, %c0_64] : memref<80x80xf32, #tpu.memory_space<vmem>>, vector<80x80xf32>
    %cst_65 = arith.constant dense<0.000000e+00> : vector<16x80xf32>
    %114 = tpu.matmul %112, %113, %cst_65 {dimension_numbers = #tpu.dot_dimension_numbers<[1], [0], [0], [1], [0, 0, 1, 1], [], []>, precision = #tpu.contract_precision<fp32>} : vector<16x80xf32>, vector<80x80xf32>, vector<16x80xf32> -> vector<16x80xf32>
    %c0_66 = arith.constant 0 : index
    %c0_67 = arith.constant 0 : index
    %115 = vector.load %arg14[%c0_66, %c0_67] : memref<16x1xf32, #tpu.memory_space<vmem>>, vector<16x1xf32>
    %116 = vector.broadcast %115 : vector<16x1xf32> to vector<16x80xf32>
    %117 = arith.addf %114, %116 : vector<16x80xf32>
    %cst_68 = arith.constant dense<0.000000e+00> : vector<2xf32>
    %118 = vector.multi_reduction <add>, %99, %cst_68 [1] : vector<2x16xf32> to vector<2xf32>
    %119 = vector.shape_cast %118 : vector<2xf32> to vector<2x1xf32>
    %cst_69 = arith.constant 1.600000e+01 : f32
    %120 = vector.broadcast %cst_69 : f32 to vector<2x1xf32>
    %121 = arith.divf %119, %120 : vector<2x1xf32>
    %c3 = arith.constant 3 : index
    %122 = memref.load %arg18[%c3] : memref<8xf32, #tpu.memory_space<smem>>
    %123 = vector.broadcast %122 : f32 to vector<2x1xf32>
    %124 = arith.mulf %121, %123 : vector<2x1xf32>
    %cst_70 = arith.constant dense<0.000000e+00> : vector<2xf32>
    %125 = vector.multi_reduction <add>, %105, %cst_70 [1] : vector<2x16xf32> to vector<2xf32>
    %126 = vector.shape_cast %125 : vector<2xf32> to vector<2x1xf32>
    %cst_71 = arith.constant 1.600000e+01 : f32
    %127 = vector.broadcast %cst_71 : f32 to vector<2x1xf32>
    %128 = arith.divf %126, %127 : vector<2x1xf32>
    %c4 = arith.constant 4 : index
    %129 = memref.load %arg18[%c4] : memref<8xf32, #tpu.memory_space<smem>>
    %130 = vector.broadcast %129 : f32 to vector<2x1xf32>
    %131 = arith.mulf %128, %130 : vector<2x1xf32>
    %132 = arith.addf %124, %131 : vector<2x1xf32>
    %cst_72 = arith.constant 5.000000e-01 : f32
    %133 = vector.broadcast %cst_72 : f32 to vector<2x1xf32>
    %134 = arith.mulf %133, %132 : vector<2x1xf32>
    %cst_73 = arith.constant 0.707106769 : f32
    %135 = vector.broadcast %cst_73 : f32 to vector<2x1xf32>
    %136 = arith.mulf %132, %135 : vector<2x1xf32>
    %cst_74 = arith.constant 0.000000e+00 : f32
    %137 = vector.broadcast %cst_74 : f32 to vector<2x1xf32>
    %138 = arith.cmpf oge, %136, %137 : vector<2x1xf32>
    %cst_75 = arith.constant 1.000000e+00 : f32
    %cst_76 = arith.constant -1.000000e+00 : f32
    %139 = vector.broadcast %cst_75 : f32 to vector<2x1xf32>
    %140 = vector.broadcast %cst_76 : f32 to vector<2x1xf32>
    %141 = arith.select %138, %139, %140 : vector<2x1xi1>, vector<2x1xf32>
    %142 = math.absf %136 : vector<2x1xf32>
    %cst_77 = arith.constant 0.327591091 : f32
    %143 = vector.broadcast %cst_77 : f32 to vector<2x1xf32>
    %144 = arith.mulf %143, %142 : vector<2x1xf32>
    %cst_78 = arith.constant 1.000000e+00 : f32
    %145 = vector.broadcast %cst_78 : f32 to vector<2x1xf32>
    %146 = arith.addf %145, %144 : vector<2x1xf32>
    %cst_79 = arith.constant 1.000000e+00 : f32
    %147 = vector.broadcast %cst_79 : f32 to vector<2x1xf32>
    %148 = arith.divf %147, %146 : vector<2x1xf32>
    %cst_80 = arith.constant 1.06140542 : f32
    %149 = vector.broadcast %cst_80 : f32 to vector<2x1xf32>
    %150 = arith.mulf %149, %148 : vector<2x1xf32>
    %cst_81 = arith.constant -1.45315206 : f32
    %151 = vector.broadcast %cst_81 : f32 to vector<2x1xf32>
    %152 = arith.addf %150, %151 : vector<2x1xf32>
    %153 = arith.mulf %152, %148 : vector<2x1xf32>
    %cst_82 = arith.constant 1.42141378 : f32
    %154 = vector.broadcast %cst_82 : f32 to vector<2x1xf32>
    %155 = arith.addf %153, %154 : vector<2x1xf32>
    %156 = arith.mulf %155, %148 : vector<2x1xf32>
    %cst_83 = arith.constant -0.284496725 : f32
    %157 = vector.broadcast %cst_83 : f32 to vector<2x1xf32>
    %158 = arith.addf %156, %157 : vector<2x1xf32>
    %159 = arith.mulf %158, %148 : vector<2x1xf32>
    %cst_84 = arith.constant 0.254829586 : f32
    %160 = vector.broadcast %cst_84 : f32 to vector<2x1xf32>
    %161 = arith.addf %159, %160 : vector<2x1xf32>
    %162 = arith.mulf %161, %148 : vector<2x1xf32>
    %cst_85 = arith.constant 0.000000e+00 : f32
    %163 = vector.broadcast %cst_85 : f32 to vector<2x1xf32>
    %164 = arith.subf %163, %142 : vector<2x1xf32>
    %165 = arith.mulf %164, %142 : vector<2x1xf32>
    %166 = math.exp %165 : vector<2x1xf32>
    %167 = arith.mulf %162, %166 : vector<2x1xf32>
    %cst_86 = arith.constant 1.000000e+00 : f32
    %168 = vector.broadcast %cst_86 : f32 to vector<2x1xf32>
    %169 = arith.subf %168, %167 : vector<2x1xf32>
    %170 = arith.mulf %141, %169 : vector<2x1xf32>
    %cst_87 = arith.constant 1.000000e+00 : f32
    %171 = vector.broadcast %cst_87 : f32 to vector<2x1xf32>
    %172 = arith.addf %171, %170 : vector<2x1xf32>
    %173 = arith.mulf %134, %172 : vector<2x1xf32>
    %c5 = arith.constant 5 : index
    %174 = memref.load %arg18[%c5] : memref<8xf32, #tpu.memory_space<smem>>
    %175 = vector.broadcast %174 : f32 to vector<2x1xf32>
    %176 = arith.mulf %173, %175 : vector<2x1xf32>
    %177 = arith.negf %176 : vector<2x1xf32>
    %178 = math.exp %177 : vector<2x1xf32>
    %cst_88 = arith.constant 1.000000e+00 : f32
    %179 = vector.broadcast %cst_88 : f32 to vector<2x1xf32>
    %180 = arith.addf %179, %178 : vector<2x1xf32>
    %181 = arith.divf %179, %180 : vector<2x1xf32>
    %c6 = arith.constant 6 : index
    %182 = memref.load %arg18[%c6] : memref<8xf32, #tpu.memory_space<smem>>
    %183 = vector.broadcast %182 : f32 to vector<2x1xf32>
    %184 = arith.mulf %173, %183 : vector<2x1xf32>
    %185 = arith.negf %184 : vector<2x1xf32>
    %186 = math.exp %185 : vector<2x1xf32>
    %cst_89 = arith.constant 1.000000e+00 : f32
    %187 = vector.broadcast %cst_89 : f32 to vector<2x1xf32>
    %188 = arith.addf %187, %186 : vector<2x1xf32>
    %189 = arith.divf %187, %188 : vector<2x1xf32>
    %190 = tpu.concatenate %99, %105 in 0 : vector<2x16xf32>, vector<2x16xf32> -> vector<4x16xf32>
    %191 = arith.mulf %190, %190 : vector<4x16xf32>
    %cst_90 = arith.constant dense<0.000000e+00> : vector<4xf32>
    %192 = vector.multi_reduction <add>, %191, %cst_90 [1] : vector<4x16xf32> to vector<4xf32>
    %193 = vector.shape_cast %192 : vector<4xf32> to vector<4x1xf32>
    %194 = math.rsqrt %193 : vector<4x1xf32>
    %195 = arith.mulf %111, %111 : vector<16x80xf32>
    %cst_91 = arith.constant dense<0.000000e+00> : vector<80xf32>
    %196 = vector.multi_reduction <add>, %195, %cst_91 [0] : vector<16x80xf32> to vector<80xf32>
    %197 = vector.shape_cast %196 : vector<80xf32> to vector<1x80xf32>
    %198 = math.rsqrt %197 : vector<1x80xf32>
    %199 = arith.mulf %117, %117 : vector<16x80xf32>
    %cst_92 = arith.constant dense<0.000000e+00> : vector<80xf32>
    %200 = vector.multi_reduction <add>, %199, %cst_92 [0] : vector<16x80xf32> to vector<80xf32>
    %201 = vector.shape_cast %200 : vector<80xf32> to vector<1x80xf32>
    %202 = math.rsqrt %201 : vector<1x80xf32>
    %cst_93 = arith.constant dense<0.000000e+00> : vector<4x80xf32>
    %203 = tpu.matmul %190, %111, %cst_93 {dimension_numbers = #tpu.dot_dimension_numbers<[1], [0], [0], [1], [0, 0, 1, 1], [], []>, precision = #tpu.contract_precision<fp32>} : vector<4x16xf32>, vector<16x80xf32>, vector<4x80xf32> -> vector<4x80xf32>
    %cst_94 = arith.constant dense<0.000000e+00> : vector<4x80xf32>
    %204 = tpu.matmul %190, %117, %cst_94 {dimension_numbers = #tpu.dot_dimension_numbers<[1], [0], [0], [1], [0, 0, 1, 1], [], []>, precision = #tpu.contract_precision<fp32>} : vector<4x16xf32>, vector<16x80xf32>, vector<4x80xf32> -> vector<4x80xf32>
    %c2 = arith.constant 2 : index
    %205 = memref.load %arg18[%c2] : memref<8xf32, #tpu.memory_space<smem>>
    %206 = vector.broadcast %198 : vector<1x80xf32> to vector<4x80xf32>
    %207 = arith.mulf %203, %206 : vector<4x80xf32>
    %208 = vector.broadcast %205 : f32 to vector<4x80xf32>
    %209 = arith.mulf %208, %207 : vector<4x80xf32>
    %cst_95 = arith.constant 1.000000e+00 : f32
    %210 = arith.subf %cst_95, %205 : f32
    %211 = vector.broadcast %202 : vector<1x80xf32> to vector<4x80xf32>
    %212 = arith.mulf %204, %211 : vector<4x80xf32>
    %213 = vector.broadcast %210 : f32 to vector<4x80xf32>
    %214 = arith.mulf %213, %212 : vector<4x80xf32>
    %215 = arith.addf %209, %214 : vector<4x80xf32>
    %216 = vector.broadcast %194 : vector<4x1xf32> to vector<4x80xf32>
    %217 = arith.mulf %215, %216 : vector<4x80xf32>
    %218 = vector.extract_strided_slice %217 {offsets = [0, 0], sizes = [2, 80], strides = [1, 1]} : vector<4x80xf32> to vector<2x80xf32>
    %219 = vector.broadcast %181 : vector<2x1xf32> to vector<2x80xf32>
    %220 = arith.mulf %218, %219 : vector<2x80xf32>
    %221 = vector.extract_strided_slice %217 {offsets = [2, 0], sizes = [2, 80], strides = [1, 1]} : vector<4x80xf32> to vector<2x80xf32>
    %222 = vector.broadcast %189 : vector<2x1xf32> to vector<2x80xf32>
    %223 = arith.mulf %221, %222 : vector<2x80xf32>
    %224 = arith.addf %220, %223 : vector<2x80xf32>
    %c0_96 = arith.constant 0 : index
    %c0_97 = arith.constant 0 : index
    %225 = vector.load %arg17[%c0_96, %c0_97] : memref<2x80xf32, #tpu.memory_space<vmem>>, vector<2x80xf32>
    %226 = arith.mulf %224, %225 : vector<2x80xf32>
    %c0_98 = arith.constant 0 : index
    %c0_99 = arith.constant 0 : index
    %227 = vector.load %arg15[%c0_98, %c0_99] : memref<80x128xf32, #tpu.memory_space<vmem>>, vector<80x128xf32>
    %cst_100 = arith.constant dense<0.000000e+00> : vector<2x128xf32>
    %228 = tpu.matmul %226, %227, %cst_100 {dimension_numbers = #tpu.dot_dimension_numbers<[1], [0], [0], [1], [0, 0, 1, 1], [], []>, precision = #tpu.contract_precision<fp32>} : vector<2x80xf32>, vector<80x128xf32>, vector<2x128xf32> -> vector<2x128xf32>
    %c0_101 = arith.constant 0 : index
    %c0_102 = arith.constant 0 : index
    %229 = vector.load %arg16[%c0_101, %c0_102] : memref<1x128xf32, #tpu.memory_space<vmem>>, vector<1x128xf32>
    %230 = vector.broadcast %229 : vector<1x128xf32> to vector<2x128xf32>
    %231 = arith.addf %228, %230 : vector<2x128xf32>
    %c0_103 = arith.constant 0 : index
    %c0_104 = arith.constant 0 : index
    %232 = vector.load %arg19[%c0_103, %c0_104] : memref<2x128xf32, #tpu.memory_space<vmem>>, vector<2x128xf32>
    tpu.vector_store %arg19[%c0_103, %c0_104], %231 {strides = array<i32>} : memref<2x128xf32, #tpu.memory_space<vmem>>, vector<2x128xf32>,
    return
  }
}

</mosaic_0001>

<llo_original>
// kernel: conv_fft_ca_forward.1
$region0: #{conv_fft_ca_forward.1}
  #allocation0 [shape = 'u32[]', space=smem, size = 0x4, offset = 0x4, fixed_abs, tag = 'smem constant byte address 0x4 - core index']
  #allocation1 [shape = 'u32[144,128]{1,0:T(1,128)}', space=vmem, size = 0x12000, scoped, tag = 'internal scratch']
  %s0 = inlined_call_operand.vmem [shape: f32[8,16], index: 0, kind: input, shape index: {}]
  %s1 = inlined_call_operand.vmem [shape: f32[2,64], index: 1, kind: input, shape index: {}]
  %s2 = inlined_call_operand.vmem [shape: f32[64,80], index: 2, kind: input, shape index: {}]
  %s3 = inlined_call_operand.vmem [shape: f32[80,80], index: 3, kind: input, shape index: {}]
  %s4 = inlined_call_operand.vmem [shape: f32[16,128], index: 4, kind: input, shape index: {}]
  %s5 = inlined_call_operand.vmem [shape: f32[1,128], index: 5, kind: input, shape index: {}]
  %s6 = inlined_call_operand.vmem [shape: f32[128,128], index: 6, kind: input, shape index: {}]
  %s7 = inlined_call_operand.vmem [shape: f32[1,128], index: 7, kind: input, shape index: {}]
  %s8 = inlined_call_operand.vmem [shape: f32[128,16], index: 8, kind: input, shape index: {}]
  %s9 = inlined_call_operand.vmem [shape: f32[2,8], index: 9, kind: input, shape index: {}]
  %s10 = inlined_call_operand.vmem [shape: f32[64,16], index: 10, kind: input, shape index: {}]
  %s11 = inlined_call_operand.vmem [shape: f32[16,64], index: 11, kind: input, shape index: {}]
  %s12 = inlined_call_operand.vmem [shape: f32[16,1], index: 12, kind: input, shape index: {}]
  %s13 = inlined_call_operand.vmem [shape: f32[16,80], index: 13, kind: input, shape index: {}]
  %s14 = inlined_call_operand.vmem [shape: f32[16,1], index: 14, kind: input, shape index: {}]
  %s15 = inlined_call_operand.vmem [shape: f32[80,128], index: 15, kind: input, shape index: {}]
  %s16 = inlined_call_operand.vmem [shape: f32[1,128], index: 16, kind: input, shape index: {}]
  %s17 = inlined_call_operand.vmem [shape: f32[2,80], index: 17, kind: input, shape index: {}]
  %s18 = inlined_call_operand.vmem [shape: f32[8], index: 18, kind: input, shape index: {}]
  %s19 = inlined_call_operand.hbm [shape: f32[2,128], index: 19, kind: output, shape index: {}]
  %s20 = sld [smem:[#allocation0]]
  $region90: #{conv_fft_ca_forward.1} parent=0
    _
  %s22 = ssub.s32 1, %s20
  %s23 = scalar_select 0, %s22, %s20
  $region1: #{conv_fft_ca_forward.1} parent=0
    #allocation2 [shape = 'u8[512]{0}', space=smem, size = 0x200, scoped, tag = 'input window, operand 18, single buffered']
    #allocation3 [shape = 's32[1]{0}', space=sflag, size = 0x4, scoped, tag = 'scoped memory for conv_fft_ca_forward.1']
    #allocation4 [shape = 's32[1]{0}', space=sflag, size = 0x4, scoped, tag = 'scoped memory for conv_fft_ca_forward.1']
    #allocation5 [shape = 'u8[1024]{0}', space=vmem, size = 0x400, scoped, tag = 'output window, operand 0, single buffered']
    %24 = vsyncpa [#allocation4], 0
    %25 = vsyncpa [#allocation3], 0
    // Predicated region
    $region2: #{conv_fft_ca_forward.1} parent=1 // pred_check
      _
    $region3: #{conv_fft_ca_forward.1} parent=1 // pred_check_branch
      %27 = sbr.rel (0) target = $region5
    $region4: #{conv_fft_ca_forward.1} parent=1 // pred_region
      _
    $region5: #{conv_fft_ca_forward.1} parent=1 // pred_fallthru
      _
    // Predicated region
    $region6: #{conv_fft_ca_forward.1} parent=1 // pred_check
      _
    $region7: #{conv_fft_ca_forward.1} parent=1 // pred_check_branch
      %29 = sbr.rel (0) target = $region9
    $region8: #{conv_fft_ca_forward.1} parent=1 // pred_region
      _
    $region9: #{conv_fft_ca_forward.1} parent=1 // pred_fallthru
      _
    // Predicated region
    $region10: #{conv_fft_ca_forward.1} parent=1 // pred_check
      _
    $region11: #{conv_fft_ca_forward.1} parent=1 // pred_check_branch
      %31 = sbr.rel (0) target = $region13
    $region12: #{conv_fft_ca_forward.1} parent=1 // pred_region
      _
    $region13: #{conv_fft_ca_forward.1} parent=1 // pred_fallthru
      _
    // Predicated region
    $region14: #{conv_fft_ca_forward.1} parent=1 // pred_check
      _
    $region15: #{conv_fft_ca_forward.1} parent=1 // pred_check_branch
      %33 = sbr.rel (0) target = $region17
    $region16: #{conv_fft_ca_forward.1} parent=1 // pred_region
      _
    $region17: #{conv_fft_ca_forward.1} parent=1 // pred_fallthru
      _
    // Predicated region
    $region18: #{conv_fft_ca_forward.1} parent=1 // pred_check
      _
    $region19: #{conv_fft_ca_forward.1} parent=1 // pred_check_branch
      %35 = sbr.rel (0) target = $region21
    $region20: #{conv_fft_ca_forward.1} parent=1 // pred_region
      _
    $region21: #{conv_fft_ca_forward.1} parent=1 // pred_fallthru
      _
    // Predicated region
    $region22: #{conv_fft_ca_forward.1} parent=1 // pred_check
      _
    $region23: #{conv_fft_ca_forward.1} parent=1 // pred_check_branch
      %37 = sbr.rel (0) target = $region25
    $region24: #{conv_fft_ca_forward.1} parent=1 // pred_region
      _
    $region25: #{conv_fft_ca_forward.1} parent=1 // pred_fallthru
      _
    // Predicated region
    $region26: #{conv_fft_ca_forward.1} parent=1 // pred_check
      _
    $region27: #{conv_fft_ca_forward.1} parent=1 // pred_check_branch
      %39 = sbr.rel (0) target = $region29
    $region28: #{conv_fft_ca_forward.1} parent=1 // pred_region
      _
    $region29: #{conv_fft_ca_forward.1} parent=1 // pred_fallthru
      _
    // Predicated region
    $region30: #{conv_fft_ca_forward.1} parent=1 // pred_check
      _
    $region31: #{conv_fft_ca_forward.1} parent=1 // pred_check_branch
      %41 = sbr.rel (0) target = $region33
    $region32: #{conv_fft_ca_forward.1} parent=1 // pred_region
      _
    $region33: #{conv_fft_ca_forward.1} parent=1 // pred_fallthru
      _
    // Predicated region
    $region34: #{conv_fft_ca_forward.1} parent=1 // pred_check
      _
    $region35: #{conv_fft_ca_forward.1} parent=1 // pred_check_branch
      %43 = sbr.rel (0) target = $region37
    $region36: #{conv_fft_ca_forward.1} parent=1 // pred_region
      _
    $region37: #{conv_fft_ca_forward.1} parent=1 // pred_fallthru
      _
    // Predicated region
    $region38: #{conv_fft_ca_forward.1} parent=1 // pred_check
      _
    $region39: #{conv_fft_ca_forward.1} parent=1 // pred_check_branch
      %45 = sbr.rel (0) target = $region41
    $region40: #{conv_fft_ca_forward.1} parent=1 // pred_region
      _
    $region41: #{conv_fft_ca_forward.1} parent=1 // pred_fallthru
      _
    // Predicated region
    $region42: #{conv_fft_ca_forward.1} parent=1 // pred_check
      _
    $region43: #{conv_fft_ca_forward.1} parent=1 // pred_check_branch
      %47 = sbr.rel (0) target = $region45
    $region44: #{conv_fft_ca_forward.1} parent=1 // pred_region
      _
    $region45: #{conv_fft_ca_forward.1} parent=1 // pred_fallthru
      _
    // Predicated region
    $region46: #{conv_fft_ca_forward.1} parent=1 // pred_check
      _
    $region47: #{conv_fft_ca_forward.1} parent=1 // pred_check_branch
      %49 = sbr.rel (0) target = $region49
    $region48: #{conv_fft_ca_forward.1} parent=1 // pred_region
      _
    $region49: #{conv_fft_ca_forward.1} parent=1 // pred_fallthru
      _
    // Predicated region
    $region50: #{conv_fft_ca_forward.1} parent=1 // pred_check
      _
    $region51: #{conv_fft_ca_forward.1} parent=1 // pred_check_branch
      %51 = sbr.rel (0) target = $region53
    $region52: #{conv_fft_ca_forward.1} parent=1 // pred_region
      _
    $region53: #{conv_fft_ca_forward.1} parent=1 // pred_fallthru
      _
    // Predicated region
    $region54: #{conv_fft_ca_forward.1} parent=1 // pred_check
      _
    $region55: #{conv_fft_ca_forward.1} parent=1 // pred_check_branch
      %53 = sbr.rel (0) target = $region57
    $region56: #{conv_fft_ca_forward.1} parent=1 // pred_region
      _
    $region57: #{conv_fft_ca_forward.1} parent=1 // pred_fallthru
      _
    // Predicated region
    $region58: #{conv_fft_ca_forward.1} parent=1 // pred_check
      _
    $region59: #{conv_fft_ca_forward.1} parent=1 // pred_check_branch
      %55 = sbr.rel (0) target = $region61
    $region60: #{conv_fft_ca_forward.1} parent=1 // pred_region
      _
    $region61: #{conv_fft_ca_forward.1} parent=1 // pred_fallthru
      _
    // Predicated region
    $region62: #{conv_fft_ca_forward.1} parent=1 // pred_check
      _
    $region63: #{conv_fft_ca_forward.1} parent=1 // pred_check_branch
      %57 = sbr.rel (0) target = $region65
    $region64: #{conv_fft_ca_forward.1} parent=1 // pred_region
      _
    $region65: #{conv_fft_ca_forward.1} parent=1 // pred_fallthru
      _
    // Predicated region
    $region66: #{conv_fft_ca_forward.1} parent=1 // pred_check
      _
    $region67: #{conv_fft_ca_forward.1} parent=1 // pred_check_branch
      %59 = sbr.rel (0) target = $region69
    $region68: #{conv_fft_ca_forward.1} parent=1 // pred_region
      _
    $region69: #{conv_fft_ca_forward.1} parent=1 // pred_fallthru
      _
    // Predicated region
    $region70: #{conv_fft_ca_forward.1} parent=1 // pred_check
      _
    $region71: #{conv_fft_ca_forward.1} parent=1 // pred_check_branch
      %61 = sbr.rel (0) target = $region73
    $region72: #{conv_fft_ca_forward.1} parent=1 // pred_region
      _
    $region73: #{conv_fft_ca_forward.1} parent=1 // pred_fallthru
      _
    // Predicated region
    $region74: #{conv_fft_ca_forward.1} parent=1 // pred_check
      _
    $region75: #{conv_fft_ca_forward.1} parent=1 // pred_check_branch
      %63 = sbr.rel (0) target = $region77
    $region76: #{conv_fft_ca_forward.1} parent=1 // pred_region
      %s65 = ssub.s32 16, 16
      %66 = vsyncadd [#allocation4], %s65
      %s68 = sshll.u32 %s18, 4
      %s69 = int_to_ptr.vmem [resolvable:$true] %s68
      %71 = dma.vmem_to_smem %s69, 16, [#allocation2], [#allocation4]
    $region77: #{conv_fft_ca_forward.1} parent=1 // pred_fallthru
      _
    // Predicated region
    $region78: #{conv_fft_ca_forward.1} parent=1 // pred_check
      _
    $region79: #{conv_fft_ca_forward.1} parent=1 // pred_check_branch
      %73 = sbr.rel (0) target = $region81
    $region80: #{conv_fft_ca_forward.1} parent=1 // pred_region
      %74 = dma.done [#allocation4], 16
    $region81: #{conv_fft_ca_forward.1} parent=1 // pred_fallthru
      _
    %75 = sfence
    %v76 = vld [vmem:[%s0] sm:$0xff]
    %v77 = vld [vmem:[%s4] sm:$0xff]
    %v78 = vld [vmem:[%s4 + $0x8] sm:$0xff]
    %v79 = vld [vmem:[%s5] sm:$0x1]
    %v81 = vlaneseq
    %v82 = vshrl.u32 %v81, 7
    %v83 = vsub.s32 0, %v82
    %v84 = vrot.slane %v79, %v83
    %vm86 = vcmask 130048
    %v88 = vsel %vm86, %v76, 0
    %90 = vmatprep.subr.mxu0 0.0
    %v91 = vand.u32 %v77, 4294901760
    %92 = vmatpush1.msra.mxu0 %v91
    %93 = vmatprep.subr.mxu0 0.0
    %v94 = vand.u32 %v78, 4294901760
    %95 = vmatpush1.msra.mxu0 %v94
    %96 = vmatprep.subr.mxu0 0.0
    %97 = vmatpush1.msra.mxu0 0.0
    %98 = vmatprep.subr.mxu0 0.0
    %99 = vmatpush1.msra.mxu0 0.0
    %100 = vmatprep.subr.mxu0 0.0
    %101 = vmatpush1.msra.mxu0 0.0
    %102 = vmatprep.subr.mxu0 0.0
    %103 = vmatpush1.msra.mxu0 0.0
    %104 = vmatprep.subr.mxu0 0.0
    %105 = vmatpush1.msra.mxu0 0.0
    %106 = vmatprep.subr.mxu0 0.0
    %107 = vmatpush1.msra.mxu0 0.0
    %108 = vmatprep.subr.mxu0 0.0
    %109 = vmatpush1.msra.mxu0 0.0
    %110 = vmatprep.subr.mxu0 0.0
    %111 = vmatpush1.msra.mxu0 0.0
    %112 = vmatprep.subr.mxu0 0.0
    %113 = vmatpush1.msra.mxu0 0.0
    %114 = vmatprep.subr.mxu0 0.0
    %115 = vmatpush1.msra.mxu0 0.0
    %116 = vmatprep.subr.mxu0 0.0
    %117 = vmatpush1.msra.mxu0 0.0
    %118 = vmatprep.subr.mxu0 0.0
    %119 = vmatpush1.msra.mxu0 0.0
    %120 = vmatprep.subr.mxu0 0.0
    %121 = vmatpush1.msra.mxu0 0.0
    %122 = vmatprep.subr.mxu0 0.0
    %123 = vmatpush1.msra.mxu0 0.0
    %124 = vmatprep.subr.mxu0 0.0
    %125 = vmatpush1.msra.mxu0 0.0
    %126 = vmatprep.subr.mxu0 0.0
    %127 = vmatpush1.msra.mxu0 0.0
    %128 = vmatprep.subr.mxu0 0.0
    %129 = vmatpush1.msra.mxu0 0.0
    %130 = vmatprep.subr.mxu0 0.0
    %131 = vmatpush1.msra.mxu0 0.0
    %132 = vmatprep.subr.mxu0 0.0
    %133 = vmatpush1.msra.mxu0 0.0
    %134 = vmatprep.subr.mxu0 0.0
    %135 = vmatpush1.msra.mxu0 0.0
    %136 = vmatprep.subr.mxu0 0.0
    %137 = vmatpush1.msra.mxu0 0.0
    %138 = vmatprep.subr.mxu0 0.0
    %139 = vmatpush1.msra.mxu0 0.0
    %140 = vmatprep.subr.mxu0 0.0
    %141 = vmatpush1.msra.mxu0 0.0
    %142 = vmatprep.subr.mxu0 0.0
    %143 = vmatpush1.msra.mxu0 0.0
    %144 = vmatprep.subr.mxu0 0.0
    %145 = vmatpush1.msra.mxu0 0.0
    %146 = vmatprep.subr.mxu0 0.0
    %147 = vmatpush1.msra.mxu0 0.0
    %148 = vmatprep.subr.mxu0 0.0
    %149 = vmatpush1.msra.mxu0 0.0
    %150 = vmatprep.subr.mxu0 0.0
    %151 = vmatpush1.msra.mxu0 0.0
    %152 = vmatprep.subr.mxu0 0.0
    %153 = vmatpush1.msra.mxu0 0.0
    %154 = vmatprep.subr.mxu0 0.0
    %155 = vmatpush1.msra.mxu0 0.0
    %156 = vmatprep.mubr.f32.mxu0 0.0
    %v157 = vand.u32 %v88, 4294901760
    %v158 = vsub.f32 %v88, %v157
    %v159 = vand.u32 %v158, 4294901760
    %v160 = vsub.f32 %v158, %v159
    %v161 = vand.u32 %v160, 4294901760
    %162 = vmatmul.mubr.f32.gmra.mrb[0].mxu0 %v161
    %v163 = vpop.f32.mrb[0].mxu0
    %v164 = vadd.f32 %v84, %v163
    %v165 = vpop.f32.mrb[0].mxu0
    %166 = vdwg.mxu0
    %167 = vmatprep.subr.mxu0 0.0
    %v168 = vand.u32 %v77, 4294901760
    %v169 = vsub.f32 %v77, %v168
    %v170 = vand.u32 %v169, 4294901760
    %v171 = vsub.f32 %v169, %v170
    %v172 = vand.u32 %v171, 4294901760
    %173 = vmatpush1.msra.mxu0 %v172
    %174 = vmatprep.subr.mxu0 0.0
    %v175 = vand.u32 %v78, 4294901760
    %v176 = vsub.f32 %v78, %v175
    %v177 = vand.u32 %v176, 4294901760
    %v178 = vsub.f32 %v176, %v177
    %v179 = vand.u32 %v178, 4294901760
    %180 = vmatpush1.msra.mxu0 %v179
    %181 = vmatprep.subr.mxu0 0.0
    %182 = vmatpush1.msra.mxu0 0.0
    %183 = vmatprep.subr.mxu0 0.0
    %184 = vmatpush1.msra.mxu0 0.0
    %185 = vmatprep.subr.mxu0 0.0
    %186 = vmatpush1.msra.mxu0 0.0
    %187 = vmatprep.subr.mxu0 0.0
    %188 = vmatpush1.msra.mxu0 0.0
    %189 = vmatprep.subr.mxu0 0.0
    %190 = vmatpush1.msra.mxu0 0.0
    %191 = vmatprep.subr.mxu0 0.0
    %192 = vmatpush1.msra.mxu0 0.0
    %193 = vmatprep.subr.mxu0 0.0
    %194 = vmatpush1.msra.mxu0 0.0
    %195 = vmatprep.subr.mxu0 0.0
    %196 = vmatpush1.msra.mxu0 0.0
    %197 = vmatprep.subr.mxu0 0.0
    %198 = vmatpush1.msra.mxu0 0.0
    %199 = vmatprep.subr.mxu0 0.0
    %200 = vmatpush1.msra.mxu0 0.0
    %201 = vmatprep.subr.mxu0 0.0
    %202 = vmatpush1.msra.mxu0 0.0
    %203 = vmatprep.subr.mxu0 0.0
    %204 = vmatpush1.msra.mxu0 0.0
    %205 = vmatprep.subr.mxu0 0.0
    %206 = vmatpush1.msra.mxu0 0.0
    %207 = vmatprep.subr.mxu0 0.0
    %208 = vmatpush1.msra.mxu0 0.0
    %209 = vmatprep.subr.mxu0 0.0
    %210 = vmatpush1.msra.mxu0 0.0
    %211 = vmatprep.subr.mxu0 0.0
    %212 = vmatpush1.msra.mxu0 0.0
    %213 = vmatprep.subr.mxu0 0.0
    %214 = vmatpush1.msra.mxu0 0.0
    %215 = vmatprep.subr.mxu0 0.0
    %216 = vmatpush1.msra.mxu0 0.0
    %217 = vmatprep.subr.mxu0 0.0
    %218 = vmatpush1.msra.mxu0 0.0
    %219 = vmatprep.subr.mxu0 0.0
    %220 = vmatpush1.msra.mxu0 0.0
    %221 = vmatprep.subr.mxu0 0.0
    %222 = vmatpush1.msra.mxu0 0.0
    %223 = vmatprep.subr.mxu0 0.0
    %224 = vmatpush1.msra.mxu0 0.0
    %225 = vmatprep.subr.mxu0 0.0
    %226 = vmatpush1.msra.mxu0 0.0
    %227 = vmatprep.subr.mxu0 0.0
    %228 = vmatpush1.msra.mxu0 0.0
    %229 = vmatprep.subr.mxu0 0.0
    %230 = vmatpush1.msra.mxu0 0.0
    %231 = vmatprep.subr.mxu0 0.0
    %232 = vmatpush1.msra.mxu0 0.0
    %233 = vmatprep.subr.mxu0 0.0
    %234 = vmatpush1.msra.mxu0 0.0
    %235 = vmatprep.subr.mxu0 0.0
    %236 = vmatpush1.msra.mxu0 0.0
    %237 = vmatprep.subr.mxu0 0.0
    %238 = vmatpush1.msra.mxu0 0.0
    %239 = vmatprep.subr.mxu0 0.0
    %240 = vmatpush1.msra.mxu0 0.0
    %241 = vmatprep.mubr.f32.mxu0 0.0
    %v242 = vand.u32 %v88, 4294901760
    %243 = vmatmul.mubr.f32.gmra.mrb[0].mxu0 %v242
    %v244 = vpop.f32.mrb[0].mxu0
    %v245 = vadd.f32 %v164, %v244
    %v246 = vpop.f32.mrb[0].mxu0
    %247 = vdwg.mxu0
    %248 = vmatprep.subr.mxu0 0.0
    %v249 = vand.u32 %v77, 4294901760
    %v250 = vsub.f32 %v77, %v249
    %251 = vmatpush1.msra.mxu0 %v250
    %252 = vmatprep.subr.mxu0 0.0
    %v253 = vand.u32 %v78, 4294901760
    %v254 = vsub.f32 %v78, %v253
    %255 = vmatpush1.msra.mxu0 %v254
    %256 = vmatprep.subr.mxu0 0.0
    %257 = vmatpush1.msra.mxu0 0.0
    %258 = vmatprep.subr.mxu0 0.0
    %259 = vmatpush1.msra.mxu0 0.0
    %260 = vmatprep.subr.mxu0 0.0
    %261 = vmatpush1.msra.mxu0 0.0
    %262 = vmatprep.subr.mxu0 0.0
    %263 = vmatpush1.msra.mxu0 0.0
    %264 = vmatprep.subr.mxu0 0.0
    %265 = vmatpush1.msra.mxu0 0.0
    %266 = vmatprep.subr.mxu0 0.0
    %267 = vmatpush1.msra.mxu0 0.0
    %268 = vmatprep.subr.mxu0 0.0
    %269 = vmatpush1.msra.mxu0 0.0
    %270 = vmatprep.subr.mxu0 0.0
    %271 = vmatpush1.msra.mxu0 0.0
    %272 = vmatprep.subr.mxu0 0.0
    %273 = vmatpush1.msra.mxu0 0.0
    %274 = vmatprep.subr.mxu0 0.0
    %275 = vmatpush1.msra.mxu0 0.0
    %276 = vmatprep.subr.mxu0 0.0
    %277 = vmatpush1.msra.mxu0 0.0
    %278 = vmatprep.subr.mxu0 0.0
    %279 = vmatpush1.msra.mxu0 0.0
    %280 = vmatprep.subr.mxu0 0.0
    %281 = vmatpush1.msra.mxu0 0.0
    %282 = vmatprep.subr.mxu0 0.0
    %283 = vmatpush1.msra.mxu0 0.0
    %284 = vmatprep.subr.mxu0 0.0
    %285 = vmatpush1.msra.mxu0 0.0
    %286 = vmatprep.subr.mxu0 0.0
    %287 = vmatpush1.msra.mxu0 0.0
    %288 = vmatprep.subr.mxu0 0.0
    %289 = vmatpush1.msra.mxu0 0.0
    %290 = vmatprep.subr.mxu0 0.0
    %291 = vmatpush1.msra.mxu0 0.0
    %292 = vmatprep.subr.mxu0 0.0
    %293 = vmatpush1.msra.mxu0 0.0
    %294 = vmatprep.subr.mxu0 0.0
    %295 = vmatpush1.msra.mxu0 0.0
    %296 = vmatprep.subr.mxu0 0.0
    %297 = vmatpush1.msra.mxu0 0.0
    %298 = vmatprep.subr.mxu0 0.0
    %299 = vmatpush1.msra.mxu0 0.0
    %300 = vmatprep.subr.mxu0 0.0
    %301 = vmatpush1.msra.mxu0 0.0
    %302 = vmatprep.subr.mxu0 0.0
    %303 = vmatpush1.msra.mxu0 0.0
    %304 = vmatprep.subr.mxu0 0.0
    %305 = vmatpush1.msra.mxu0 0.0
    %306 = vmatprep.subr.mxu0 0.0
    %307 = vmatpush1.msra.mxu0 0.0
    %308 = vmatprep.subr.mxu0 0.0
    %309 = vmatpush1.msra.mxu0 0.0
    %310 = vmatprep.subr.mxu0 0.0
    %311 = vmatpush1.msra.mxu0 0.0
    %312 = vmatprep.subr.mxu0 0.0
    %313 = vmatpush1.msra.mxu0 0.0
    %314 = vmatprep.subr.mxu0 0.0
    %315 = vmatpush1.msra.mxu0 0.0
    %316 = vmatprep.mubr.f32.mxu0 0.0
    %v317 = vand.u32 %v88, 4294901760
    %v318 = vsub.f32 %v88, %v317
    %319 = vmatmul.mubr.f32.gmra.mrb[0].mxu0 %v318
    %v320 = vpop.f32.mrb[0].mxu0
    %v321 = vadd.f32 %v245, %v320
    %v322 = vpop.f32.mrb[0].mxu0
    %323 = vdwg.mxu0
    %324 = vmatprep.subr.mxu0 0.0
    %v325 = vand.u32 %v77, 4294901760
    %326 = vmatpush1.msra.mxu0 %v325
    %327 = vmatprep.subr.mxu0 0.0
    %v328 = vand.u32 %v78, 4294901760
    %329 = vmatpush1.msra.mxu0 %v328
    %330 = vmatprep.subr.mxu0 0.0
    %331 = vmatpush1.msra.mxu0 0.0
    %332 = vmatprep.subr.mxu0 0.0
    %333 = vmatpush1.msra.mxu0 0.0
    %334 = vmatprep.subr.mxu0 0.0
    %335 = vmatpush1.msra.mxu0 0.0
    %336 = vmatprep.subr.mxu0 0.0
    %337 = vmatpush1.msra.mxu0 0.0
    %338 = vmatprep.subr.mxu0 0.0
    %339 = vmatpush1.msra.mxu0 0.0
    %340 = vmatprep.subr.mxu0 0.0
    %341 = vmatpush1.msra.mxu0 0.0
    %342 = vmatprep.subr.mxu0 0.0
    %343 = vmatpush1.msra.mxu0 0.0
    %344 = vmatprep.subr.mxu0 0.0
    %345 = vmatpush1.msra.mxu0 0.0
    %346 = vmatprep.subr.mxu0 0.0
    %347 = vmatpush1.msra.mxu0 0.0
    %348 = vmatprep.subr.mxu0 0.0
    %349 = vmatpush1.msra.mxu0 0.0
    %350 = vmatprep.subr.mxu0 0.0
    %351 = vmatpush1.msra.mxu0 0.0
    %352 = vmatprep.subr.mxu0 0.0
    %353 = vmatpush1.msra.mxu0 0.0
    %354 = vmatprep.subr.mxu0 0.0
    %355 = vmatpush1.msra.mxu0 0.0
    %356 = vmatprep.subr.mxu0 0.0
    %357 = vmatpush1.msra.mxu0 0.0
    %358 = vmatprep.subr.mxu0 0.0
    %359 = vmatpush1.msra.mxu0 0.0
    %360 = vmatprep.subr.mxu0 0.0
    %361 = vmatpush1.msra.mxu0 0.0
    %362 = vmatprep.subr.mxu0 0.0
    %363 = vmatpush1.msra.mxu0 0.0
    %364 = vmatprep.subr.mxu0 0.0
    %365 = vmatpush1.msra.mxu0 0.0
    %366 = vmatprep.subr.mxu0 0.0
    %367 = vmatpush1.msra.mxu0 0.0
    %368 = vmatprep.subr.mxu0 0.0
    %369 = vmatpush1.msra.mxu0 0.0
    %370 = vmatprep.subr.mxu0 0.0
    %371 = vmatpush1.msra.mxu0 0.0
    %372 = vmatprep.subr.mxu0 0.0
    %373 = vmatpush1.msra.mxu0 0.0
    %374 = vmatprep.subr.mxu0 0.0
    %375 = vmatpush1.msra.mxu0 0.0
    %376 = vmatprep.subr.mxu0 0.0
    %377 = vmatpush1.msra.mxu0 0.0
    %378 = vmatprep.subr.mxu0 0.0
    %379 = vmatpush1.msra.mxu0 0.0
    %380 = vmatprep.subr.mxu0 0.0
    %381 = vmatpush1.msra.mxu0 0.0
    %382 = vmatprep.subr.mxu0 0.0
    %383 = vmatpush1.msra.mxu0 0.0
    %384 = vmatprep.subr.mxu0 0.0
    %385 = vmatpush1.msra.mxu0 0.0
    %386 = vmatprep.subr.mxu0 0.0
    %387 = vmatpush1.msra.mxu0 0.0
    %388 = vmatprep.subr.mxu0 0.0
    %389 = vmatpush1.msra.mxu0 0.0
    %390 = vmatprep.mubr.f32.mxu0 0.0
    %v391 = vand.u32 %v88, 4294901760
    %v392 = vsub.f32 %v88, %v391
    %v393 = vand.u32 %v392, 4294901760
    %394 = vmatmul.mubr.f32.gmra.mrb[0].mxu0 %v393
    %v395 = vpop.f32.mrb[0].mxu0
    %v396 = vadd.f32 %v321, %v395
    %v397 = vpop.f32.mrb[0].mxu0
    %398 = vdwg.mxu0
    %399 = vmatprep.subr.mxu0 0.0
    %v400 = vand.u32 %v77, 4294901760
    %v401 = vsub.f32 %v77, %v400
    %v402 = vand.u32 %v401, 4294901760
    %403 = vmatpush1.msra.mxu0 %v402
    %404 = vmatprep.subr.mxu0 0.0
    %v405 = vand.u32 %v78, 4294901760
    %v406 = vsub.f32 %v78, %v405
    %v407 = vand.u32 %v406, 4294901760
    %408 = vmatpush1.msra.mxu0 %v407
    %409 = vmatprep.subr.mxu0 0.0
    %410 = vmatpush1.msra.mxu0 0.0
    %411 = vmatprep.subr.mxu0 0.0
    %412 = vmatpush1.msra.mxu0 0.0
    %413 = vmatprep.subr.mxu0 0.0
    %414 = vmatpush1.msra.mxu0 0.0
    %415 = vmatprep.subr.mxu0 0.0
    %416 = vmatpush1.msra.mxu0 0.0
    %417 = vmatprep.subr.mxu0 0.0
    %418 = vmatpush1.msra.mxu0 0.0
    %419 = vmatprep.subr.mxu0 0.0
    %420 = vmatpush1.msra.mxu0 0.0
    %421 = vmatprep.subr.mxu0 0.0
    %422 = vmatpush1.msra.mxu0 0.0
    %423 = vmatprep.subr.mxu0 0.0
    %424 = vmatpush1.msra.mxu0 0.0
    %425 = vmatprep.subr.mxu0 0.0
    %426 = vmatpush1.msra.mxu0 0.0
    %427 = vmatprep.subr.mxu0 0.0
    %428 = vmatpush1.msra.mxu0 0.0
    %429 = vmatprep.subr.mxu0 0.0
    %430 = vmatpush1.msra.mxu0 0.0
    %431 = vmatprep.subr.mxu0 0.0
    %432 = vmatpush1.msra.mxu0 0.0
    %433 = vmatprep.subr.mxu0 0.0
    %434 = vmatpush1.msra.mxu0 0.0
    %435 = vmatprep.subr.mxu0 0.0
    %436 = vmatpush1.msra.mxu0 0.0
    %437 = vmatprep.subr.mxu0 0.0
    %438 = vmatpush1.msra.mxu0 0.0
    %439 = vmatprep.subr.mxu0 0.0
    %440 = vmatpush1.msra.mxu0 0.0
    %441 = vmatprep.subr.mxu0 0.0
    %442 = vmatpush1.msra.mxu0 0.0
    %443 = vmatprep.subr.mxu0 0.0
    %444 = vmatpush1.msra.mxu0 0.0
    %445 = vmatprep.subr.mxu0 0.0
    %446 = vmatpush1.msra.mxu0 0.0
    %447 = vmatprep.subr.mxu0 0.0
    %448 = vmatpush1.msra.mxu0 0.0
    %449 = vmatprep.subr.mxu0 0.0
    %450 = vmatpush1.msra.mxu0 0.0
    %451 = vmatprep.subr.mxu0 0.0
    %452 = vmatpush1.msra.mxu0 0.0
    %453 = vmatprep.subr.mxu0 0.0
    %454 = vmatpush1.msra.mxu0 0.0
    %455 = vmatprep.subr.mxu0 0.0
    %456 = vmatpush1.msra.mxu0 0.0
    %457 = vmatprep.subr.mxu0 0.0
    %458 = vmatpush1.msra.mxu0 0.0
    %459 = vmatprep.subr.mxu0 0.0
    %460 = vmatpush1.msra.mxu0 0.0
    %461 = vmatprep.subr.mxu0 0.0
    %462 = vmatpush1.msra.mxu0 0.0
    %463 = vmatprep.subr.mxu0 0.0
    %464 = vmatpush1.msra.mxu0 0.0
    %465 = vmatprep.subr.mxu0 0.0
    %466 = vmatpush1.msra.mxu0 0.0
    %467 = vmatprep.subr.mxu0 0.0
    %468 = vmatpush1.msra.mxu0 0.0
    %469 = vmatprep.mubr.f32.mxu0 0.0
    %v470 = vand.u32 %v88, 4294901760
    %471 = vmatmul.mubr.f32.gmra.mrb[0].mxu0 %v470
    %v472 = vpop.f32.mrb[0].mxu0
    %v473 = vadd.f32 %v396, %v472
    %v474 = vpop.f32.mrb[0].mxu0
    %475 = vdwg.mxu0
    %476 = vmatprep.subr.mxu0 0.0
    %v477 = vand.u32 %v77, 4294901760
    %478 = vmatpush1.msra.mxu0 %v477
    %479 = vmatprep.subr.mxu0 0.0
    %v480 = vand.u32 %v78, 4294901760
    %481 = vmatpush1.msra.mxu0 %v480
    %482 = vmatprep.subr.mxu0 0.0
    %483 = vmatpush1.msra.mxu0 0.0
    %484 = vmatprep.subr.mxu0 0.0
    %485 = vmatpush1.msra.mxu0 0.0
    %486 = vmatprep.subr.mxu0 0.0
    %487 = vmatpush1.msra.mxu0 0.0
    %488 = vmatprep.subr.mxu0 0.0
    %489 = vmatpush1.msra.mxu0 0.0
    %490 = vmatprep.subr.mxu0 0.0
    %491 = vmatpush1.msra.mxu0 0.0
    %492 = vmatprep.subr.mxu0 0.0
    %493 = vmatpush1.msra.mxu0 0.0
    %494 = vmatprep.subr.mxu0 0.0
    %495 = vmatpush1.msra.mxu0 0.0
    %496 = vmatprep.subr.mxu0 0.0
    %497 = vmatpush1.msra.mxu0 0.0
    %498 = vmatprep.subr.mxu0 0.0
    %499 = vmatpush1.msra.mxu0 0.0
    %500 = vmatprep.subr.mxu0 0.0
    %501 = vmatpush1.msra.mxu0 0.0
    %502 = vmatprep.subr.mxu0 0.0
    %503 = vmatpush1.msra.mxu0 0.0
    %504 = vmatprep.subr.mxu0 0.0
    %505 = vmatpush1.msra.mxu0 0.0
    %506 = vmatprep.subr.mxu0 0.0
    %507 = vmatpush1.msra.mxu0 0.0
    %508 = vmatprep.subr.mxu0 0.0
    %509 = vmatpush1.msra.mxu0 0.0
    %510 = vmatprep.subr.mxu0 0.0
    %511 = vmatpush1.msra.mxu0 0.0
    %512 = vmatprep.subr.mxu0 0.0
    %513 = vmatpush1.msra.mxu0 0.0
    %514 = vmatprep.subr.mxu0 0.0
    %515 = vmatpush1.msra.mxu0 0.0
    %516 = vmatprep.subr.mxu0 0.0
    %517 = vmatpush1.msra.mxu0 0.0
    %518 = vmatprep.subr.mxu0 0.0
    %519 = vmatpush1.msra.mxu0 0.0
    %520 = vmatprep.subr.mxu0 0.0
    %521 = vmatpush1.msra.mxu0 0.0
    %522 = vmatprep.subr.mxu0 0.0
    %523 = vmatpush1.msra.mxu0 0.0
    %524 = vmatprep.subr.mxu0 0.0
    %525 = vmatpush1.msra.mxu0 0.0
    %526 = vmatprep.subr.mxu0 0.0
    %527 = vmatpush1.msra.mxu0 0.0
    %528 = vmatprep.subr.mxu0 0.0
    %529 = vmatpush1.msra.mxu0 0.0
    %530 = vmatprep.subr.mxu0 0.0
    %531 = vmatpush1.msra.mxu0 0.0
    %532 = vmatprep.subr.mxu0 0.0
    %533 = vmatpush1.msra.mxu0 0.0
    %534 = vmatprep.subr.mxu0 0.0
    %535 = vmatpush1.msra.mxu0 0.0
    %536 = vmatprep.subr.mxu0 0.0
    %537 = vmatpush1.msra.mxu0 0.0
    %538 = vmatprep.subr.mxu0 0.0
    %539 = vmatpush1.msra.mxu0 0.0
    %540 = vmatprep.subr.mxu0 0.0
    %541 = vmatpush1.msra.mxu0 0.0
    %542 = vmatprep.mubr.f32.mxu0 0.0
    %v543 = vand.u32 %v88, 4294901760
    %544 = vmatmul.mubr.f32.gmra.mrb[0].mxu0 %v543
    %v545 = vpop.f32.mrb[0].mxu0
    %v546 = vadd.f32 %v473, %v545
    %v547 = vpop.f32.mrb[0].mxu0
    %548 = vdwg.mxu0
    %v549 = vmul.f32 %v546, 0.5
    %v550 = vmul.f32 %v546, 0.70710677
    %vm551 = vcmp.ge.f32.partialorder %v550, 0.0
    %v552 = vsel %vm551, 1.0, -1.0
    %v553 = vand.u32 2147483647, %v550
    %v554 = vmul.f32 %v553, 0.3275911
    %v555 = vadd.f32 %v554, 1.0
    %v556 = vrcp.pop %v555
    %v557 = vmul.f32 1.0, %v556
    %v558 = vmul.f32 %v557, 1.0614054
    %v559 = vadd.f32 %v558, -1.4531521
    %v560 = vmul.f32 %v559, %v557
    %v561 = vadd.f32 %v560, 1.4214138
    %v562 = vmul.f32 %v561, %v557
    %v563 = vadd.f32 %v562, -0.28449672
    %v564 = vmul.f32 %v563, %v557
    %v565 = vadd.f32 %v564, 0.2548296
    %v566 = vmul.f32 %v565, %v557
    %v567 = vsub.f32 0.0, %v553
    %v568 = vmul.f32 %v567, %v553
    %v569 = vmul.f32 %v568, 1.442695
    %v570 = vpow.pop %v569
    %v571 = vmul.f32 %v566, %v570
    %v572 = vsub.f32 1.0, %v571
    %v573 = vmul.f32 %v552, %v572
    %v574 = vadd.f32 %v573, 1.0
    %v575 = vmul.f32 %v549, %v574
    %v576 = vld [vmem:[%s6] sm:$0xff]
    %v577 = vld [vmem:[%s6 + $0x8] sm:$0xff]
    %v578 = vld [vmem:[%s6 + $0x10] sm:$0xff]
    %v579 = vld [vmem:[%s6 + $0x18] sm:$0xff]
    %v580 = vld [vmem:[%s6 + $0x20] sm:$0xff]
    %v581 = vld [vmem:[%s6 + $0x28] sm:$0xff]
    %v582 = vld [vmem:[%s6 + $0x30] sm:$0xff]
    %v583 = vld [vmem:[%s6 + $0x38] sm:$0xff]
    %v584 = vld [vmem:[%s6 + $0x40] sm:$0xff]
    %v585 = vld [vmem:[%s6 + $0x48] sm:$0xff]
    %v586 = vld [vmem:[%s6 + $0x50] sm:$0xff]
    %v587 = vld [vmem:[%s6 + $0x58] sm:$0xff]
    %v588 = vld [vmem:[%s6 + $0x60] sm:$0xff]
    %v589 = vld [vmem:[%s6 + $0x68] sm:$0xff]
    %v590 = vld [vmem:[%s6 + $0x70] sm:$0xff]
    %v591 = vld [vmem:[%s6 + $0x78] sm:$0xff]
    %v592 = vld [vmem:[%s7] sm:$0x1]
    %v594 = vlaneseq
    %v595 = vshrl.u32 %v594, 7
    %v596 = vsub.s32 0, %v595
    %v597 = vrot.slane %v592, %v596
    %599 = vmatprep.subr.mxu0 0.0
    %v600 = vand.u32 %v576, 4294901760
    %601 = vmatpush1.msra.mxu0 %v600
    %602 = vmatprep.subr.mxu0 0.0
    %v603 = vand.u32 %v577, 4294901760
    %604 = vmatpush1.msra.mxu0 %v603
    %605 = vmatprep.subr.mxu0 0.0
    %v606 = vand.u32 %v578, 4294901760
    %607 = vmatpush1.msra.mxu0 %v606
    %608 = vmatprep.subr.mxu0 0.0
    %v609 = vand.u32 %v579, 4294901760
    %610 = vmatpush1.msra.mxu0 %v609
    %611 = vmatprep.subr.mxu0 0.0
    %v612 = vand.u32 %v580, 4294901760
    %613 = vmatpush1.msra.mxu0 %v612
    %614 = vmatprep.subr.mxu0 0.0
    %v615 = vand.u32 %v581, 4294901760
    %616 = vmatpush1.msra.mxu0 %v615
    %617 = vmatprep.subr.mxu0 0.0
    %v618 = vand.u32 %v582, 4294901760
    %619 = vmatpush1.msra.mxu0 %v618
    %620 = vmatprep.subr.mxu0 0.0
    %v621 = vand.u32 %v583, 4294901760
    %622 = vmatpush1.msra.mxu0 %v621
    %623 = vmatprep.subr.mxu0 0.0
    %v624 = vand.u32 %v584, 4294901760
    %625 = vmatpush1.msra.mxu0 %v624
    %626 = vmatprep.subr.mxu0 0.0
    %v627 = vand.u32 %v585, 4294901760
    %628 = vmatpush1.msra.mxu0 %v627
    %629 = vmatprep.subr.mxu0 0.0
    %v630 = vand.u32 %v586, 4294901760
    %631 = vmatpush1.msra.mxu0 %v630
    %632 = vmatprep.subr.mxu0 0.0
    %v633 = vand.u32 %v587, 4294901760
    %634 = vmatpush1.msra.mxu0 %v633
    %635 = vmatprep.subr.mxu0 0.0
    %v636 = vand.u32 %v588, 4294901760
    %637 = vmatpush1.msra.mxu0 %v636
    %638 = vmatprep.subr.mxu0 0.0
    %v639 = vand.u32 %v589, 4294901760
    %640 = vmatpush1.msra.mxu0 %v639
    %641 = vmatprep.subr.mxu0 0.0
    %v642 = vand.u32 %v590, 4294901760
    %643 = vmatpush1.msra.mxu0 %v642
    %644 = vmatprep.subr.mxu0 0.0
    %v645 = vand.u32 %v591, 4294901760
    %646 = vmatpush1.msra.mxu0 %v645
    %647 = vmatprep.subr.mxu0 0.0
    %648 = vmatpush1.msra.mxu0 0.0
    %649 = vmatprep.subr.mxu0 0.0
    %650 = vmatpush1.msra.mxu0 0.0
    %651 = vmatprep.subr.mxu0 0.0
    %652 = vmatpush1.msra.mxu0 0.0
    %653 = vmatprep.subr.mxu0 0.0
    %654 = vmatpush1.msra.mxu0 0.0
    %655 = vmatprep.subr.mxu0 0.0
    %656 = vmatpush1.msra.mxu0 0.0
    %657 = vmatprep.subr.mxu0 0.0
    %658 = vmatpush1.msra.mxu0 0.0
    %659 = vmatprep.subr.mxu0 0.0
    %660 = vmatpush1.msra.mxu0 0.0
    %661 = vmatprep.subr.mxu0 0.0
    %662 = vmatpush1.msra.mxu0 0.0
    %663 = vmatprep.subr.mxu0 0.0
    %664 = vmatpush1.msra.mxu0 0.0
    %665 = vmatprep.subr.mxu0 0.0
    %666 = vmatpush1.msra.mxu0 0.0
    %667 = vmatprep.subr.mxu0 0.0
    %668 = vmatpush1.msra.mxu0 0.0
    %669 = vmatprep.subr.mxu0 0.0
    %670 = vmatpush1.msra.mxu0 0.0
    %671 = vmatprep.subr.mxu0 0.0
    %672 = vmatpush1.msra.mxu0 0.0
    %673 = vmatprep.subr.mxu0 0.0
    %674 = vmatpush1.msra.mxu0 0.0
    %675 = vmatprep.subr.mxu0 0.0
    %676 = vmatpush1.msra.mxu0 0.0
    %677 = vmatprep.subr.mxu0 0.0
    %678 = vmatpush1.msra.mxu0 0.0
    %679 = vmatprep.mubr.f32.mxu0 0.0
    %v680 = vand.u32 %v575, 4294901760
    %v681 = vsub.f32 %v575, %v680
    %v682 = vand.u32 %v681, 4294901760
    %v683 = vsub.f32 %v681, %v682
    %v684 = vand.u32 %v683, 4294901760
    %685 = vmatmul.mubr.f32.gmra.mrb[0].mxu0 %v684
    %v686 = vpop.f32.mrb[0].mxu0
    %v687 = vadd.f32 %v597, %v686
    %v688 = vpop.f32.mrb[0].mxu0
    %689 = vdwg.mxu0
    %690 = vmatprep.subr.mxu0 0.0
    %v691 = vand.u32 %v576, 4294901760
    %v692 = vsub.f32 %v576, %v691
    %v693 = vand.u32 %v692, 4294901760
    %v694 = vsub.f32 %v692, %v693
    %v695 = vand.u32 %v694, 4294901760
    %696 = vmatpush1.msra.mxu0 %v695
    %697 = vmatprep.subr.mxu0 0.0
    %v698 = vand.u32 %v577, 4294901760
    %v699 = vsub.f32 %v577, %v698
    %v700 = vand.u32 %v699, 4294901760
    %v701 = vsub.f32 %v699, %v700
    %v702 = vand.u32 %v701, 4294901760
    %703 = vmatpush1.msra.mxu0 %v702
    %704 = vmatprep.subr.mxu0 0.0
    %v705 = vand.u32 %v578, 4294901760
    %v706 = vsub.f32 %v578, %v705
    %v707 = vand.u32 %v706, 4294901760
    %v708 = vsub.f32 %v706, %v707
    %v709 = vand.u32 %v708, 4294901760
    %710 = vmatpush1.msra.mxu0 %v709
    %711 = vmatprep.subr.mxu0 0.0
    %v712 = vand.u32 %v579, 4294901760
    %v713 = vsub.f32 %v579, %v712
    %v714 = vand.u32 %v713, 4294901760
    %v715 = vsub.f32 %v713, %v714
    %v716 = vand.u32 %v715, 4294901760
    %717 = vmatpush1.msra.mxu0 %v716
    %718 = vmatprep.subr.mxu0 0.0
    %v719 = vand.u32 %v580, 4294901760
    %v720 = vsub.f32 %v580, %v719
    %v721 = vand.u32 %v720, 4294901760
    %v722 = vsub.f32 %v720, %v721
    %v723 = vand.u32 %v722, 4294901760
    %724 = vmatpush1.msra.mxu0 %v723
    %725 = vmatprep.subr.mxu0 0.0
    %v726 = vand.u32 %v581, 4294901760
    %v727 = vsub.f32 %v581, %v726
    %v728 = vand.u32 %v727, 4294901760
    %v729 = vsub.f32 %v727, %v728
    %v730 = vand.u32 %v729, 4294901760
    %731 = vmatpush1.msra.mxu0 %v730
    %732 = vmatprep.subr.mxu0 0.0
    %v733 = vand.u32 %v582, 4294901760
    %v734 = vsub.f32 %v582, %v733
    %v735 = vand.u32 %v734, 4294901760
    %v736 = vsub.f32 %v734, %v735
    %v737 = vand.u32 %v736, 4294901760
    %738 = vmatpush1.msra.mxu0 %v737
    %739 = vmatprep.subr.mxu0 0.0
    %v740 = vand.u32 %v583, 4294901760
    %v741 = vsub.f32 %v583, %v740
    %v742 = vand.u32 %v741, 4294901760
    %v743 = vsub.f32 %v741, %v742
    %v744 = vand.u32 %v743, 4294901760
    %745 = vmatpush1.msra.mxu0 %v744
    %746 = vmatprep.subr.mxu0 0.0
    %v747 = vand.u32 %v584, 4294901760
    %v748 = vsub.f32 %v584, %v747
    %v749 = vand.u32 %v748, 4294901760
    %v750 = vsub.f32 %v748, %v749
    %v751 = vand.u32 %v750, 4294901760
    %752 = vmatpush1.msra.mxu0 %v751
    %753 = vmatprep.subr.mxu0 0.0
    %v754 = vand.u32 %v585, 4294901760
    %v755 = vsub.f32 %v585, %v754
    %v756 = vand.u32 %v755, 4294901760
    %v757 = vsub.f32 %v755, %v756
    %v758 = vand.u32 %v757, 4294901760
    %759 = vmatpush1.msra.mxu0 %v758
    %760 = vmatprep.subr.mxu0 0.0
    %v761 = vand.u32 %v586, 4294901760
    %v762 = vsub.f32 %v586, %v761
    %v763 = vand.u32 %v762, 4294901760
    %v764 = vsub.f32 %v762, %v763
    %v765 = vand.u32 %v764, 4294901760
    %766 = vmatpush1.msra.mxu0 %v765
    %767 = vmatprep.subr.mxu0 0.0
    %v768 = vand.u32 %v587, 4294901760
    %v769 = vsub.f32 %v587, %v768
    %v770 = vand.u32 %v769, 4294901760
    %v771 = vsub.f32 %v769, %v770
    %v772 = vand.u32 %v771, 4294901760
    %773 = vmatpush1.msra.mxu0 %v772
    %774 = vmatprep.subr.mxu0 0.0
    %v775 = vand.u32 %v588, 4294901760
    %v776 = vsub.f32 %v588, %v775
    %v777 = vand.u32 %v776, 4294901760
    %v778 = vsub.f32 %v776, %v777
    %v779 = vand.u32 %v778, 4294901760
    %780 = vmatpush1.msra.mxu0 %v779
    %781 = vmatprep.subr.mxu0 0.0
    %v782 = vand.u32 %v589, 4294901760
    %v783 = vsub.f32 %v589, %v782
    %v784 = vand.u32 %v783, 4294901760
    %v785 = vsub.f32 %v783, %v784
    %v786 = vand.u32 %v785, 4294901760
    %787 = vmatpush1.msra.mxu0 %v786
    %788 = vmatprep.subr.mxu0 0.0
    %v789 = vand.u32 %v590, 4294901760
    %v790 = vsub.f32 %v590, %v789
    %v791 = vand.u32 %v790, 4294901760
    %v792 = vsub.f32 %v790, %v791
    %v793 = vand.u32 %v792, 4294901760
    %794 = vmatpush1.msra.mxu0 %v793
    %795 = vmatprep.subr.mxu0 0.0
    %v796 = vand.u32 %v591, 4294901760
    %v797 = vsub.f32 %v591, %v796
    %v798 = vand.u32 %v797, 4294901760
    %v799 = vsub.f32 %v797, %v798
    %v800 = vand.u32 %v799, 4294901760
    %801 = vmatpush1.msra.mxu0 %v800
    %802 = vmatprep.subr.mxu0 0.0
    %803 = vmatpush1.msra.mxu0 0.0
    %804 = vmatprep.subr.mxu0 0.0
    %805 = vmatpush1.msra.mxu0 0.0
    %806 = vmatprep.subr.mxu0 0.0
    %807 = vmatpush1.msra.mxu0 0.0
    %808 = vmatprep.subr.mxu0 0.0
    %809 = vmatpush1.msra.mxu0 0.0
    %810 = vmatprep.subr.mxu0 0.0
    %811 = vmatpush1.msra.mxu0 0.0
    %812 = vmatprep.subr.mxu0 0.0
    %813 = vmatpush1.msra.mxu0 0.0
    %814 = vmatprep.subr.mxu0 0.0
    %815 = vmatpush1.msra.mxu0 0.0
    %816 = vmatprep.subr.mxu0 0.0
    %817 = vmatpush1.msra.mxu0 0.0
    %818 = vmatprep.subr.mxu0 0.0
    %819 = vmatpush1.msra.mxu0 0.0
    %820 = vmatprep.subr.mxu0 0.0
    %821 = vmatpush1.msra.mxu0 0.0
    %822 = vmatprep.subr.mxu0 0.0
    %823 = vmatpush1.msra.mxu0 0.0
    %824 = vmatprep.subr.mxu0 0.0
    %825 = vmatpush1.msra.mxu0 0.0
    %826 = vmatprep.subr.mxu0 0.0
    %827 = vmatpush1.msra.mxu0 0.0
    %828 = vmatprep.subr.mxu0 0.0
    %829 = vmatpush1.msra.mxu0 0.0
    %830 = vmatprep.subr.mxu0 0.0
    %831 = vmatpush1.msra.mxu0 0.0
    %832 = vmatprep.subr.mxu0 0.0
    %833 = vmatpush1.msra.mxu0 0.0
    %834 = vmatprep.mubr.f32.mxu0 0.0
    %v835 = vand.u32 %v575, 4294901760
    %836 = vmatmul.mubr.f32.gmra.mrb[0].mxu0 %v835
    %v837 = vpop.f32.mrb[0].mxu0
    %v838 = vadd.f32 %v687, %v837
    %v839 = vpop.f32.mrb[0].mxu0
    %840 = vdwg.mxu0
    %841 = vmatprep.subr.mxu0 0.0
    %v842 = vand.u32 %v576, 4294901760
    %v843 = vsub.f32 %v576, %v842
    %844 = vmatpush1.msra.mxu0 %v843
    %845 = vmatprep.subr.mxu0 0.0
    %v846 = vand.u32 %v577, 4294901760
    %v847 = vsub.f32 %v577, %v846
    %848 = vmatpush1.msra.mxu0 %v847
    %849 = vmatprep.subr.mxu0 0.0
    %v850 = vand.u32 %v578, 4294901760
    %v851 = vsub.f32 %v578, %v850
    %852 = vmatpush1.msra.mxu0 %v851
    %853 = vmatprep.subr.mxu0 0.0
    %v854 = vand.u32 %v579, 4294901760
    %v855 = vsub.f32 %v579, %v854
    %856 = vmatpush1.msra.mxu0 %v855
    %857 = vmatprep.subr.mxu0 0.0
    %v858 = vand.u32 %v580, 4294901760
    %v859 = vsub.f32 %v580, %v858
    %860 = vmatpush1.msra.mxu0 %v859
    %861 = vmatprep.subr.mxu0 0.0
    %v862 = vand.u32 %v581, 4294901760
    %v863 = vsub.f32 %v581, %v862
    %864 = vmatpush1.msra.mxu0 %v863
    %865 = vmatprep.subr.mxu0 0.0
    %v866 = vand.u32 %v582, 4294901760
    %v867 = vsub.f32 %v582, %v866
    %868 = vmatpush1.msra.mxu0 %v867
    %869 = vmatprep.subr.mxu0 0.0
    %v870 = vand.u32 %v583, 4294901760
    %v871 = vsub.f32 %v583, %v870
    %872 = vmatpush1.msra.mxu0 %v871
    %873 = vmatprep.subr.mxu0 0.0
    %v874 = vand.u32 %v584, 4294901760
    %v875 = vsub.f32 %v584, %v874
    %876 = vmatpush1.msra.mxu0 %v875
    %877 = vmatprep.subr.mxu0 0.0
    %v878 = vand.u32 %v585, 4294901760
    %v879 = vsub.f32 %v585, %v878
    %880 = vmatpush1.msra.mxu0 %v879
    %881 = vmatprep.subr.mxu0 0.0
    %v882 = vand.u32 %v586, 4294901760
    %v883 = vsub.f32 %v586, %v882
    %884 = vmatpush1.msra.mxu0 %v883
    %885 = vmatprep.subr.mxu0 0.0
    %v886 = vand.u32 %v587, 4294901760
    %v887 = vsub.f32 %v587, %v886
    %888 = vmatpush1.msra.mxu0 %v887
    %889 = vmatprep.subr.mxu0 0.0
    %v890 = vand.u32 %v588, 4294901760
    %v891 = vsub.f32 %v588, %v890
    %892 = vmatpush1.msra.mxu0 %v891
    %893 = vmatprep.subr.mxu0 0.0
    %v894 = vand.u32 %v589, 4294901760
    %v895 = vsub.f32 %v589, %v894
    %896 = vmatpush1.msra.mxu0 %v895
    %897 = vmatprep.subr.mxu0 0.0
    %v898 = vand.u32 %v590, 4294901760
    %v899 = vsub.f32 %v590, %v898
    %900 = vmatpush1.msra.mxu0 %v899
    %901 = vmatprep.subr.mxu0 0.0
    %v902 = vand.u32 %v591, 4294901760
    %v903 = vsub.f32 %v591, %v902
    %904 = vmatpush1.msra.mxu0 %v903
    %905 = vmatprep.subr.mxu0 0.0
    %906 = vmatpush1.msra.mxu0 0.0
    %907 = vmatprep.subr.mxu0 0.0
    %908 = vmatpush1.msra.mxu0 0.0
    %909 = vmatprep.subr.mxu0 0.0
    %910 = vmatpush1.msra.mxu0 0.0
    %911 = vmatprep.subr.mxu0 0.0
    %912 = vmatpush1.msra.mxu0 0.0
    %913 = vmatprep.subr.mxu0 0.0
    %914 = vmatpush1.msra.mxu0 0.0
    %915 = vmatprep.subr.mxu0 0.0
    %916 = vmatpush1.msra.mxu0 0.0
    %917 = vmatprep.subr.mxu0 0.0
    %918 = vmatpush1.msra.mxu0 0.0
    %919 = vmatprep.subr.mxu0 0.0
    %920 = vmatpush1.msra.mxu0 0.0
    %921 = vmatprep.subr.mxu0 0.0
    %922 = vmatpush1.msra.mxu0 0.0
    %923 = vmatprep.subr.mxu0 0.0
    %924 = vmatpush1.msra.mxu0 0.0
    %925 = vmatprep.subr.mxu0 0.0
    %926 = vmatpush1.msra.mxu0 0.0
    %927 = vmatprep.subr.mxu0 0.0
    %928 = vmatpush1.msra.mxu0 0.0
    %929 = vmatprep.subr.mxu0 0.0
    %930 = vmatpush1.msra.mxu0 0.0
    %931 = vmatprep.subr.mxu0 0.0
    %932 = vmatpush1.msra.mxu0 0.0
    %933 = vmatprep.subr.mxu0 0.0
    %934 = vmatpush1.msra.mxu0 0.0
    %935 = vmatprep.subr.mxu0 0.0
    %936 = vmatpush1.msra.mxu0 0.0
    %937 = vmatprep.mubr.f32.mxu0 0.0
    %v938 = vand.u32 %v575, 4294901760
    %v939 = vsub.f32 %v575, %v938
    %940 = vmatmul.mubr.f32.gmra.mrb[0].mxu0 %v939
    %v941 = vpop.f32.mrb[0].mxu0
    %v942 = vadd.f32 %v838, %v941
    %v943 = vpop.f32.mrb[0].mxu0
    %944 = vdwg.mxu0
    %945 = vmatprep.subr.mxu0 0.0
    %v946 = vand.u32 %v576, 4294901760
    %947 = vmatpush1.msra.mxu0 %v946
    %948 = vmatprep.subr.mxu0 0.0
    %v949 = vand.u32 %v577, 4294901760
    %950 = vmatpush1.msra.mxu0 %v949
    %951 = vmatprep.subr.mxu0 0.0
    %v952 = vand.u32 %v578, 4294901760
    %953 = vmatpush1.msra.mxu0 %v952
    %954 = vmatprep.subr.mxu0 0.0
    %v955 = vand.u32 %v579, 4294901760
    %956 = vmatpush1.msra.mxu0 %v955
    %957 = vmatprep.subr.mxu0 0.0
    %v958 = vand.u32 %v580, 4294901760
    %959 = vmatpush1.msra.mxu0 %v958
    %960 = vmatprep.subr.mxu0 0.0
    %v961 = vand.u32 %v581, 4294901760
    %962 = vmatpush1.msra.mxu0 %v961
    %963 = vmatprep.subr.mxu0 0.0
    %v964 = vand.u32 %v582, 4294901760
    %965 = vmatpush1.msra.mxu0 %v964
    %966 = vmatprep.subr.mxu0 0.0
    %v967 = vand.u32 %v583, 4294901760
    %968 = vmatpush1.msra.mxu0 %v967
    %969 = vmatprep.subr.mxu0 0.0
    %v970 = vand.u32 %v584, 4294901760
    %971 = vmatpush1.msra.mxu0 %v970
    %972 = vmatprep.subr.mxu0 0.0
    %v973 = vand.u32 %v585, 4294901760
    %974 = vmatpush1.msra.mxu0 %v973
    %975 = vmatprep.subr.mxu0 0.0
    %v976 = vand.u32 %v586, 4294901760
    %977 = vmatpush1.msra.mxu0 %v976
    %978 = vmatprep.subr.mxu0 0.0
    %v979 = vand.u32 %v587, 4294901760
    %980 = vmatpush1.msra.mxu0 %v979
    %981 = vmatprep.subr.mxu0 0.0
    %v982 = vand.u32 %v588, 4294901760
    %983 = vmatpush1.msra.mxu0 %v982
    %984 = vmatprep.subr.mxu0 0.0
    %v985 = vand.u32 %v589, 4294901760
    %986 = vmatpush1.msra.mxu0 %v985
    %987 = vmatprep.subr.mxu0 0.0
    %v988 = vand.u32 %v590, 4294901760
    %989 = vmatpush1.msra.mxu0 %v988
    %990 = vmatprep.subr.mxu0 0.0
    %v991 = vand.u32 %v591, 4294901760
    %992 = vmatpush1.msra.mxu0 %v991
    %993 = vmatprep.subr.mxu0 0.0
    %994 = vmatpush1.msra.mxu0 0.0
    %995 = vmatprep.subr.mxu0 0.0
    %996 = vmatpush1.msra.mxu0 0.0
    %997 = vmatprep.subr.mxu0 0.0
    %998 = vmatpush1.msra.mxu0 0.0
    %999 = vmatprep.subr.mxu0 0.0
    %1000 = vmatpush1.msra.mxu0 0.0
    %1001 = vmatprep.subr.mxu0 0.0
    %1002 = vmatpush1.msra.mxu0 0.0
    %1003 = vmatprep.subr.mxu0 0.0
    %1004 = vmatpush1.msra.mxu0 0.0
    %1005 = vmatprep.subr.mxu0 0.0
    %1006 = vmatpush1.msra.mxu0 0.0
    %1007 = vmatprep.subr.mxu0 0.0
    %1008 = vmatpush1.msra.mxu0 0.0
    %1009 = vmatprep.subr.mxu0 0.0
    %1010 = vmatpush1.msra.mxu0 0.0
    %1011 = vmatprep.subr.mxu0 0.0
    %1012 = vmatpush1.msra.mxu0 0.0
    %1013 = vmatprep.subr.mxu0 0.0
    %1014 = vmatpush1.msra.mxu0 0.0
    %1015 = vmatprep.subr.mxu0 0.0
    %1016 = vmatpush1.msra.mxu0 0.0
    %1017 = vmatprep.subr.mxu0 0.0
    %1018 = vmatpush1.msra.mxu0 0.0
    %1019 = vmatprep.subr.mxu0 0.0
    %1020 = vmatpush1.msra.mxu0 0.0
    %1021 = vmatprep.subr.mxu0 0.0
    %1022 = vmatpush1.msra.mxu0 0.0
    %1023 = vmatprep.subr.mxu0 0.0
    %1024 = vmatpush1.msra.mxu0 0.0
    %1025 = vmatprep.mubr.f32.mxu0 0.0
    %v1026 = vand.u32 %v575, 4294901760
    %v1027 = vsub.f32 %v575, %v1026
    %v1028 = vand.u32 %v1027, 4294901760
    %1029 = vmatmul.mubr.f32.gmra.mrb[0].mxu0 %v1028
    %v1030 = vpop.f32.mrb[0].mxu0
    %v1031 = vadd.f32 %v942, %v1030
    %v1032 = vpop.f32.mrb[0].mxu0
    %1033 = vdwg.mxu0
    %1034 = vmatprep.subr.mxu0 0.0
    %v1035 = vand.u32 %v576, 4294901760
    %v1036 = vsub.f32 %v576, %v1035
    %v1037 = vand.u32 %v1036, 4294901760
    %1038 = vmatpush1.msra.mxu0 %v1037
    %1039 = vmatprep.subr.mxu0 0.0
    %v1040 = vand.u32 %v577, 4294901760
    %v1041 = vsub.f32 %v577, %v1040
    %v1042 = vand.u32 %v1041, 4294901760
    %1043 = vmatpush1.msra.mxu0 %v1042
    %1044 = vmatprep.subr.mxu0 0.0
    %v1045 = vand.u32 %v578, 4294901760
    %v1046 = vsub.f32 %v578, %v1045
    %v1047 = vand.u32 %v1046, 4294901760
    %1048 = vmatpush1.msra.mxu0 %v1047
    %1049 = vmatprep.subr.mxu0 0.0
    %v1050 = vand.u32 %v579, 4294901760
    %v1051 = vsub.f32 %v579, %v1050
    %v1052 = vand.u32 %v1051, 4294901760
    %1053 = vmatpush1.msra.mxu0 %v1052
    %1054 = vmatprep.subr.mxu0 0.0
    %v1055 = vand.u32 %v580, 4294901760
    %v1056 = vsub.f32 %v580, %v1055
    %v1057 = vand.u32 %v1056, 4294901760
    %1058 = vmatpush1.msra.mxu0 %v1057
    %1059 = vmatprep.subr.mxu0 0.0
    %v1060 = vand.u32 %v581, 4294901760
    %v1061 = vsub.f32 %v581, %v1060
    %v1062 = vand.u32 %v1061, 4294901760
    %1063 = vmatpush1.msra.mxu0 %v1062
    %1064 = vmatprep.subr.mxu0 0.0
    %v1065 = vand.u32 %v582, 4294901760
    %v1066 = vsub.f32 %v582, %v1065
    %v1067 = vand.u32 %v1066, 4294901760
    %1068 = vmatpush1.msra.mxu0 %v1067
    %1069 = vmatprep.subr.mxu0 0.0
    %v1070 = vand.u32 %v583, 4294901760
    %v1071 = vsub.f32 %v583, %v1070
    %v1072 = vand.u32 %v1071, 4294901760
    %1073 = vmatpush1.msra.mxu0 %v1072
    %1074 = vmatprep.subr.mxu0 0.0
    %v1075 = vand.u32 %v584, 4294901760
    %v1076 = vsub.f32 %v584, %v1075
    %v1077 = vand.u32 %v1076, 4294901760
    %1078 = vmatpush1.msra.mxu0 %v1077
    %1079 = vmatprep.subr.mxu0 0.0
    %v1080 = vand.u32 %v585, 4294901760
    %v1081 = vsub.f32 %v585, %v1080
    %v1082 = vand.u32 %v1081, 4294901760
    %1083 = vmatpush1.msra.mxu0 %v1082
    %1084 = vmatprep.subr.mxu0 0.0
    %v1085 = vand.u32 %v586, 4294901760
    %v1086 = vsub.f32 %v586, %v1085
    %v1087 = vand.u32 %v1086, 4294901760
    %1088 = vmatpush1.msra.mxu0 %v1087
    %1089 = vmatprep.subr.mxu0 0.0
    %v1090 = vand.u32 %v587, 4294901760
    %v1091 = vsub.f32 %v587, %v1090
    %v1092 = vand.u32 %v1091, 4294901760
    %1093 = vmatpush1.msra.mxu0 %v1092
    %1094 = vmatprep.subr.mxu0 0.0
    %v1095 = vand.u32 %v588, 4294901760
    %v1096 = vsub.f32 %v588, %v1095
    %v1097 = vand.u32 %v1096, 4294901760
    %1098 = vmatpush1.msra.mxu0 %v1097
    %1099 = vmatprep.subr.mxu0 0.0
    %v1100 = vand.u32 %v589, 4294901760
    %v1101 = vsub.f32 %v589, %v1100
    %v1102 = vand.u32 %v1101, 4294901760
    %1103 = vmatpush1.msra.mxu0 %v1102
    %1104 = vmatprep.subr.mxu0 0.0
    %v1105 = vand.u32 %v590, 4294901760
    %v1106 = vsub.f32 %v590, %v1105
    %v1107 = vand.u32 %v1106, 4294901760
    %1108 = vmatpush1.msra.mxu0 %v1107
    %1109 = vmatprep.subr.mxu0 0.0
    %v1110 = vand.u32 %v591, 4294901760
    %v1111 = vsub.f32 %v591, %v1110
    %v1112 = vand.u32 %v1111, 4294901760
    %1113 = vmatpush1.msra.mxu0 %v1112
    %1114 = vmatprep.subr.mxu0 0.0
    %1115 = vmatpush1.msra.mxu0 0.0
    %1116 = vmatprep.subr.mxu0 0.0
    %1117 = vmatpush1.msra.mxu0 0.0
    %1118 = vmatprep.subr.mxu0 0.0
    %1119 = vmatpush1.msra.mxu0 0.0
    %1120 = vmatprep.subr.mxu0 0.0
    %1121 = vmatpush1.msra.mxu0 0.0
    %1122 = vmatprep.subr.mxu0 0.0
    %1123 = vmatpush1.msra.mxu0 0.0
    %1124 = vmatprep.subr.mxu0 0.0
    %1125 = vmatpush1.msra.mxu0 0.0
    %1126 = vmatprep.subr.mxu0 0.0
    %1127 = vmatpush1.msra.mxu0 0.0
    %1128 = vmatprep.subr.mxu0 0.0
    %1129 = vmatpush1.msra.mxu0 0.0
    %1130 = vmatprep.subr.mxu0 0.0
    %1131 = vmatpush1.msra.mxu0 0.0
    %1132 = vmatprep.subr.mxu0 0.0
    %1133 = vmatpush1.msra.mxu0 0.0
    %1134 = vmatprep.subr.mxu0 0.0
    %1135 = vmatpush1.msra.mxu0 0.0
    %1136 = vmatprep.subr.mxu0 0.0
    %1137 = vmatpush1.msra.mxu0 0.0
    %1138 = vmatprep.subr.mxu0 0.0
    %1139 = vmatpush1.msra.mxu0 0.0
    %1140 = vmatprep.subr.mxu0 0.0
    %1141 = vmatpush1.msra.mxu0 0.0
    %1142 = vmatprep.subr.mxu0 0.0
    %1143 = vmatpush1.msra.mxu0 0.0
    %1144 = vmatprep.subr.mxu0 0.0
    %1145 = vmatpush1.msra.mxu0 0.0
    %1146 = vmatprep.mubr.f32.mxu0 0.0
    %v1147 = vand.u32 %v575, 4294901760
    %1148 = vmatmul.mubr.f32.gmra.mrb[0].mxu0 %v1147
    %v1149 = vpop.f32.mrb[0].mxu0
    %v1150 = vadd.f32 %v1031, %v1149
    %v1151 = vpop.f32.mrb[0].mxu0
    %1152 = vdwg.mxu0
    %1153 = vmatprep.subr.mxu0 0.0
    %v1154 = vand.u32 %v576, 4294901760
    %1155 = vmatpush1.msra.mxu0 %v1154
    %1156 = vmatprep.subr.mxu0 0.0
    %v1157 = vand.u32 %v577, 4294901760
    %1158 = vmatpush1.msra.mxu0 %v1157
    %1159 = vmatprep.subr.mxu0 0.0
    %v1160 = vand.u32 %v578, 4294901760
    %1161 = vmatpush1.msra.mxu0 %v1160
    %1162 = vmatprep.subr.mxu0 0.0
    %v1163 = vand.u32 %v579, 4294901760
    %1164 = vmatpush1.msra.mxu0 %v1163
    %1165 = vmatprep.subr.mxu0 0.0
    %v1166 = vand.u32 %v580, 4294901760
    %1167 = vmatpush1.msra.mxu0 %v1166
    %1168 = vmatprep.subr.mxu0 0.0
    %v1169 = vand.u32 %v581, 4294901760
    %1170 = vmatpush1.msra.mxu0 %v1169
    %1171 = vmatprep.subr.mxu0 0.0
    %v1172 = vand.u32 %v582, 4294901760
    %1173 = vmatpush1.msra.mxu0 %v1172
    %1174 = vmatprep.subr.mxu0 0.0
    %v1175 = vand.u32 %v583, 4294901760
    %1176 = vmatpush1.msra.mxu0 %v1175
    %1177 = vmatprep.subr.mxu0 0.0
    %v1178 = vand.u32 %v584, 4294901760
    %1179 = vmatpush1.msra.mxu0 %v1178
    %1180 = vmatprep.subr.mxu0 0.0
    %v1181 = vand.u32 %v585, 4294901760
    %1182 = vmatpush1.msra.mxu0 %v1181
    %1183 = vmatprep.subr.mxu0 0.0
    %v1184 = vand.u32 %v586, 4294901760
    %1185 = vmatpush1.msra.mxu0 %v1184
    %1186 = vmatprep.subr.mxu0 0.0
    %v1187 = vand.u32 %v587, 4294901760
    %1188 = vmatpush1.msra.mxu0 %v1187
    %1189 = vmatprep.subr.mxu0 0.0
    %v1190 = vand.u32 %v588, 4294901760
    %1191 = vmatpush1.msra.mxu0 %v1190
    %1192 = vmatprep.subr.mxu0 0.0
    %v1193 = vand.u32 %v589, 4294901760
    %1194 = vmatpush1.msra.mxu0 %v1193
    %1195 = vmatprep.subr.mxu0 0.0
    %v1196 = vand.u32 %v590, 4294901760
    %1197 = vmatpush1.msra.mxu0 %v1196
    %1198 = vmatprep.subr.mxu0 0.0
    %v1199 = vand.u32 %v591, 4294901760
    %1200 = vmatpush1.msra.mxu0 %v1199
    %1201 = vmatprep.subr.mxu0 0.0
    %1202 = vmatpush1.msra.mxu0 0.0
    %1203 = vmatprep.subr.mxu0 0.0
    %1204 = vmatpush1.msra.mxu0 0.0
    %1205 = vmatprep.subr.mxu0 0.0
    %1206 = vmatpush1.msra.mxu0 0.0
    %1207 = vmatprep.subr.mxu0 0.0
    %1208 = vmatpush1.msra.mxu0 0.0
    %1209 = vmatprep.subr.mxu0 0.0
    %1210 = vmatpush1.msra.mxu0 0.0
    %1211 = vmatprep.subr.mxu0 0.0
    %1212 = vmatpush1.msra.mxu0 0.0
    %1213 = vmatprep.subr.mxu0 0.0
    %1214 = vmatpush1.msra.mxu0 0.0
    %1215 = vmatprep.subr.mxu0 0.0
    %1216 = vmatpush1.msra.mxu0 0.0
    %1217 = vmatprep.subr.mxu0 0.0
    %1218 = vmatpush1.msra.mxu0 0.0
    %1219 = vmatprep.subr.mxu0 0.0
    %1220 = vmatpush1.msra.mxu0 0.0
    %1221 = vmatprep.subr.mxu0 0.0
    %1222 = vmatpush1.msra.mxu0 0.0
    %1223 = vmatprep.subr.mxu0 0.0
    %1224 = vmatpush1.msra.mxu0 0.0
    %1225 = vmatprep.subr.mxu0 0.0
    %1226 = vmatpush1.msra.mxu0 0.0
    %1227 = vmatprep.subr.mxu0 0.0
    %1228 = vmatpush1.msra.mxu0 0.0
    %1229 = vmatprep.subr.mxu0 0.0
    %1230 = vmatpush1.msra.mxu0 0.0
    %1231 = vmatprep.subr.mxu0 0.0
    %1232 = vmatpush1.msra.mxu0 0.0
    %1233 = vmatprep.mubr.f32.mxu0 0.0
    %v1234 = vand.u32 %v575, 4294901760
    %1235 = vmatmul.mubr.f32.gmra.mrb[0].mxu0 %v1234
    %v1236 = vpop.f32.mrb[0].mxu0
    %v1237 = vadd.f32 %v1150, %v1236
    %v1238 = vpop.f32.mrb[0].mxu0
    %1239 = vdwg.mxu0
    %v1240 = vmul.f32 %v1237, 0.5
    %v1241 = vmul.f32 %v1237, 0.70710677
    %vm1242 = vcmp.ge.f32.partialorder %v1241, 0.0
    %v1243 = vsel %vm1242, 1.0, -1.0
    %v1244 = vand.u32 2147483647, %v1241
    %v1245 = vmul.f32 %v1244, 0.3275911
    %v1246 = vadd.f32 %v1245, 1.0
    %v1247 = vrcp.pop %v1246
    %v1248 = vmul.f32 1.0, %v1247
    %v1249 = vmul.f32 %v1248, 1.0614054
    %v1250 = vadd.f32 %v1249, -1.4531521
    %v1251 = vmul.f32 %v1250, %v1248
    %v1252 = vadd.f32 %v1251, 1.4214138
    %v1253 = vmul.f32 %v1252, %v1248
    %v1254 = vadd.f32 %v1253, -0.28449672
    %v1255 = vmul.f32 %v1254, %v1248
    %v1256 = vadd.f32 %v1255, 0.2548296
    %v1257 = vmul.f32 %v1256, %v1248
    %v1258 = vsub.f32 0.0, %v1244
    %v1259 = vmul.f32 %v1258, %v1244
    %v1260 = vmul.f32 %v1259, 1.442695
    %v1261 = vpow.pop %v1260
    %v1262 = vmul.f32 %v1257, %v1261
    %v1263 = vsub.f32 1.0, %v1262
    %v1264 = vmul.f32 %v1243, %v1263
    %v1265 = vadd.f32 %v1264, 1.0
    %v1266 = vmul.f32 %v1240, %v1265
    %v1267 = vld [vmem:[%s9] sm:$0x3]
    %vm1268 = vcmask 64512
    %v1270 = vsel %vm1268, %v1267, 0
    %1272 = vmatprep.subr.mxu0 0.0
    %v1273 = vand.u32 %v1266, 4294901760
    %1274 = vmatpush1.msra.mxu0 %v1273
    %1275 = vmatprep.subr.mxu0 0.0
    %1276 = vmatpush1.msra.mxu0 0.0
    %1277 = vmatprep.subr.mxu0 0.0
    %1278 = vmatpush1.msra.mxu0 0.0
    %1279 = vmatprep.subr.mxu0 0.0
    %1280 = vmatpush1.msra.mxu0 0.0
    %1281 = vmatprep.subr.mxu0 0.0
    %1282 = vmatpush1.msra.mxu0 0.0
    %1283 = vmatprep.subr.mxu0 0.0
    %1284 = vmatpush1.msra.mxu0 0.0
    %1285 = vmatprep.subr.mxu0 0.0
    %1286 = vmatpush1.msra.mxu0 0.0
    %1287 = vmatprep.subr.mxu0 0.0
    %1288 = vmatpush1.msra.mxu0 0.0
    %1289 = vmatprep.subr.mxu0 0.0
    %1290 = vmatpush1.msra.mxu0 0.0
    %1291 = vmatprep.subr.mxu0 0.0
    %1292 = vmatpush1.msra.mxu0 0.0
    %1293 = vmatprep.subr.mxu0 0.0
    %1294 = vmatpush1.msra.mxu0 0.0
    %1295 = vmatprep.subr.mxu0 0.0
    %1296 = vmatpush1.msra.mxu0 0.0
    %1297 = vmatprep.subr.mxu0 0.0
    %1298 = vmatpush1.msra.mxu0 0.0
    %1299 = vmatprep.subr.mxu0 0.0
    %1300 = vmatpush1.msra.mxu0 0.0
    %1301 = vmatprep.subr.mxu0 0.0
    %1302 = vmatpush1.msra.mxu0 0.0
    %1303 = vmatprep.subr.mxu0 0.0
    %1304 = vmatpush1.msra.mxu0 0.0
    %1305 = vmatprep.subr.mxu0 0.0
    %1306 = vmatpush1.msra.mxu0 0.0
    %1307 = vmatprep.subr.mxu0 0.0
    %1308 = vmatpush1.msra.mxu0 0.0
    %1309 = vmatprep.subr.mxu0 0.0
    %1310 = vmatpush1.msra.mxu0 0.0
    %1311 = vmatprep.subr.mxu0 0.0
    %1312 = vmatpush1.msra.mxu0 0.0
    %1313 = vmatprep.subr.mxu0 0.0
    %1314 = vmatpush1.msra.mxu0 0.0
    %1315 = vmatprep.subr.mxu0 0.0
    %1316 = vmatpush1.msra.mxu0 0.0
    %1317 = vmatprep.subr.mxu0 0.0
    %1318 = vmatpush1.msra.mxu0 0.0
    %1319 = vmatprep.subr.mxu0 0.0
    %1320 = vmatpush1.msra.mxu0 0.0
    %1321 = vmatprep.subr.mxu0 0.0
    %1322 = vmatpush1.msra.mxu0 0.0
    %1323 = vmatprep.subr.mxu0 0.0
    %1324 = vmatpush1.msra.mxu0 0.0
    %1325 = vmatprep.subr.mxu0 0.0
    %1326 = vmatpush1.msra.mxu0 0.0
    %1327 = vmatprep.subr.mxu0 0.0
    %1328 = vmatpush1.msra.mxu0 0.0
    %1329 = vmatprep.subr.mxu0 0.0
    %1330 = vmatpush1.msra.mxu0 0.0
    %1331 = vmatprep.subr.mxu0 0.0
    %1332 = vmatpush1.msra.mxu0 0.0
    %1333 = vmatprep.subr.mxu0 0.0
    %1334 = vmatpush1.msra.mxu0 0.0
    %1335 = vmatprep.subr.mxu0 0.0
    %1336 = vmatpush1.msra.mxu0 0.0
    %1337 = vmatprep.mubr.f32.mxu0 0.0
    %v1338 = vand.u32 %v1270, 4294901760
    %v1339 = vsub.f32 %v1270, %v1338
    %v1340 = vand.u32 %v1339, 4294901760
    %v1341 = vsub.f32 %v1339, %v1340
    %v1342 = vand.u32 %v1341, 4294901760
    %1343 = vmatmul.mubr.f32.gmra.mrb[0].mxu0 %v1342
    %v1344 = vpop.f32.mrb[0].mxu0
    %v1345 = vadd.f32 0.0, %v1344
    %v1346 = vpop.f32.mrb[0].mxu0
    %1347 = vdwg.mxu0
    %1348 = vmatprep.subr.mxu0 0.0
    %v1349 = vand.u32 %v1266, 4294901760
    %v1350 = vsub.f32 %v1266, %v1349
    %v1351 = vand.u32 %v1350, 4294901760
    %v1352 = vsub.f32 %v1350, %v1351
    %v1353 = vand.u32 %v1352, 4294901760
    %1354 = vmatpush1.msra.mxu0 %v1353
    %1355 = vmatprep.subr.mxu0 0.0
    %1356 = vmatpush1.msra.mxu0 0.0
    %1357 = vmatprep.subr.mxu0 0.0
    %1358 = vmatpush1.msra.mxu0 0.0
    %1359 = vmatprep.subr.mxu0 0.0
    %1360 = vmatpush1.msra.mxu0 0.0
    %1361 = vmatprep.subr.mxu0 0.0
    %1362 = vmatpush1.msra.mxu0 0.0
    %1363 = vmatprep.subr.mxu0 0.0
    %1364 = vmatpush1.msra.mxu0 0.0
    %1365 = vmatprep.subr.mxu0 0.0
    %1366 = vmatpush1.msra.mxu0 0.0
    %1367 = vmatprep.subr.mxu0 0.0
    %1368 = vmatpush1.msra.mxu0 0.0
    %1369 = vmatprep.subr.mxu0 0.0
    %1370 = vmatpush1.msra.mxu0 0.0
    %1371 = vmatprep.subr.mxu0 0.0
    %1372 = vmatpush1.msra.mxu0 0.0
    %1373 = vmatprep.subr.mxu0 0.0
    %1374 = vmatpush1.msra.mxu0 0.0
    %1375 = vmatprep.subr.mxu0 0.0
    %1376 = vmatpush1.msra.mxu0 0.0
    %1377 = vmatprep.subr.mxu0 0.0
    %1378 = vmatpush1.msra.mxu0 0.0
    %1379 = vmatprep.subr.mxu0 0.0
    %1380 = vmatpush1.msra.mxu0 0.0
    %1381 = vmatprep.subr.mxu0 0.0
    %1382 = vmatpush1.msra.mxu0 0.0
    %1383 = vmatprep.subr.mxu0 0.0
    %1384 = vmatpush1.msra.mxu0 0.0
    %1385 = vmatprep.subr.mxu0 0.0
    %1386 = vmatpush1.msra.mxu0 0.0
    %1387 = vmatprep.subr.mxu0 0.0
    %1388 = vmatpush1.msra.mxu0 0.0
    %1389 = vmatprep.subr.mxu0 0.0
    %1390 = vmatpush1.msra.mxu0 0.0
    %1391 = vmatprep.subr.mxu0 0.0
    %1392 = vmatpush1.msra.mxu0 0.0
    %1393 = vmatprep.subr.mxu0 0.0
    %1394 = vmatpush1.msra.mxu0 0.0
    %1395 = vmatprep.subr.mxu0 0.0
    %1396 = vmatpush1.msra.mxu0 0.0
    %1397 = vmatprep.subr.mxu0 0.0
    %1398 = vmatpush1.msra.mxu0 0.0
    %1399 = vmatprep.subr.mxu0 0.0
    %1400 = vmatpush1.msra.mxu0 0.0
    %1401 = vmatprep.subr.mxu0 0.0
    %1402 = vmatpush1.msra.mxu0 0.0
    %1403 = vmatprep.subr.mxu0 0.0
    %1404 = vmatpush1.msra.mxu0 0.0
    %1405 = vmatprep.subr.mxu0 0.0
    %1406 = vmatpush1.msra.mxu0 0.0
    %1407 = vmatprep.subr.mxu0 0.0
    %1408 = vmatpush1.msra.mxu0 0.0
    %1409 = vmatprep.subr.mxu0 0.0
    %1410 = vmatpush1.msra.mxu0 0.0
    %1411 = vmatprep.subr.mxu0 0.0
    %1412 = vmatpush1.msra.mxu0 0.0
    %1413 = vmatprep.subr.mxu0 0.0
    %1414 = vmatpush1.msra.mxu0 0.0
    %1415 = vmatprep.subr.mxu0 0.0
    %1416 = vmatpush1.msra.mxu0 0.0
    %1417 = vmatprep.mubr.f32.mxu0 0.0
    %v1418 = vand.u32 %v1270, 4294901760
    %1419 = vmatmul.mubr.f32.gmra.mrb[0].mxu0 %v1418
    %v1420 = vpop.f32.mrb[0].mxu0
    %v1421 = vadd.f32 %v1345, %v1420
    %v1422 = vpop.f32.mrb[0].mxu0
    %1423 = vdwg.mxu0
    %1424 = vmatprep.subr.mxu0 0.0
    %v1425 = vand.u32 %v1266, 4294901760
    %v1426 = vsub.f32 %v1266, %v1425
    %1427 = vmatpush1.msra.mxu0 %v1426
    %1428 = vmatprep.subr.mxu0 0.0
    %1429 = vmatpush1.msra.mxu0 0.0
    %1430 = vmatprep.subr.mxu0 0.0
    %1431 = vmatpush1.msra.mxu0 0.0
    %1432 = vmatprep.subr.mxu0 0.0
    %1433 = vmatpush1.msra.mxu0 0.0
    %1434 = vmatprep.subr.mxu0 0.0
    %1435 = vmatpush1.msra.mxu0 0.0
    %1436 = vmatprep.subr.mxu0 0.0
    %1437 = vmatpush1.msra.mxu0 0.0
    %1438 = vmatprep.subr.mxu0 0.0
    %1439 = vmatpush1.msra.mxu0 0.0
    %1440 = vmatprep.subr.mxu0 0.0
    %1441 = vmatpush1.msra.mxu0 0.0
    %1442 = vmatprep.subr.mxu0 0.0
    %1443 = vmatpush1.msra.mxu0 0.0
    %1444 = vmatprep.subr.mxu0 0.0
    %1445 = vmatpush1.msra.mxu0 0.0
    %1446 = vmatprep.subr.mxu0 0.0
    %1447 = vmatpush1.msra.mxu0 0.0
    %1448 = vmatprep.subr.mxu0 0.0
    %1449 = vmatpush1.msra.mxu0 0.0
    %1450 = vmatprep.subr.mxu0 0.0
    %1451 = vmatpush1.msra.mxu0 0.0
    %1452 = vmatprep.subr.mxu0 0.0
    %1453 = vmatpush1.msra.mxu0 0.0
    %1454 = vmatprep.subr.mxu0 0.0
    %1455 = vmatpush1.msra.mxu0 0.0
    %1456 = vmatprep.subr.mxu0 0.0
    %1457 = vmatpush1.msra.mxu0 0.0
    %1458 = vmatprep.subr.mxu0 0.0
    %1459 = vmatpush1.msra.mxu0 0.0
    %1460 = vmatprep.subr.mxu0 0.0
    %1461 = vmatpush1.msra.mxu0 0.0
    %1462 = vmatprep.subr.mxu0 0.0
    %1463 = vmatpush1.msra.mxu0 0.0
    %1464 = vmatprep.subr.mxu0 0.0
    %1465 = vmatpush1.msra.mxu0 0.0
    %1466 = vmatprep.subr.mxu0 0.0
    %1467 = vmatpush1.msra.mxu0 0.0
    %1468 = vmatprep.subr.mxu0 0.0
    %1469 = vmatpush1.msra.mxu0 0.0
    %1470 = vmatprep.subr.mxu0 0.0
    %1471 = vmatpush1.msra.mxu0 0.0
    %1472 = vmatprep.subr.mxu0 0.0
    %1473 = vmatpush1.msra.mxu0 0.0
    %1474 = vmatprep.subr.mxu0 0.0
    %1475 = vmatpush1.msra.mxu0 0.0
    %1476 = vmatprep.subr.mxu0 0.0
    %1477 = vmatpush1.msra.mxu0 0.0
    %1478 = vmatprep.subr.mxu0 0.0
    %1479 = vmatpush1.msra.mxu0 0.0
    %1480 = vmatprep.subr.mxu0 0.0
    %1481 = vmatpush1.msra.mxu0 0.0
    %1482 = vmatprep.subr.mxu0 0.0
    %1483 = vmatpush1.msra.mxu0 0.0
    %1484 = vmatprep.subr.mxu0 0.0
    %1485 = vmatpush1.msra.mxu0 0.0
    %1486 = vmatprep.subr.mxu0 0.0
    %1487 = vmatpush1.msra.mxu0 0.0
    %1488 = vmatprep.subr.mxu0 0.0
    %1489 = vmatpush1.msra.mxu0 0.0
    %1490 = vmatprep.mubr.f32.mxu0 0.0
    %v1491 = vand.u32 %v1270, 4294901760
    %v1492 = vsub.f32 %v1270, %v1491
    %1493 = vmatmul.mubr.f32.gmra.mrb[0].mxu0 %v1492
    %v1494 = vpop.f32.mrb[0].mxu0
    %v1495 = vadd.f32 %v1421, %v1494
    %v1496 = vpop.f32.mrb[0].mxu0
    %1497 = vdwg.mxu0
    %1498 = vmatprep.subr.mxu0 0.0
    %v1499 = vand.u32 %v1266, 4294901760
    %1500 = vmatpush1.msra.mxu0 %v1499
    %1501 = vmatprep.subr.mxu0 0.0
    %1502 = vmatpush1.msra.mxu0 0.0
    %1503 = vmatprep.subr.mxu0 0.0
    %1504 = vmatpush1.msra.mxu0 0.0
    %1505 = vmatprep.subr.mxu0 0.0
    %1506 = vmatpush1.msra.mxu0 0.0
    %1507 = vmatprep.subr.mxu0 0.0
    %1508 = vmatpush1.msra.mxu0 0.0
    %1509 = vmatprep.subr.mxu0 0.0
    %1510 = vmatpush1.msra.mxu0 0.0
    %1511 = vmatprep.subr.mxu0 0.0
    %1512 = vmatpush1.msra.mxu0 0.0
    %1513 = vmatprep.subr.mxu0 0.0
    %1514 = vmatpush1.msra.mxu0 0.0
    %1515 = vmatprep.subr.mxu0 0.0
    %1516 = vmatpush1.msra.mxu0 0.0
    %1517 = vmatprep.subr.mxu0 0.0
    %1518 = vmatpush1.msra.mxu0 0.0
    %1519 = vmatprep.subr.mxu0 0.0
    %1520 = vmatpush1.msra.mxu0 0.0
    %1521 = vmatprep.subr.mxu0 0.0
    %1522 = vmatpush1.msra.mxu0 0.0
    %1523 = vmatprep.subr.mxu0 0.0
    %1524 = vmatpush1.msra.mxu0 0.0
    %1525 = vmatprep.subr.mxu0 0.0
    %1526 = vmatpush1.msra.mxu0 0.0
    %1527 = vmatprep.subr.mxu0 0.0
    %1528 = vmatpush1.msra.mxu0 0.0
    %1529 = vmatprep.subr.mxu0 0.0
    %1530 = vmatpush1.msra.mxu0 0.0
    %1531 = vmatprep.subr.mxu0 0.0
    %1532 = vmatpush1.msra.mxu0 0.0
    %1533 = vmatprep.subr.mxu0 0.0
    %1534 = vmatpush1.msra.mxu0 0.0
    %1535 = vmatprep.subr.mxu0 0.0
    %1536 = vmatpush1.msra.mxu0 0.0
    %1537 = vmatprep.subr.mxu0 0.0
    %1538 = vmatpush1.msra.mxu0 0.0
    %1539 = vmatprep.subr.mxu0 0.0
    %1540 = vmatpush1.msra.mxu0 0.0
    %1541 = vmatprep.subr.mxu0 0.0
    %1542 = vmatpush1.msra.mxu0 0.0
    %1543 = vmatprep.subr.mxu0 0.0
    %1544 = vmatpush1.msra.mxu0 0.0
    %1545 = vmatprep.subr.mxu0 0.0
    %1546 = vmatpush1.msra.mxu0 0.0
    %1547 = vmatprep.subr.mxu0 0.0
    %1548 = vmatpush1.msra.mxu0 0.0
    %1549 = vmatprep.subr.mxu0 0.0
    %1550 = vmatpush1.msra.mxu0 0.0
    %1551 = vmatprep.subr.mxu0 0.0
    %1552 = vmatpush1.msra.mxu0 0.0
    %1553 = vmatprep.subr.mxu0 0.0
    %1554 = vmatpush1.msra.mxu0 0.0
    %1555 = vmatprep.subr.mxu0 0.0
    %1556 = vmatpush1.msra.mxu0 0.0
    %1557 = vmatprep.subr.mxu0 0.0
    %1558 = vmatpush1.msra.mxu0 0.0
    %1559 = vmatprep.subr.mxu0 0.0
    %1560 = vmatpush1.msra.mxu0 0.0
    %1561 = vmatprep.subr.mxu0 0.0
    %1562 = vmatpush1.msra.mxu0 0.0
    %1563 = vmatprep.mubr.f32.mxu0 0.0
    %v1564 = vand.u32 %v1270, 4294901760
    %v1565 = vsub.f32 %v1270, %v1564
    %v1566 = vand.u32 %v1565, 4294901760
    %1567 = vmatmul.mubr.f32.gmra.mrb[0].mxu0 %v1566
    %v1568 = vpop.f32.mrb[0].mxu0
    %v1569 = vadd.f32 %v1495, %v1568
    %v1570 = vpop.f32.mrb[0].mxu0
    %1571 = vdwg.mxu0
    %1572 = vmatprep.subr.mxu0 0.0
    %v1573 = vand.u32 %v1266, 4294901760
    %v1574 = vsub.f32 %v1266, %v1573
    %v1575 = vand.u32 %v1574, 4294901760
    %1576 = vmatpush1.msra.mxu0 %v1575
    %1577 = vmatprep.subr.mxu0 0.0
    %1578 = vmatpush1.msra.mxu0 0.0
    %1579 = vmatprep.subr.mxu0 0.0
    %1580 = vmatpush1.msra.mxu0 0.0
    %1581 = vmatprep.subr.mxu0 0.0
    %1582 = vmatpush1.msra.mxu0 0.0
    %1583 = vmatprep.subr.mxu0 0.0
    %1584 = vmatpush1.msra.mxu0 0.0
    %1585 = vmatprep.subr.mxu0 0.0
    %1586 = vmatpush1.msra.mxu0 0.0
    %1587 = vmatprep.subr.mxu0 0.0
    %1588 = vmatpush1.msra.mxu0 0.0
    %1589 = vmatprep.subr.mxu0 0.0
    %1590 = vmatpush1.msra.mxu0 0.0
    %1591 = vmatprep.subr.mxu0 0.0
    %1592 = vmatpush1.msra.mxu0 0.0
    %1593 = vmatprep.subr.mxu0 0.0
    %1594 = vmatpush1.msra.mxu0 0.0
    %1595 = vmatprep.subr.mxu0 0.0
    %1596 = vmatpush1.msra.mxu0 0.0
    %1597 = vmatprep.subr.mxu0 0.0
    %1598 = vmatpush1.msra.mxu0 0.0
    %1599 = vmatprep.subr.mxu0 0.0
    %1600 = vmatpush1.msra.mxu0 0.0
    %1601 = vmatprep.subr.mxu0 0.0
    %1602 = vmatpush1.msra.mxu0 0.0
    %1603 = vmatprep.subr.mxu0 0.0
    %1604 = vmatpush1.msra.mxu0 0.0
    %1605 = vmatprep.subr.mxu0 0.0
    %1606 = vmatpush1.msra.mxu0 0.0
    %1607 = vmatprep.subr.mxu0 0.0
    %1608 = vmatpush1.msra.mxu0 0.0
    %1609 = vmatprep.subr.mxu0 0.0
    %1610 = vmatpush1.msra.mxu0 0.0
    %1611 = vmatprep.subr.mxu0 0.0
    %1612 = vmatpush1.msra.mxu0 0.0
    %1613 = vmatprep.subr.mxu0 0.0
    %1614 = vmatpush1.msra.mxu0 0.0
    %1615 = vmatprep.subr.mxu0 0.0
    %1616 = vmatpush1.msra.mxu0 0.0
    %1617 = vmatprep.subr.mxu0 0.0
    %1618 = vmatpush1.msra.mxu0 0.0
    %1619 = vmatprep.subr.mxu0 0.0
    %1620 = vmatpush1.msra.mxu0 0.0
    %1621 = vmatprep.subr.mxu0 0.0
    %1622 = vmatpush1.msra.mxu0 0.0
    %1623 = vmatprep.subr.mxu0 0.0
    %1624 = vmatpush1.msra.mxu0 0.0
    %1625 = vmatprep.subr.mxu0 0.0
    %1626 = vmatpush1.msra.mxu0 0.0
    %1627 = vmatprep.subr.mxu0 0.0
    %1628 = vmatpush1.msra.mxu0 0.0
    %1629 = vmatprep.subr.mxu0 0.0
    %1630 = vmatpush1.msra.mxu0 0.0
    %1631 = vmatprep.subr.mxu0 0.0
    %1632 = vmatpush1.msra.mxu0 0.0
    %1633 = vmatprep.subr.mxu0 0.0
    %1634 = vmatpush1.msra.mxu0 0.0
    %1635 = vmatprep.subr.mxu0 0.0
    %1636 = vmatpush1.msra.mxu0 0.0
    %1637 = vmatprep.subr.mxu0 0.0
    %1638 = vmatpush1.msra.mxu0 0.0
    %1639 = vmatprep.mubr.f32.mxu0 0.0
    %v1640 = vand.u32 %v1270, 4294901760
    %1641 = vmatmul.mubr.f32.gmra.mrb[0].mxu0 %v1640
    %v1642 = vpop.f32.mrb[0].mxu0
    %v1643 = vadd.f32 %v1569, %v1642
    %v1644 = vpop.f32.mrb[0].mxu0
    %1645 = vdwg.mxu0
    %1646 = vmatprep.subr.mxu0 0.0
    %v1647 = vand.u32 %v1266, 4294901760
    %1648 = vmatpush1.msra.mxu0 %v1647
    %1649 = vmatprep.subr.mxu0 0.0
    %1650 = vmatpush1.msra.mxu0 0.0
    %1651 = vmatprep.subr.mxu0 0.0
    %1652 = vmatpush1.msra.mxu0 0.0
    %1653 = vmatprep.subr.mxu0 0.0
    %1654 = vmatpush1.msra.mxu0 0.0
    %1655 = vmatprep.subr.mxu0 0.0
    %1656 = vmatpush1.msra.mxu0 0.0
    %1657 = vmatprep.subr.mxu0 0.0
    %1658 = vmatpush1.msra.mxu0 0.0
    %1659 = vmatprep.subr.mxu0 0.0
    %1660 = vmatpush1.msra.mxu0 0.0
    %1661 = vmatprep.subr.mxu0 0.0
    %1662 = vmatpush1.msra.mxu0 0.0
    %1663 = vmatprep.subr.mxu0 0.0
    %1664 = vmatpush1.msra.mxu0 0.0
    %1665 = vmatprep.subr.mxu0 0.0
    %1666 = vmatpush1.msra.mxu0 0.0
    %1667 = vmatprep.subr.mxu0 0.0
    %1668 = vmatpush1.msra.mxu0 0.0
    %1669 = vmatprep.subr.mxu0 0.0
    %1670 = vmatpush1.msra.mxu0 0.0
    %1671 = vmatprep.subr.mxu0 0.0
    %1672 = vmatpush1.msra.mxu0 0.0
    %1673 = vmatprep.subr.mxu0 0.0
    %1674 = vmatpush1.msra.mxu0 0.0
    %1675 = vmatprep.subr.mxu0 0.0
    %1676 = vmatpush1.msra.mxu0 0.0
    %1677 = vmatprep.subr.mxu0 0.0
    %1678 = vmatpush1.msra.mxu0 0.0
    %1679 = vmatprep.subr.mxu0 0.0
    %1680 = vmatpush1.msra.mxu0 0.0
    %1681 = vmatprep.subr.mxu0 0.0
    %1682 = vmatpush1.msra.mxu0 0.0
    %1683 = vmatprep.subr.mxu0 0.0
    %1684 = vmatpush1.msra.mxu0 0.0
    %1685 = vmatprep.subr.mxu0 0.0
    %1686 = vmatpush1.msra.mxu0 0.0
    %1687 = vmatprep.subr.mxu0 0.0
    %1688 = vmatpush1.msra.mxu0 0.0
    %1689 = vmatprep.subr.mxu0 0.0
    %1690 = vmatpush1.msra.mxu0 0.0
    %1691 = vmatprep.subr.mxu0 0.0
    %1692 = vmatpush1.msra.mxu0 0.0
    %1693 = vmatprep.subr.mxu0 0.0
    %1694 = vmatpush1.msra.mxu0 0.0
    %1695 = vmatprep.subr.mxu0 0.0
    %1696 = vmatpush1.msra.mxu0 0.0
    %1697 = vmatprep.subr.mxu0 0.0
    %1698 = vmatpush1.msra.mxu0 0.0
    %1699 = vmatprep.subr.mxu0 0.0
    %1700 = vmatpush1.msra.mxu0 0.0
    %1701 = vmatprep.subr.mxu0 0.0
    %1702 = vmatpush1.msra.mxu0 0.0
    %1703 = vmatprep.subr.mxu0 0.0
    %1704 = vmatpush1.msra.mxu0 0.0
    %1705 = vmatprep.subr.mxu0 0.0
    %1706 = vmatpush1.msra.mxu0 0.0
    %1707 = vmatprep.subr.mxu0 0.0
    %1708 = vmatpush1.msra.mxu0 0.0
    %1709 = vmatprep.subr.mxu0 0.0
    %1710 = vmatpush1.msra.mxu0 0.0
    %1711 = vmatprep.mubr.f32.mxu0 0.0
    %v1712 = vand.u32 %v1270, 4294901760
    %1713 = vmatmul.mubr.f32.gmra.mrb[0].mxu0 %v1712
    %v1714 = vpop.f32.mrb[0].mxu0
    %v1715 = vadd.f32 %v1643, %v1714
    %v1716 = vpop.f32.mrb[0].mxu0
    %1717 = vdwg.mxu0
    %v1718 = vld [vmem:[%s8] sm:$0xff]
    %v1719 = vld [vmem:[%s8 + $0x8] sm:$0xff]
    %v1720 = vld [vmem:[%s8 + $0x10] sm:$0xff]
    %v1721 = vld [vmem:[%s8 + $0x18] sm:$0xff]
    %v1722 = vld [vmem:[%s8 + $0x20] sm:$0xff]
    %v1723 = vld [vmem:[%s8 + $0x28] sm:$0xff]
    %v1724 = vld [vmem:[%s8 + $0x30] sm:$0xff]
    %v1725 = vld [vmem:[%s8 + $0x38] sm:$0xff]
    %v1726 = vld [vmem:[%s8 + $0x40] sm:$0xff]
    %v1727 = vld [vmem:[%s8 + $0x48] sm:$0xff]
    %v1728 = vld [vmem:[%s8 + $0x50] sm:$0xff]
    %v1729 = vld [vmem:[%s8 + $0x58] sm:$0xff]
    %v1730 = vld [vmem:[%s8 + $0x60] sm:$0xff]
    %v1731 = vld [vmem:[%s8 + $0x68] sm:$0xff]
    %v1732 = vld [vmem:[%s8 + $0x70] sm:$0xff]
    %v1733 = vld [vmem:[%s8 + $0x78] sm:$0xff]
    %s1734 = sld [smem:[#allocation2]]
    %v1735 = vstv %s1734
    %1736 = vmatprep.subr.mxu0 0.0
    %v1737 = vand.u32 %v1718, 4294901760
    %1738 = vmatpush1.msra.mxu0 %v1737
    %1739 = vmatprep.subr.mxu0 0.0
    %v1740 = vand.u32 %v1719, 4294901760
    %1741 = vmatpush1.msra.mxu0 %v1740
    %1742 = vmatprep.subr.mxu0 0.0
    %v1743 = vand.u32 %v1720, 4294901760
    %1744 = vmatpush1.msra.mxu0 %v1743
    %1745 = vmatprep.subr.mxu0 0.0
    %v1746 = vand.u32 %v1721, 4294901760
    %1747 = vmatpush1.msra.mxu0 %v1746
    %1748 = vmatprep.subr.mxu0 0.0
    %v1749 = vand.u32 %v1722, 4294901760
    %1750 = vmatpush1.msra.mxu0 %v1749
    %1751 = vmatprep.subr.mxu0 0.0
    %v1752 = vand.u32 %v1723, 4294901760
    %1753 = vmatpush1.msra.mxu0 %v1752
    %1754 = vmatprep.subr.mxu0 0.0
    %v1755 = vand.u32 %v1724, 4294901760
    %1756 = vmatpush1.msra.mxu0 %v1755
    %1757 = vmatprep.subr.mxu0 0.0
    %v1758 = vand.u32 %v1725, 4294901760
    %1759 = vmatpush1.msra.mxu0 %v1758
    %1760 = vmatprep.subr.mxu0 0.0
    %v1761 = vand.u32 %v1726, 4294901760
    %1762 = vmatpush1.msra.mxu0 %v1761
    %1763 = vmatprep.subr.mxu0 0.0
    %v1764 = vand.u32 %v1727, 4294901760
    %1765 = vmatpush1.msra.mxu0 %v1764
    %1766 = vmatprep.subr.mxu0 0.0
    %v1767 = vand.u32 %v1728, 4294901760
    %1768 = vmatpush1.msra.mxu0 %v1767
    %1769 = vmatprep.subr.mxu0 0.0
    %v1770 = vand.u32 %v1729, 4294901760
    %1771 = vmatpush1.msra.mxu0 %v1770
    %1772 = vmatprep.subr.mxu0 0.0
    %v1773 = vand.u32 %v1730, 4294901760
    %1774 = vmatpush1.msra.mxu0 %v1773
    %1775 = vmatprep.subr.mxu0 0.0
    %v1776 = vand.u32 %v1731, 4294901760
    %1777 = vmatpush1.msra.mxu0 %v1776
    %1778 = vmatprep.subr.mxu0 0.0
    %v1779 = vand.u32 %v1732, 4294901760
    %1780 = vmatpush1.msra.mxu0 %v1779
    %1781 = vmatprep.subr.mxu0 0.0
    %v1782 = vand.u32 %v1733, 4294901760
    %1783 = vmatpush1.msra.mxu0 %v1782
    %1784 = vmatprep.subr.mxu0 0.0
    %1785 = vmatpush1.msra.mxu0 0.0
    %1786 = vmatprep.subr.mxu0 0.0
    %1787 = vmatpush1.msra.mxu0 0.0
    %1788 = vmatprep.subr.mxu0 0.0
    %1789 = vmatpush1.msra.mxu0 0.0
    %1790 = vmatprep.subr.mxu0 0.0
    %1791 = vmatpush1.msra.mxu0 0.0
    %1792 = vmatprep.subr.mxu0 0.0
    %1793 = vmatpush1.msra.mxu0 0.0
    %1794 = vmatprep.subr.mxu0 0.0
    %1795 = vmatpush1.msra.mxu0 0.0
    %1796 = vmatprep.subr.mxu0 0.0
    %1797 = vmatpush1.msra.mxu0 0.0
    %1798 = vmatprep.subr.mxu0 0.0
    %1799 = vmatpush1.msra.mxu0 0.0
    %1800 = vmatprep.subr.mxu0 0.0
    %1801 = vmatpush1.msra.mxu0 0.0
    %1802 = vmatprep.subr.mxu0 0.0
    %1803 = vmatpush1.msra.mxu0 0.0
    %1804 = vmatprep.subr.mxu0 0.0
    %1805 = vmatpush1.msra.mxu0 0.0
    %1806 = vmatprep.subr.mxu0 0.0
    %1807 = vmatpush1.msra.mxu0 0.0
    %1808 = vmatprep.subr.mxu0 0.0
    %1809 = vmatpush1.msra.mxu0 0.0
    %1810 = vmatprep.subr.mxu0 0.0
    %1811 = vmatpush1.msra.mxu0 0.0
    %1812 = vmatprep.subr.mxu0 0.0
    %1813 = vmatpush1.msra.mxu0 0.0
    %1814 = vmatprep.subr.mxu0 0.0
    %1815 = vmatpush1.msra.mxu0 0.0
    %1816 = vmatprep.mubr.f32.mxu0 0.0
    %v1817 = vand.u32 %v1715, 4294901760
    %v1818 = vsub.f32 %v1715, %v1817
    %v1819 = vand.u32 %v1818, 4294901760
    %v1820 = vsub.f32 %v1818, %v1819
    %v1821 = vand.u32 %v1820, 4294901760
    %1822 = vmatmul.mubr.f32.gmra.mrb[0].mxu0 %v1821
    %v1823 = vpop.f32.mrb[0].mxu0
    %v1824 = vadd.f32 %v1735, %v1823
    %v1825 = vpop.f32.mrb[0].mxu0
    %1826 = vdwg.mxu0
    %1827 = vmatprep.subr.mxu0 0.0
    %v1828 = vand.u32 %v1718, 4294901760
    %v1829 = vsub.f32 %v1718, %v1828
    %v1830 = vand.u32 %v1829, 4294901760
    %v1831 = vsub.f32 %v1829, %v1830
    %v1832 = vand.u32 %v1831, 4294901760
    %1833 = vmatpush1.msra.mxu0 %v1832
    %1834 = vmatprep.subr.mxu0 0.0
    %v1835 = vand.u32 %v1719, 4294901760
    %v1836 = vsub.f32 %v1719, %v1835
    %v1837 = vand.u32 %v1836, 4294901760
    %v1838 = vsub.f32 %v1836, %v1837
    %v1839 = vand.u32 %v1838, 4294901760
    %1840 = vmatpush1.msra.mxu0 %v1839
    %1841 = vmatprep.subr.mxu0 0.0
    %v1842 = vand.u32 %v1720, 4294901760
    %v1843 = vsub.f32 %v1720, %v1842
    %v1844 = vand.u32 %v1843, 4294901760
    %v1845 = vsub.f32 %v1843, %v1844
    %v1846 = vand.u32 %v1845, 4294901760
    %1847 = vmatpush1.msra.mxu0 %v1846
    %1848 = vmatprep.subr.mxu0 0.0
    %v1849 = vand.u32 %v1721, 4294901760
    %v1850 = vsub.f32 %v1721, %v1849
    %v1851 = vand.u32 %v1850, 4294901760
    %v1852 = vsub.f32 %v1850, %v1851
    %v1853 = vand.u32 %v1852, 4294901760
    %1854 = vmatpush1.msra.mxu0 %v1853
    %1855 = vmatprep.subr.mxu0 0.0
    %v1856 = vand.u32 %v1722, 4294901760
    %v1857 = vsub.f32 %v1722, %v1856
    %v1858 = vand.u32 %v1857, 4294901760
    %v1859 = vsub.f32 %v1857, %v1858
    %v1860 = vand.u32 %v1859, 4294901760
    %1861 = vmatpush1.msra.mxu0 %v1860
    %1862 = vmatprep.subr.mxu0 0.0
    %v1863 = vand.u32 %v1723, 4294901760
    %v1864 = vsub.f32 %v1723, %v1863
    %v1865 = vand.u32 %v1864, 4294901760
    %v1866 = vsub.f32 %v1864, %v1865
    %v1867 = vand.u32 %v1866, 4294901760
    %1868 = vmatpush1.msra.mxu0 %v1867
    %1869 = vmatprep.subr.mxu0 0.0
    %v1870 = vand.u32 %v1724, 4294901760
    %v1871 = vsub.f32 %v1724, %v1870
    %v1872 = vand.u32 %v1871, 4294901760
    %v1873 = vsub.f32 %v1871, %v1872
    %v1874 = vand.u32 %v1873, 4294901760
    %1875 = vmatpush1.msra.mxu0 %v1874
    %1876 = vmatprep.subr.mxu0 0.0
    %v1877 = vand.u32 %v1725, 4294901760
    %v1878 = vsub.f32 %v1725, %v1877
    %v1879 = vand.u32 %v1878, 4294901760
    %v1880 = vsub.f32 %v1878, %v1879
    %v1881 = vand.u32 %v1880, 4294901760
    %1882 = vmatpush1.msra.mxu0 %v1881
    %1883 = vmatprep.subr.mxu0 0.0
    %v1884 = vand.u32 %v1726, 4294901760
    %v1885 = vsub.f32 %v1726, %v1884
    %v1886 = vand.u32 %v1885, 4294901760
    %v1887 = vsub.f32 %v1885, %v1886
    %v1888 = vand.u32 %v1887, 4294901760
    %1889 = vmatpush1.msra.mxu0 %v1888
    %1890 = vmatprep.subr.mxu0 0.0
    %v1891 = vand.u32 %v1727, 4294901760
    %v1892 = vsub.f32 %v1727, %v1891
    %v1893 = vand.u32 %v1892, 4294901760
    %v1894 = vsub.f32 %v1892, %v1893
    %v1895 = vand.u32 %v1894, 4294901760
    %1896 = vmatpush1.msra.mxu0 %v1895
    %1897 = vmatprep.subr.mxu0 0.0
    %v1898 = vand.u32 %v1728, 4294901760
    %v1899 = vsub.f32 %v1728, %v1898
    %v1900 = vand.u32 %v1899, 4294901760
    %v1901 = vsub.f32 %v1899, %v1900
    %v1902 = vand.u32 %v1901, 4294901760
    %1903 = vmatpush1.msra.mxu0 %v1902
    %1904 = vmatprep.subr.mxu0 0.0
    %v1905 = vand.u32 %v1729, 4294901760
    %v1906 = vsub.f32 %v1729, %v1905
    %v1907 = vand.u32 %v1906, 4294901760
    %v1908 = vsub.f32 %v1906, %v1907
    %v1909 = vand.u32 %v1908, 4294901760
    %1910 = vmatpush1.msra.mxu0 %v1909
    %1911 = vmatprep.subr.mxu0 0.0
    %v1912 = vand.u32 %v1730, 4294901760
    %v1913 = vsub.f32 %v1730, %v1912
    %v1914 = vand.u32 %v1913, 4294901760
    %v1915 = vsub.f32 %v1913, %v1914
    %v1916 = vand.u32 %v1915, 4294901760
    %1917 = vmatpush1.msra.mxu0 %v1916
    %1918 = vmatprep.subr.mxu0 0.0
    %v1919 = vand.u32 %v1731, 4294901760
    %v1920 = vsub.f32 %v1731, %v1919
    %v1921 = vand.u32 %v1920, 4294901760
    %v1922 = vsub.f32 %v1920, %v1921
    %v1923 = vand.u32 %v1922, 4294901760
    %1924 = vmatpush1.msra.mxu0 %v1923
    %1925 = vmatprep.subr.mxu0 0.0
    %v1926 = vand.u32 %v1732, 4294901760
    %v1927 = vsub.f32 %v1732, %v1926
    %v1928 = vand.u32 %v1927, 4294901760
    %v1929 = vsub.f32 %v1927, %v1928
    %v1930 = vand.u32 %v1929, 4294901760
    %1931 = vmatpush1.msra.mxu0 %v1930
    %1932 = vmatprep.subr.mxu0 0.0
    %v1933 = vand.u32 %v1733, 4294901760
    %v1934 = vsub.f32 %v1733, %v1933
    %v1935 = vand.u32 %v1934, 4294901760
    %v1936 = vsub.f32 %v1934, %v1935
    %v1937 = vand.u32 %v1936, 4294901760
    %1938 = vmatpush1.msra.mxu0 %v1937
    %1939 = vmatprep.subr.mxu0 0.0
    %1940 = vmatpush1.msra.mxu0 0.0
    %1941 = vmatprep.subr.mxu0 0.0
    %1942 = vmatpush1.msra.mxu0 0.0
    %1943 = vmatprep.subr.mxu0 0.0
    %1944 = vmatpush1.msra.mxu0 0.0
    %1945 = vmatprep.subr.mxu0 0.0
    %1946 = vmatpush1.msra.mxu0 0.0
    %1947 = vmatprep.subr.mxu0 0.0
    %1948 = vmatpush1.msra.mxu0 0.0
    %1949 = vmatprep.subr.mxu0 0.0
    %1950 = vmatpush1.msra.mxu0 0.0
    %1951 = vmatprep.subr.mxu0 0.0
    %1952 = vmatpush1.msra.mxu0 0.0
    %1953 = vmatprep.subr.mxu0 0.0
    %1954 = vmatpush1.msra.mxu0 0.0
    %1955 = vmatprep.subr.mxu0 0.0
    %1956 = vmatpush1.msra.mxu0 0.0
    %1957 = vmatprep.subr.mxu0 0.0
    %1958 = vmatpush1.msra.mxu0 0.0
    %1959 = vmatprep.subr.mxu0 0.0
    %1960 = vmatpush1.msra.mxu0 0.0
    %1961 = vmatprep.subr.mxu0 0.0
    %1962 = vmatpush1.msra.mxu0 0.0
    %1963 = vmatprep.subr.mxu0 0.0
    %1964 = vmatpush1.msra.mxu0 0.0
    %1965 = vmatprep.subr.mxu0 0.0
    %1966 = vmatpush1.msra.mxu0 0.0
    %1967 = vmatprep.subr.mxu0 0.0
    %1968 = vmatpush1.msra.mxu0 0.0
    %1969 = vmatprep.subr.mxu0 0.0
    %1970 = vmatpush1.msra.mxu0 0.0
    %1971 = vmatprep.mubr.f32.mxu0 0.0
    %v1972 = vand.u32 %v1715, 4294901760
    %1973 = vmatmul.mubr.f32.gmra.mrb[0].mxu0 %v1972
    %v1974 = vpop.f32.mrb[0].mxu0
    %v1975 = vadd.f32 %v1824, %v1974
    %v1976 = vpop.f32.mrb[0].mxu0
    %1977 = vdwg.mxu0
    %1978 = vmatprep.subr.mxu0 0.0
    %v1979 = vand.u32 %v1718, 4294901760
    %v1980 = vsub.f32 %v1718, %v1979
    %1981 = vmatpush1.msra.mxu0 %v1980
    %1982 = vmatprep.subr.mxu0 0.0
    %v1983 = vand.u32 %v1719, 4294901760
    %v1984 = vsub.f32 %v1719, %v1983
    %1985 = vmatpush1.msra.mxu0 %v1984
    %1986 = vmatprep.subr.mxu0 0.0
    %v1987 = vand.u32 %v1720, 4294901760
    %v1988 = vsub.f32 %v1720, %v1987
    %1989 = vmatpush1.msra.mxu0 %v1988
    %1990 = vmatprep.subr.mxu0 0.0
    %v1991 = vand.u32 %v1721, 4294901760
    %v1992 = vsub.f32 %v1721, %v1991
    %1993 = vmatpush1.msra.mxu0 %v1992
    %1994 = vmatprep.subr.mxu0 0.0
    %v1995 = vand.u32 %v1722, 4294901760
    %v1996 = vsub.f32 %v1722, %v1995
    %1997 = vmatpush1.msra.mxu0 %v1996
    %1998 = vmatprep.subr.mxu0 0.0
    %v1999 = vand.u32 %v1723, 4294901760
    %v2000 = vsub.f32 %v1723, %v1999
    %2001 = vmatpush1.msra.mxu0 %v2000
    %2002 = vmatprep.subr.mxu0 0.0
    %v2003 = vand.u32 %v1724, 4294901760
    %v2004 = vsub.f32 %v1724, %v2003
    %2005 = vmatpush1.msra.mxu0 %v2004
    %2006 = vmatprep.subr.mxu0 0.0
    %v2007 = vand.u32 %v1725, 4294901760
    %v2008 = vsub.f32 %v1725, %v2007
    %2009 = vmatpush1.msra.mxu0 %v2008
    %2010 = vmatprep.subr.mxu0 0.0
    %v2011 = vand.u32 %v1726, 4294901760
    %v2012 = vsub.f32 %v1726, %v2011
    %2013 = vmatpush1.msra.mxu0 %v2012
    %2014 = vmatprep.subr.mxu0 0.0
    %v2015 = vand.u32 %v1727, 4294901760
    %v2016 = vsub.f32 %v1727, %v2015
    %2017 = vmatpush1.msra.mxu0 %v2016
    %2018 = vmatprep.subr.mxu0 0.0
    %v2019 = vand.u32 %v1728, 4294901760
    %v2020 = vsub.f32 %v1728, %v2019
    %2021 = vmatpush1.msra.mxu0 %v2020
    %2022 = vmatprep.subr.mxu0 0.0
    %v2023 = vand.u32 %v1729, 4294901760
    %v2024 = vsub.f32 %v1729, %v2023
    %2025 = vmatpush1.msra.mxu0 %v2024
    %2026 = vmatprep.subr.mxu0 0.0
    %v2027 = vand.u32 %v1730, 4294901760
    %v2028 = vsub.f32 %v1730, %v2027
    %2029 = vmatpush1.msra.mxu0 %v2028
    %2030 = vmatprep.subr.mxu0 0.0
    %v2031 = vand.u32 %v1731, 4294901760
    %v2032 = vsub.f32 %v1731, %v2031
    %2033 = vmatpush1.msra.mxu0 %v2032
    %2034 = vmatprep.subr.mxu0 0.0
    %v2035 = vand.u32 %v1732, 4294901760
    %v2036 = vsub.f32 %v1732, %v2035
    %2037 = vmatpush1.msra.mxu0 %v2036
    %2038 = vmatprep.subr.mxu0 0.0
    %v2039 = vand.u32 %v1733, 4294901760
    %v2040 = vsub.f32 %v1733, %v2039
    %2041 = vmatpush1.msra.mxu0 %v2040
    %2042 = vmatprep.subr.mxu0 0.0
    %2043 = vmatpush1.msra.mxu0 0.0
    %2044 = vmatprep.subr.mxu0 0.0
    %2045 = vmatpush1.msra.mxu0 0.0
    %2046 = vmatprep.subr.mxu0 0.0
    %2047 = vmatpush1.msra.mxu0 0.0
    %2048 = vmatprep.subr.mxu0 0.0
    %2049 = vmatpush1.msra.mxu0 0.0
    %2050 = vmatprep.subr.mxu0 0.0
    %2051 = vmatpush1.msra.mxu0 0.0
    %2052 = vmatprep.subr.mxu0 0.0
    %2053 = vmatpush1.msra.mxu0 0.0
    %2054 = vmatprep.subr.mxu0 0.0
    %2055 = vmatpush1.msra.mxu0 0.0
    %2056 = vmatprep.subr.mxu0 0.0
    %2057 = vmatpush1.msra.mxu0 0.0
    %2058 = vmatprep.subr.mxu0 0.0
    %2059 = vmatpush1.msra.mxu0 0.0
    %2060 = vmatprep.subr.mxu0 0.0
    %2061 = vmatpush1.msra.mxu0 0.0
    %2062 = vmatprep.subr.mxu0 0.0
    %2063 = vmatpush1.msra.mxu0 0.0
    %2064 = vmatprep.subr.mxu0 0.0
    %2065 = vmatpush1.msra.mxu0 0.0
    %2066 = vmatprep.subr.mxu0 0.0
    %2067 = vmatpush1.msra.mxu0 0.0
    %2068 = vmatprep.subr.mxu0 0.0
    %2069 = vmatpush1.msra.mxu0 0.0
    %2070 = vmatprep.subr.mxu0 0.0
    %2071 = vmatpush1.msra.mxu0 0.0
    %2072 = vmatprep.subr.mxu0 0.0
    %2073 = vmatpush1.msra.mxu0 0.0
    %2074 = vmatprep.mubr.f32.mxu0 0.0
    %v2075 = vand.u32 %v1715, 4294901760
    %v2076 = vsub.f32 %v1715, %v2075
    %2077 = vmatmul.mubr.f32.gmra.mrb[0].mxu0 %v2076
    %v2078 = vpop.f32.mrb[0].mxu0
    %v2079 = vadd.f32 %v1975, %v2078
    %v2080 = vpop.f32.mrb[0].mxu0
    %2081 = vdwg.mxu0
    %2082 = vmatprep.subr.mxu0 0.0
    %v2083 = vand.u32 %v1718, 4294901760
    %2084 = vmatpush1.msra.mxu0 %v2083
    %2085 = vmatprep.subr.mxu0 0.0
    %v2086 = vand.u32 %v1719, 4294901760
    %2087 = vmatpush1.msra.mxu0 %v2086
    %2088 = vmatprep.subr.mxu0 0.0
    %v2089 = vand.u32 %v1720, 4294901760
    %2090 = vmatpush1.msra.mxu0 %v2089
    %2091 = vmatprep.subr.mxu0 0.0
    %v2092 = vand.u32 %v1721, 4294901760
    %2093 = vmatpush1.msra.mxu0 %v2092
    %2094 = vmatprep.subr.mxu0 0.0
    %v2095 = vand.u32 %v1722, 4294901760
    %2096 = vmatpush1.msra.mxu0 %v2095
    %2097 = vmatprep.subr.mxu0 0.0
    %v2098 = vand.u32 %v1723, 4294901760
    %2099 = vmatpush1.msra.mxu0 %v2098
    %2100 = vmatprep.subr.mxu0 0.0
    %v2101 = vand.u32 %v1724, 4294901760
    %2102 = vmatpush1.msra.mxu0 %v2101
    %2103 = vmatprep.subr.mxu0 0.0
    %v2104 = vand.u32 %v1725, 4294901760
    %2105 = vmatpush1.msra.mxu0 %v2104
    %2106 = vmatprep.subr.mxu0 0.0
    %v2107 = vand.u32 %v1726, 4294901760
    %2108 = vmatpush1.msra.mxu0 %v2107
    %2109 = vmatprep.subr.mxu0 0.0
    %v2110 = vand.u32 %v1727, 4294901760
    %2111 = vmatpush1.msra.mxu0 %v2110
    %2112 = vmatprep.subr.mxu0 0.0
    %v2113 = vand.u32 %v1728, 4294901760
    %2114 = vmatpush1.msra.mxu0 %v2113
    %2115 = vmatprep.subr.mxu0 0.0
    %v2116 = vand.u32 %v1729, 4294901760
    %2117 = vmatpush1.msra.mxu0 %v2116
    %2118 = vmatprep.subr.mxu0 0.0
    %v2119 = vand.u32 %v1730, 4294901760
    %2120 = vmatpush1.msra.mxu0 %v2119
    %2121 = vmatprep.subr.mxu0 0.0
    %v2122 = vand.u32 %v1731, 4294901760
    %2123 = vmatpush1.msra.mxu0 %v2122
    %2124 = vmatprep.subr.mxu0 0.0
    %v2125 = vand.u32 %v1732, 4294901760
    %2126 = vmatpush1.msra.mxu0 %v2125
    %2127 = vmatprep.subr.mxu0 0.0
    %v2128 = vand.u32 %v1733, 4294901760
    %2129 = vmatpush1.msra.mxu0 %v2128
    %2130 = vmatprep.subr.mxu0 0.0
    %2131 = vmatpush1.msra.mxu0 0.0
    %2132 = vmatprep.subr.mxu0 0.0
    %2133 = vmatpush1.msra.mxu0 0.0
    %2134 = vmatprep.subr.mxu0 0.0
    %2135 = vmatpush1.msra.mxu0 0.0
    %2136 = vmatprep.subr.mxu0 0.0
    %2137 = vmatpush1.msra.mxu0 0.0
    %2138 = vmatprep.subr.mxu0 0.0
    %2139 = vmatpush1.msra.mxu0 0.0
    %2140 = vmatprep.subr.mxu0 0.0
    %2141 = vmatpush1.msra.mxu0 0.0
    %2142 = vmatprep.subr.mxu0 0.0
    %2143 = vmatpush1.msra.mxu0 0.0
    %2144 = vmatprep.subr.mxu0 0.0
    %2145 = vmatpush1.msra.mxu0 0.0
    %2146 = vmatprep.subr.mxu0 0.0
    %2147 = vmatpush1.msra.mxu0 0.0
    %2148 = vmatprep.subr.mxu0 0.0
    %2149 = vmatpush1.msra.mxu0 0.0
    %2150 = vmatprep.subr.mxu0 0.0
    %2151 = vmatpush1.msra.mxu0 0.0
    %2152 = vmatprep.subr.mxu0 0.0
    %2153 = vmatpush1.msra.mxu0 0.0
    %2154 = vmatprep.subr.mxu0 0.0
    %2155 = vmatpush1.msra.mxu0 0.0
    %2156 = vmatprep.subr.mxu0 0.0
    %2157 = vmatpush1.msra.mxu0 0.0
    %2158 = vmatprep.subr.mxu0 0.0
    %2159 = vmatpush1.msra.mxu0 0.0
    %2160 = vmatprep.subr.mxu0 0.0
    %2161 = vmatpush1.msra.mxu0 0.0
    %2162 = vmatprep.mubr.f32.mxu0 0.0
    %v2163 = vand.u32 %v1715, 4294901760
    %v2164 = vsub.f32 %v1715, %v2163
    %v2165 = vand.u32 %v2164, 4294901760
    %2166 = vmatmul.mubr.f32.gmra.mrb[0].mxu0 %v2165
    %v2167 = vpop.f32.mrb[0].mxu0
    %v2168 = vadd.f32 %v2079, %v2167
    %v2169 = vpop.f32.mrb[0].mxu0
    %2170 = vdwg.mxu0
    %2171 = vmatprep.subr.mxu0 0.0
    %v2172 = vand.u32 %v1718, 4294901760
    %v2173 = vsub.f32 %v1718, %v2172
    %v2174 = vand.u32 %v2173, 4294901760
    %2175 = vmatpush1.msra.mxu0 %v2174
    %2176 = vmatprep.subr.mxu0 0.0
    %v2177 = vand.u32 %v1719, 4294901760
    %v2178 = vsub.f32 %v1719, %v2177
    %v2179 = vand.u32 %v2178, 4294901760
    %2180 = vmatpush1.msra.mxu0 %v2179
    %2181 = vmatprep.subr.mxu0 0.0
    %v2182 = vand.u32 %v1720, 4294901760
    %v2183 = vsub.f32 %v1720, %v2182
    %v2184 = vand.u32 %v2183, 4294901760
    %2185 = vmatpush1.msra.mxu0 %v2184
    %2186 = vmatprep.subr.mxu0 0.0
    %v2187 = vand.u32 %v1721, 4294901760
    %v2188 = vsub.f32 %v1721, %v2187
    %v2189 = vand.u32 %v2188, 4294901760
    %2190 = vmatpush1.msra.mxu0 %v2189
    %2191 = vmatprep.subr.mxu0 0.0
    %v2192 = vand.u32 %v1722, 4294901760
    %v2193 = vsub.f32 %v1722, %v2192
    %v2194 = vand.u32 %v2193, 4294901760
    %2195 = vmatpush1.msra.mxu0 %v2194
    %2196 = vmatprep.subr.mxu0 0.0
    %v2197 = vand.u32 %v1723, 4294901760
    %v2198 = vsub.f32 %v1723, %v2197
    %v2199 = vand.u32 %v2198, 4294901760
    %2200 = vmatpush1.msra.mxu0 %v2199
    %2201 = vmatprep.subr.mxu0 0.0
    %v2202 = vand.u32 %v1724, 4294901760
    %v2203 = vsub.f32 %v1724, %v2202
    %v2204 = vand.u32 %v2203, 4294901760
    %2205 = vmatpush1.msra.mxu0 %v2204
    %2206 = vmatprep.subr.mxu0 0.0
    %v2207 = vand.u32 %v1725, 4294901760
    %v2208 = vsub.f32 %v1725, %v2207
    %v2209 = vand.u32 %v2208, 4294901760
    %2210 = vmatpush1.msra.mxu0 %v2209
    %2211 = vmatprep.subr.mxu0 0.0
    %v2212 = vand.u32 %v1726, 4294901760
    %v2213 = vsub.f32 %v1726, %v2212
    %v2214 = vand.u32 %v2213, 4294901760
    %2215 = vmatpush1.msra.mxu0 %v2214
    %2216 = vmatprep.subr.mxu0 0.0
    %v2217 = vand.u32 %v1727, 4294901760
    %v2218 = vsub.f32 %v1727, %v2217
    %v2219 = vand.u32 %v2218, 4294901760
    %2220 = vmatpush1.msra.mxu0 %v2219
    %2221 = vmatprep.subr.mxu0 0.0
    %v2222 = vand.u32 %v1728, 4294901760
    %v2223 = vsub.f32 %v1728, %v2222
    %v2224 = vand.u32 %v2223, 4294901760
    %2225 = vmatpush1.msra.mxu0 %v2224
    %2226 = vmatprep.subr.mxu0 0.0
    %v2227 = vand.u32 %v1729, 4294901760
    %v2228 = vsub.f32 %v1729, %v2227
    %v2229 = vand.u32 %v2228, 4294901760
    %2230 = vmatpush1.msra.mxu0 %v2229
    %2231 = vmatprep.subr.mxu0 0.0
    %v2232 = vand.u32 %v1730, 4294901760
    %v2233 = vsub.f32 %v1730, %v2232
    %v2234 = vand.u32 %v2233, 4294901760
    %2235 = vmatpush1.msra.mxu0 %v2234
    %2236 = vmatprep.subr.mxu0 0.0
    %v2237 = vand.u32 %v1731, 4294901760
    %v2238 = vsub.f32 %v1731, %v2237
    %v2239 = vand.u32 %v2238, 4294901760
    %2240 = vmatpush1.msra.mxu0 %v2239
    %2241 = vmatprep.subr.mxu0 0.0
    %v2242 = vand.u32 %v1732, 4294901760
    %v2243 = vsub.f32 %v1732, %v2242
    %v2244 = vand.u32 %v2243, 4294901760
    %2245 = vmatpush1.msra.mxu0 %v2244
    %2246 = vmatprep.subr.mxu0 0.0
    %v2247 = vand.u32 %v1733, 4294901760
    %v2248 = vsub.f32 %v1733, %v2247
    %v2249 = vand.u32 %v2248, 4294901760
    %2250 = vmatpush1.msra.mxu0 %v2249
    %2251 = vmatprep.subr.mxu0 0.0
    %2252 = vmatpush1.msra.mxu0 0.0
    %2253 = vmatprep.subr.mxu0 0.0
    %2254 = vmatpush1.msra.mxu0 0.0
    %2255 = vmatprep.subr.mxu0 0.0
    %2256 = vmatpush1.msra.mxu0 0.0
    %2257 = vmatprep.subr.mxu0 0.0
    %2258 = vmatpush1.msra.mxu0 0.0
    %2259 = vmatprep.subr.mxu0 0.0
    %2260 = vmatpush1.msra.mxu0 0.0
    %2261 = vmatprep.subr.mxu0 0.0
    %2262 = vmatpush1.msra.mxu0 0.0
    %2263 = vmatprep.subr.mxu0 0.0
    %2264 = vmatpush1.msra.mxu0 0.0
    %2265 = vmatprep.subr.mxu0 0.0
    %2266 = vmatpush1.msra.mxu0 0.0
    %2267 = vmatprep.subr.mxu0 0.0
    %2268 = vmatpush1.msra.mxu0 0.0
    %2269 = vmatprep.subr.mxu0 0.0
    %2270 = vmatpush1.msra.mxu0 0.0
    %2271 = vmatprep.subr.mxu0 0.0
    %2272 = vmatpush1.msra.mxu0 0.0
    %2273 = vmatprep.subr.mxu0 0.0
    %2274 = vmatpush1.msra.mxu0 0.0
    %2275 = vmatprep.subr.mxu0 0.0
    %2276 = vmatpush1.msra.mxu0 0.0
    %2277 = vmatprep.subr.mxu0 0.0
    %2278 = vmatpush1.msra.mxu0 0.0
    %2279 = vmatprep.subr.mxu0 0.0
    %2280 = vmatpush1.msra.mxu0 0.0
    %2281 = vmatprep.subr.mxu0 0.0
    %2282 = vmatpush1.msra.mxu0 0.0
    %2283 = vmatprep.mubr.f32.mxu0 0.0
    %v2284 = vand.u32 %v1715, 4294901760
    %2285 = vmatmul.mubr.f32.gmra.mrb[0].mxu0 %v2284
    %v2286 = vpop.f32.mrb[0].mxu0
    %v2287 = vadd.f32 %v2168, %v2286
    %v2288 = vpop.f32.mrb[0].mxu0
    %2289 = vdwg.mxu0
    %2290 = vmatprep.subr.mxu0 0.0
    %v2291 = vand.u32 %v1718, 4294901760
    %2292 = vmatpush1.msra.mxu0 %v2291
    %2293 = vmatprep.subr.mxu0 0.0
    %v2294 = vand.u32 %v1719, 4294901760
    %2295 = vmatpush1.msra.mxu0 %v2294
    %2296 = vmatprep.subr.mxu0 0.0
    %v2297 = vand.u32 %v1720, 4294901760
    %2298 = vmatpush1.msra.mxu0 %v2297
    %2299 = vmatprep.subr.mxu0 0.0
    %v2300 = vand.u32 %v1721, 4294901760
    %2301 = vmatpush1.msra.mxu0 %v2300
    %2302 = vmatprep.subr.mxu0 0.0
    %v2303 = vand.u32 %v1722, 4294901760
    %2304 = vmatpush1.msra.mxu0 %v2303
    %2305 = vmatprep.subr.mxu0 0.0
    %v2306 = vand.u32 %v1723, 4294901760
    %2307 = vmatpush1.msra.mxu0 %v2306
    %2308 = vmatprep.subr.mxu0 0.0
    %v2309 = vand.u32 %v1724, 4294901760
    %2310 = vmatpush1.msra.mxu0 %v2309
    %2311 = vmatprep.subr.mxu0 0.0
    %v2312 = vand.u32 %v1725, 4294901760
    %2313 = vmatpush1.msra.mxu0 %v2312
    %2314 = vmatprep.subr.mxu0 0.0
    %v2315 = vand.u32 %v1726, 4294901760
    %2316 = vmatpush1.msra.mxu0 %v2315
    %2317 = vmatprep.subr.mxu0 0.0
    %v2318 = vand.u32 %v1727, 4294901760
    %2319 = vmatpush1.msra.mxu0 %v2318
    %2320 = vmatprep.subr.mxu0 0.0
    %v2321 = vand.u32 %v1728, 4294901760
    %2322 = vmatpush1.msra.mxu0 %v2321
    %2323 = vmatprep.subr.mxu0 0.0
    %v2324 = vand.u32 %v1729, 4294901760
    %2325 = vmatpush1.msra.mxu0 %v2324
    %2326 = vmatprep.subr.mxu0 0.0
    %v2327 = vand.u32 %v1730, 4294901760
    %2328 = vmatpush1.msra.mxu0 %v2327
    %2329 = vmatprep.subr.mxu0 0.0
    %v2330 = vand.u32 %v1731, 4294901760
    %2331 = vmatpush1.msra.mxu0 %v2330
    %2332 = vmatprep.subr.mxu0 0.0
    %v2333 = vand.u32 %v1732, 4294901760
    %2334 = vmatpush1.msra.mxu0 %v2333
    %2335 = vmatprep.subr.mxu0 0.0
    %v2336 = vand.u32 %v1733, 4294901760
    %2337 = vmatpush1.msra.mxu0 %v2336
    %2338 = vmatprep.subr.mxu0 0.0
    %2339 = vmatpush1.msra.mxu0 0.0
    %2340 = vmatprep.subr.mxu0 0.0
    %2341 = vmatpush1.msra.mxu0 0.0
    %2342 = vmatprep.subr.mxu0 0.0
    %2343 = vmatpush1.msra.mxu0 0.0
    %2344 = vmatprep.subr.mxu0 0.0
    %2345 = vmatpush1.msra.mxu0 0.0
    %2346 = vmatprep.subr.mxu0 0.0
    %2347 = vmatpush1.msra.mxu0 0.0
    %2348 = vmatprep.subr.mxu0 0.0
    %2349 = vmatpush1.msra.mxu0 0.0
    %2350 = vmatprep.subr.mxu0 0.0
    %2351 = vmatpush1.msra.mxu0 0.0
    %2352 = vmatprep.subr.mxu0 0.0
    %2353 = vmatpush1.msra.mxu0 0.0
    %2354 = vmatprep.subr.mxu0 0.0
    %2355 = vmatpush1.msra.mxu0 0.0
    %2356 = vmatprep.subr.mxu0 0.0
    %2357 = vmatpush1.msra.mxu0 0.0
    %2358 = vmatprep.subr.mxu0 0.0
    %2359 = vmatpush1.msra.mxu0 0.0
    %2360 = vmatprep.subr.mxu0 0.0
    %2361 = vmatpush1.msra.mxu0 0.0
    %2362 = vmatprep.subr.mxu0 0.0
    %2363 = vmatpush1.msra.mxu0 0.0
    %2364 = vmatprep.subr.mxu0 0.0
    %2365 = vmatpush1.msra.mxu0 0.0
    %2366 = vmatprep.subr.mxu0 0.0
    %2367 = vmatpush1.msra.mxu0 0.0
    %2368 = vmatprep.subr.mxu0 0.0
    %2369 = vmatpush1.msra.mxu0 0.0
    %2370 = vmatprep.mubr.f32.mxu0 0.0
    %v2371 = vand.u32 %v1715, 4294901760
    %2372 = vmatmul.mubr.f32.gmra.mrb[0].mxu0 %v2371
    %v2373 = vpop.f32.mrb[0].mxu0
    %v2374 = vadd.f32 %v2287, %v2373
    %v2375 = vpop.f32.mrb[0].mxu0
    %2376 = vdwg.mxu0
    %v2377 = vld [vmem:[%s1] sm:$0x3]
    %v2378 = vld [vmem:[%s10] sm:$0xff]
    %v2379 = vld [vmem:[%s10 + $0x8] sm:$0xff]
    %v2380 = vld [vmem:[%s10 + $0x10] sm:$0xff]
    %v2381 = vld [vmem:[%s10 + $0x18] sm:$0xff]
    %v2382 = vld [vmem:[%s10 + $0x20] sm:$0xff]
    %v2383 = vld [vmem:[%s10 + $0x28] sm:$0xff]
    %v2384 = vld [vmem:[%s10 + $0x30] sm:$0xff]
    %v2385 = vld [vmem:[%s10 + $0x38] sm:$0xff]
    %s2386 = sld [smem:[#allocation2 + $0x1]]
    %v2387 = vstv %s2386
    %vm2388 = vcmask 523264
    %v2390 = vsel %vm2388, %v2377, 0
    %2392 = vmatprep.subr.mxu0 0.0
    %v2393 = vand.u32 %v2378, 4294901760
    %2394 = vmatpush1.msra.mxu0 %v2393
    %2395 = vmatprep.subr.mxu0 0.0
    %v2396 = vand.u32 %v2379, 4294901760
    %2397 = vmatpush1.msra.mxu0 %v2396
    %2398 = vmatprep.subr.mxu0 0.0
    %v2399 = vand.u32 %v2380, 4294901760
    %2400 = vmatpush1.msra.mxu0 %v2399
    %2401 = vmatprep.subr.mxu0 0.0
    %v2402 = vand.u32 %v2381, 4294901760
    %2403 = vmatpush1.msra.mxu0 %v2402
    %2404 = vmatprep.subr.mxu0 0.0
    %v2405 = vand.u32 %v2382, 4294901760
    %2406 = vmatpush1.msra.mxu0 %v2405
    %2407 = vmatprep.subr.mxu0 0.0
    %v2408 = vand.u32 %v2383, 4294901760
    %2409 = vmatpush1.msra.mxu0 %v2408
    %2410 = vmatprep.subr.mxu0 0.0
    %v2411 = vand.u32 %v2384, 4294901760
    %2412 = vmatpush1.msra.mxu0 %v2411
    %2413 = vmatprep.subr.mxu0 0.0
    %v2414 = vand.u32 %v2385, 4294901760
    %2415 = vmatpush1.msra.mxu0 %v2414
    %2416 = vmatprep.subr.mxu0 0.0
    %2417 = vmatpush1.msra.mxu0 0.0
    %2418 = vmatprep.subr.mxu0 0.0
    %2419 = vmatpush1.msra.mxu0 0.0
    %2420 = vmatprep.subr.mxu0 0.0
    %2421 = vmatpush1.msra.mxu0 0.0
    %2422 = vmatprep.subr.mxu0 0.0
    %2423 = vmatpush1.msra.mxu0 0.0
    %2424 = vmatprep.subr.mxu0 0.0
    %2425 = vmatpush1.msra.mxu0 0.0
    %2426 = vmatprep.subr.mxu0 0.0
    %2427 = vmatpush1.msra.mxu0 0.0
    %2428 = vmatprep.subr.mxu0 0.0
    %2429 = vmatpush1.msra.mxu0 0.0
    %2430 = vmatprep.subr.mxu0 0.0
    %2431 = vmatpush1.msra.mxu0 0.0
    %2432 = vmatprep.subr.mxu0 0.0
    %2433 = vmatpush1.msra.mxu0 0.0
    %2434 = vmatprep.subr.mxu0 0.0
    %2435 = vmatpush1.msra.mxu0 0.0
    %2436 = vmatprep.subr.mxu0 0.0
    %2437 = vmatpush1.msra.mxu0 0.0
    %2438 = vmatprep.subr.mxu0 0.0
    %2439 = vmatpush1.msra.mxu0 0.0
    %2440 = vmatprep.subr.mxu0 0.0
    %2441 = vmatpush1.msra.mxu0 0.0
    %2442 = vmatprep.subr.mxu0 0.0
    %2443 = vmatpush1.msra.mxu0 0.0
    %2444 = vmatprep.subr.mxu0 0.0
    %2445 = vmatpush1.msra.mxu0 0.0
    %2446 = vmatprep.subr.mxu0 0.0
    %2447 = vmatpush1.msra.mxu0 0.0
    %2448 = vmatprep.subr.mxu0 0.0
    %2449 = vmatpush1.msra.mxu0 0.0
    %2450 = vmatprep.subr.mxu0 0.0
    %2451 = vmatpush1.msra.mxu0 0.0
    %2452 = vmatprep.subr.mxu0 0.0
    %2453 = vmatpush1.msra.mxu0 0.0
    %2454 = vmatprep.subr.mxu0 0.0
    %2455 = vmatpush1.msra.mxu0 0.0
    %2456 = vmatprep.subr.mxu0 0.0
    %2457 = vmatpush1.msra.mxu0 0.0
    %2458 = vmatprep.subr.mxu0 0.0
    %2459 = vmatpush1.msra.mxu0 0.0
    %2460 = vmatprep.subr.mxu0 0.0
    %2461 = vmatpush1.msra.mxu0 0.0
    %2462 = vmatprep.subr.mxu0 0.0
    %2463 = vmatpush1.msra.mxu0 0.0
    %2464 = vmatprep.mubr.f32.mxu0 0.0
    %v2465 = vand.u32 %v2390, 4294901760
    %v2466 = vsub.f32 %v2390, %v2465
    %v2467 = vand.u32 %v2466, 4294901760
    %v2468 = vsub.f32 %v2466, %v2467
    %v2469 = vand.u32 %v2468, 4294901760
    %2470 = vmatmul.mubr.f32.gmra.mrb[0].mxu0 %v2469
    %v2471 = vpop.f32.mrb[0].mxu0
    %v2472 = vadd.f32 %v2387, %v2471
    %v2473 = vpop.f32.mrb[0].mxu0
    %2474 = vdwg.mxu0
    %2475 = vmatprep.subr.mxu0 0.0
    %v2476 = vand.u32 %v2378, 4294901760
    %v2477 = vsub.f32 %v2378, %v2476
    %v2478 = vand.u32 %v2477, 4294901760
    %v2479 = vsub.f32 %v2477, %v2478
    %v2480 = vand.u32 %v2479, 4294901760
    %2481 = vmatpush1.msra.mxu0 %v2480
    %2482 = vmatprep.subr.mxu0 0.0
    %v2483 = vand.u32 %v2379, 4294901760
    %v2484 = vsub.f32 %v2379, %v2483
    %v2485 = vand.u32 %v2484, 4294901760
    %v2486 = vsub.f32 %v2484, %v2485
    %v2487 = vand.u32 %v2486, 4294901760
    %2488 = vmatpush1.msra.mxu0 %v2487
    %2489 = vmatprep.subr.mxu0 0.0
    %v2490 = vand.u32 %v2380, 4294901760
    %v2491 = vsub.f32 %v2380, %v2490
    %v2492 = vand.u32 %v2491, 4294901760
    %v2493 = vsub.f32 %v2491, %v2492
    %v2494 = vand.u32 %v2493, 4294901760
    %2495 = vmatpush1.msra.mxu0 %v2494
    %2496 = vmatprep.subr.mxu0 0.0
    %v2497 = vand.u32 %v2381, 4294901760
    %v2498 = vsub.f32 %v2381, %v2497
    %v2499 = vand.u32 %v2498, 4294901760
    %v2500 = vsub.f32 %v2498, %v2499
    %v2501 = vand.u32 %v2500, 4294901760
    %2502 = vmatpush1.msra.mxu0 %v2501
    %2503 = vmatprep.subr.mxu0 0.0
    %v2504 = vand.u32 %v2382, 4294901760
    %v2505 = vsub.f32 %v2382, %v2504
    %v2506 = vand.u32 %v2505, 4294901760
    %v2507 = vsub.f32 %v2505, %v2506
    %v2508 = vand.u32 %v2507, 4294901760
    %2509 = vmatpush1.msra.mxu0 %v2508
    %2510 = vmatprep.subr.mxu0 0.0
    %v2511 = vand.u32 %v2383, 4294901760
    %v2512 = vsub.f32 %v2383, %v2511
    %v2513 = vand.u32 %v2512, 4294901760
    %v2514 = vsub.f32 %v2512, %v2513
    %v2515 = vand.u32 %v2514, 4294901760
    %2516 = vmatpush1.msra.mxu0 %v2515
    %2517 = vmatprep.subr.mxu0 0.0
    %v2518 = vand.u32 %v2384, 4294901760
    %v2519 = vsub.f32 %v2384, %v2518
    %v2520 = vand.u32 %v2519, 4294901760
    %v2521 = vsub.f32 %v2519, %v2520
    %v2522 = vand.u32 %v2521, 4294901760
    %2523 = vmatpush1.msra.mxu0 %v2522
    %2524 = vmatprep.subr.mxu0 0.0
    %v2525 = vand.u32 %v2385, 4294901760
    %v2526 = vsub.f32 %v2385, %v2525
    %v2527 = vand.u32 %v2526, 4294901760
    %v2528 = vsub.f32 %v2526, %v2527
    %v2529 = vand.u32 %v2528, 4294901760
    %2530 = vmatpush1.msra.mxu0 %v2529
    %2531 = vmatprep.subr.mxu0 0.0
    %2532 = vmatpush1.msra.mxu0 0.0
    %2533 = vmatprep.subr.mxu0 0.0
    %2534 = vmatpush1.msra.mxu0 0.0
    %2535 = vmatprep.subr.mxu0 0.0
    %2536 = vmatpush1.msra.mxu0 0.0
    %2537 = vmatprep.subr.mxu0 0.0
    %2538 = vmatpush1.msra.mxu0 0.0
    %2539 = vmatprep.subr.mxu0 0.0
    %2540 = vmatpush1.msra.mxu0 0.0
    %2541 = vmatprep.subr.mxu0 0.0
    %2542 = vmatpush1.msra.mxu0 0.0
    %2543 = vmatprep.subr.mxu0 0.0
    %2544 = vmatpush1.msra.mxu0 0.0
    %2545 = vmatprep.subr.mxu0 0.0
    %2546 = vmatpush1.msra.mxu0 0.0
    %2547 = vmatprep.subr.mxu0 0.0
    %2548 = vmatpush1.msra.mxu0 0.0
    %2549 = vmatprep.subr.mxu0 0.0
    %2550 = vmatpush1.msra.mxu0 0.0
    %2551 = vmatprep.subr.mxu0 0.0
    %2552 = vmatpush1.msra.mxu0 0.0
    %2553 = vmatprep.subr.mxu0 0.0
    %2554 = vmatpush1.msra.mxu0 0.0
    %2555 = vmatprep.subr.mxu0 0.0
    %2556 = vmatpush1.msra.mxu0 0.0
    %2557 = vmatprep.subr.mxu0 0.0
    %2558 = vmatpush1.msra.mxu0 0.0
    %2559 = vmatprep.subr.mxu0 0.0
    %2560 = vmatpush1.msra.mxu0 0.0
    %2561 = vmatprep.subr.mxu0 0.0
    %2562 = vmatpush1.msra.mxu0 0.0
    %2563 = vmatprep.subr.mxu0 0.0
    %2564 = vmatpush1.msra.mxu0 0.0
    %2565 = vmatprep.subr.mxu0 0.0
    %2566 = vmatpush1.msra.mxu0 0.0
    %2567 = vmatprep.subr.mxu0 0.0
    %2568 = vmatpush1.msra.mxu0 0.0
    %2569 = vmatprep.subr.mxu0 0.0
    %2570 = vmatpush1.msra.mxu0 0.0
    %2571 = vmatprep.subr.mxu0 0.0
    %2572 = vmatpush1.msra.mxu0 0.0
    %2573 = vmatprep.subr.mxu0 0.0
    %2574 = vmatpush1.msra.mxu0 0.0
    %2575 = vmatprep.subr.mxu0 0.0
    %2576 = vmatpush1.msra.mxu0 0.0
    %2577 = vmatprep.subr.mxu0 0.0
    %2578 = vmatpush1.msra.mxu0 0.0
    %2579 = vmatprep.mubr.f32.mxu0 0.0
    %v2580 = vand.u32 %v2390, 4294901760
    %2581 = vmatmul.mubr.f32.gmra.mrb[0].mxu0 %v2580
    %v2582 = vpop.f32.mrb[0].mxu0
    %v2583 = vadd.f32 %v2472, %v2582
    %v2584 = vpop.f32.mrb[0].mxu0
    %2585 = vdwg.mxu0
    %2586 = vmatprep.subr.mxu0 0.0
    %v2587 = vand.u32 %v2378, 4294901760
    %v2588 = vsub.f32 %v2378, %v2587
    %2589 = vmatpush1.msra.mxu0 %v2588
    %2590 = vmatprep.subr.mxu0 0.0
    %v2591 = vand.u32 %v2379, 4294901760
    %v2592 = vsub.f32 %v2379, %v2591
    %2593 = vmatpush1.msra.mxu0 %v2592
    %2594 = vmatprep.subr.mxu0 0.0
    %v2595 = vand.u32 %v2380, 4294901760
    %v2596 = vsub.f32 %v2380, %v2595
    %2597 = vmatpush1.msra.mxu0 %v2596
    %2598 = vmatprep.subr.mxu0 0.0
    %v2599 = vand.u32 %v2381, 4294901760
    %v2600 = vsub.f32 %v2381, %v2599
    %2601 = vmatpush1.msra.mxu0 %v2600
    %2602 = vmatprep.subr.mxu0 0.0
    %v2603 = vand.u32 %v2382, 4294901760
    %v2604 = vsub.f32 %v2382, %v2603
    %2605 = vmatpush1.msra.mxu0 %v2604
    %2606 = vmatprep.subr.mxu0 0.0
    %v2607 = vand.u32 %v2383, 4294901760
    %v2608 = vsub.f32 %v2383, %v2607
    %2609 = vmatpush1.msra.mxu0 %v2608
    %2610 = vmatprep.subr.mxu0 0.0
    %v2611 = vand.u32 %v2384, 4294901760
    %v2612 = vsub.f32 %v2384, %v2611
    %2613 = vmatpush1.msra.mxu0 %v2612
    %2614 = vmatprep.subr.mxu0 0.0
    %v2615 = vand.u32 %v2385, 4294901760
    %v2616 = vsub.f32 %v2385, %v2615
    %2617 = vmatpush1.msra.mxu0 %v2616
    %2618 = vmatprep.subr.mxu0 0.0
    %2619 = vmatpush1.msra.mxu0 0.0
    %2620 = vmatprep.subr.mxu0 0.0
    %2621 = vmatpush1.msra.mxu0 0.0
    %2622 = vmatprep.subr.mxu0 0.0
    %2623 = vmatpush1.msra.mxu0 0.0
    %2624 = vmatprep.subr.mxu0 0.0
    %2625 = vmatpush1.msra.mxu0 0.0
    %2626 = vmatprep.subr.mxu0 0.0
    %2627 = vmatpush1.msra.mxu0 0.0
    %2628 = vmatprep.subr.mxu0 0.0
    %2629 = vmatpush1.msra.mxu0 0.0
    %2630 = vmatprep.subr.mxu0 0.0
    %2631 = vmatpush1.msra.mxu0 0.0
    %2632 = vmatprep.subr.mxu0 0.0
    %2633 = vmatpush1.msra.mxu0 0.0
    %2634 = vmatprep.subr.mxu0 0.0
    %2635 = vmatpush1.msra.mxu0 0.0
    %2636 = vmatprep.subr.mxu0 0.0
    %2637 = vmatpush1.msra.mxu0 0.0
    %2638 = vmatprep.subr.mxu0 0.0
    %2639 = vmatpush1.msra.mxu0 0.0
    %2640 = vmatprep.subr.mxu0 0.0
    %2641 = vmatpush1.msra.mxu0 0.0
    %2642 = vmatprep.subr.mxu0 0.0
    %2643 = vmatpush1.msra.mxu0 0.0
    %2644 = vmatprep.subr.mxu0 0.0
    %2645 = vmatpush1.msra.mxu0 0.0
    %2646 = vmatprep.subr.mxu0 0.0
    %2647 = vmatpush1.msra.mxu0 0.0
    %2648 = vmatprep.subr.mxu0 0.0
    %2649 = vmatpush1.msra.mxu0 0.0
    %2650 = vmatprep.subr.mxu0 0.0
    %2651 = vmatpush1.msra.mxu0 0.0
    %2652 = vmatprep.subr.mxu0 0.0
    %2653 = vmatpush1.msra.mxu0 0.0
    %2654 = vmatprep.subr.mxu0 0.0
    %2655 = vmatpush1.msra.mxu0 0.0
    %2656 = vmatprep.subr.mxu0 0.0
    %2657 = vmatpush1.msra.mxu0 0.0
    %2658 = vmatprep.subr.mxu0 0.0
    %2659 = vmatpush1.msra.mxu0 0.0
    %2660 = vmatprep.subr.mxu0 0.0
    %2661 = vmatpush1.msra.mxu0 0.0
    %2662 = vmatprep.subr.mxu0 0.0
    %2663 = vmatpush1.msra.mxu0 0.0
    %2664 = vmatprep.subr.mxu0 0.0
    %2665 = vmatpush1.msra.mxu0 0.0
    %2666 = vmatprep.mubr.f32.mxu0 0.0
    %v2667 = vand.u32 %v2390, 4294901760
    %v2668 = vsub.f32 %v2390, %v2667
    %2669 = vmatmul.mubr.f32.gmra.mrb[0].mxu0 %v2668
    %v2670 = vpop.f32.mrb[0].mxu0
    %v2671 = vadd.f32 %v2583, %v2670
    %v2672 = vpop.f32.mrb[0].mxu0
    %2673 = vdwg.mxu0
    %2674 = vmatprep.subr.mxu0 0.0
    %v2675 = vand.u32 %v2378, 4294901760
    %2676 = vmatpush1.msra.mxu0 %v2675
    %2677 = vmatprep.subr.mxu0 0.0
    %v2678 = vand.u32 %v2379, 4294901760
    %2679 = vmatpush1.msra.mxu0 %v2678
    %2680 = vmatprep.subr.mxu0 0.0
    %v2681 = vand.u32 %v2380, 4294901760
    %2682 = vmatpush1.msra.mxu0 %v2681
    %2683 = vmatprep.subr.mxu0 0.0
    %v2684 = vand.u32 %v2381, 4294901760
    %2685 = vmatpush1.msra.mxu0 %v2684
    %2686 = vmatprep.subr.mxu0 0.0
    %v2687 = vand.u32 %v2382, 4294901760
    %2688 = vmatpush1.msra.mxu0 %v2687
    %2689 = vmatprep.subr.mxu0 0.0
    %v2690 = vand.u32 %v2383, 4294901760
    %2691 = vmatpush1.msra.mxu0 %v2690
    %2692 = vmatprep.subr.mxu0 0.0
    %v2693 = vand.u32 %v2384, 4294901760
    %2694 = vmatpush1.msra.mxu0 %v2693
    %2695 = vmatprep.subr.mxu0 0.0
    %v2696 = vand.u32 %v2385, 4294901760
    %2697 = vmatpush1.msra.mxu0 %v2696
    %2698 = vmatprep.subr.mxu0 0.0
    %2699 = vmatpush1.msra.mxu0 0.0
    %2700 = vmatprep.subr.mxu0 0.0
    %2701 = vmatpush1.msra.mxu0 0.0
    %2702 = vmatprep.subr.mxu0 0.0
    %2703 = vmatpush1.msra.mxu0 0.0
    %2704 = vmatprep.subr.mxu0 0.0
    %2705 = vmatpush1.msra.mxu0 0.0
    %2706 = vmatprep.subr.mxu0 0.0
    %2707 = vmatpush1.msra.mxu0 0.0
    %2708 = vmatprep.subr.mxu0 0.0
    %2709 = vmatpush1.msra.mxu0 0.0
    %2710 = vmatprep.subr.mxu0 0.0
    %2711 = vmatpush1.msra.mxu0 0.0
    %2712 = vmatprep.subr.mxu0 0.0
    %2713 = vmatpush1.msra.mxu0 0.0
    %2714 = vmatprep.subr.mxu0 0.0
    %2715 = vmatpush1.msra.mxu0 0.0
    %2716 = vmatprep.subr.mxu0 0.0
    %2717 = vmatpush1.msra.mxu0 0.0
    %2718 = vmatprep.subr.mxu0 0.0
    %2719 = vmatpush1.msra.mxu0 0.0
    %2720 = vmatprep.subr.mxu0 0.0
    %2721 = vmatpush1.msra.mxu0 0.0
    %2722 = vmatprep.subr.mxu0 0.0
    %2723 = vmatpush1.msra.mxu0 0.0
    %2724 = vmatprep.subr.mxu0 0.0
    %2725 = vmatpush1.msra.mxu0 0.0
    %2726 = vmatprep.subr.mxu0 0.0
    %2727 = vmatpush1.msra.mxu0 0.0
    %2728 = vmatprep.subr.mxu0 0.0
    %2729 = vmatpush1.msra.mxu0 0.0
    %2730 = vmatprep.subr.mxu0 0.0
    %2731 = vmatpush1.msra.mxu0 0.0
    %2732 = vmatprep.subr.mxu0 0.0
    %2733 = vmatpush1.msra.mxu0 0.0
    %2734 = vmatprep.subr.mxu0 0.0
    %2735 = vmatpush1.msra.mxu0 0.0
    %2736 = vmatprep.subr.mxu0 0.0
    %2737 = vmatpush1.msra.mxu0 0.0
    %2738 = vmatprep.subr.mxu0 0.0
    %2739 = vmatpush1.msra.mxu0 0.0
    %2740 = vmatprep.subr.mxu0 0.0
    %2741 = vmatpush1.msra.mxu0 0.0
    %2742 = vmatprep.subr.mxu0 0.0
    %2743 = vmatpush1.msra.mxu0 0.0
    %2744 = vmatprep.subr.mxu0 0.0
    %2745 = vmatpush1.msra.mxu0 0.0
    %2746 = vmatprep.mubr.f32.mxu0 0.0
    %v2747 = vand.u32 %v2390, 4294901760
    %v2748 = vsub.f32 %v2390, %v2747
    %v2749 = vand.u32 %v2748, 4294901760
    %2750 = vmatmul.mubr.f32.gmra.mrb[0].mxu0 %v2749
    %v2751 = vpop.f32.mrb[0].mxu0
    %v2752 = vadd.f32 %v2671, %v2751
    %v2753 = vpop.f32.mrb[0].mxu0
    %2754 = vdwg.mxu0
    %2755 = vmatprep.subr.mxu0 0.0
    %v2756 = vand.u32 %v2378, 4294901760
    %v2757 = vsub.f32 %v2378, %v2756
    %v2758 = vand.u32 %v2757, 4294901760
    %2759 = vmatpush1.msra.mxu0 %v2758
    %2760 = vmatprep.subr.mxu0 0.0
    %v2761 = vand.u32 %v2379, 4294901760
    %v2762 = vsub.f32 %v2379, %v2761
    %v2763 = vand.u32 %v2762, 4294901760
    %2764 = vmatpush1.msra.mxu0 %v2763
    %2765 = vmatprep.subr.mxu0 0.0
    %v2766 = vand.u32 %v2380, 4294901760
    %v2767 = vsub.f32 %v2380, %v2766
    %v2768 = vand.u32 %v2767, 4294901760
    %2769 = vmatpush1.msra.mxu0 %v2768
    %2770 = vmatprep.subr.mxu0 0.0
    %v2771 = vand.u32 %v2381, 4294901760
    %v2772 = vsub.f32 %v2381, %v2771
    %v2773 = vand.u32 %v2772, 4294901760
    %2774 = vmatpush1.msra.mxu0 %v2773
    %2775 = vmatprep.subr.mxu0 0.0
    %v2776 = vand.u32 %v2382, 4294901760
    %v2777 = vsub.f32 %v2382, %v2776
    %v2778 = vand.u32 %v2777, 4294901760
    %2779 = vmatpush1.msra.mxu0 %v2778
    %2780 = vmatprep.subr.mxu0 0.0
    %v2781 = vand.u32 %v2383, 4294901760
    %v2782 = vsub.f32 %v2383, %v2781
    %v2783 = vand.u32 %v2782, 4294901760
    %2784 = vmatpush1.msra.mxu0 %v2783
    %2785 = vmatprep.subr.mxu0 0.0
    %v2786 = vand.u32 %v2384, 4294901760
    %v2787 = vsub.f32 %v2384, %v2786
    %v2788 = vand.u32 %v2787, 4294901760
    %2789 = vmatpush1.msra.mxu0 %v2788
    %2790 = vmatprep.subr.mxu0 0.0
    %v2791 = vand.u32 %v2385, 4294901760
    %v2792 = vsub.f32 %v2385, %v2791
    %v2793 = vand.u32 %v2792, 4294901760
    %2794 = vmatpush1.msra.mxu0 %v2793
    %2795 = vmatprep.subr.mxu0 0.0
    %2796 = vmatpush1.msra.mxu0 0.0
    %2797 = vmatprep.subr.mxu0 0.0
    %2798 = vmatpush1.msra.mxu0 0.0
    %2799 = vmatprep.subr.mxu0 0.0
    %2800 = vmatpush1.msra.mxu0 0.0
    %2801 = vmatprep.subr.mxu0 0.0
    %2802 = vmatpush1.msra.mxu0 0.0
    %2803 = vmatprep.subr.mxu0 0.0
    %2804 = vmatpush1.msra.mxu0 0.0
    %2805 = vmatprep.subr.mxu0 0.0
    %2806 = vmatpush1.msra.mxu0 0.0
    %2807 = vmatprep.subr.mxu0 0.0
    %2808 = vmatpush1.msra.mxu0 0.0
    %2809 = vmatprep.subr.mxu0 0.0
    %2810 = vmatpush1.msra.mxu0 0.0
    %2811 = vmatprep.subr.mxu0 0.0
    %2812 = vmatpush1.msra.mxu0 0.0
    %2813 = vmatprep.subr.mxu0 0.0
    %2814 = vmatpush1.msra.mxu0 0.0
    %2815 = vmatprep.subr.mxu0 0.0
    %2816 = vmatpush1.msra.mxu0 0.0
    %2817 = vmatprep.subr.mxu0 0.0
    %2818 = vmatpush1.msra.mxu0 0.0
    %2819 = vmatprep.subr.mxu0 0.0
    %2820 = vmatpush1.msra.mxu0 0.0
    %2821 = vmatprep.subr.mxu0 0.0
    %2822 = vmatpush1.msra.mxu0 0.0
    %2823 = vmatprep.subr.mxu0 0.0
    %2824 = vmatpush1.msra.mxu0 0.0
    %2825 = vmatprep.subr.mxu0 0.0
    %2826 = vmatpush1.msra.mxu0 0.0
    %2827 = vmatprep.subr.mxu0 0.0
    %2828 = vmatpush1.msra.mxu0 0.0
    %2829 = vmatprep.subr.mxu0 0.0
    %2830 = vmatpush1.msra.mxu0 0.0
    %2831 = vmatprep.subr.mxu0 0.0
    %2832 = vmatpush1.msra.mxu0 0.0
    %2833 = vmatprep.subr.mxu0 0.0
    %2834 = vmatpush1.msra.mxu0 0.0
    %2835 = vmatprep.subr.mxu0 0.0
    %2836 = vmatpush1.msra.mxu0 0.0
    %2837 = vmatprep.subr.mxu0 0.0
    %2838 = vmatpush1.msra.mxu0 0.0
    %2839 = vmatprep.subr.mxu0 0.0
    %2840 = vmatpush1.msra.mxu0 0.0
    %2841 = vmatprep.subr.mxu0 0.0
    %2842 = vmatpush1.msra.mxu0 0.0
    %2843 = vmatprep.mubr.f32.mxu0 0.0
    %v2844 = vand.u32 %v2390, 4294901760
    %2845 = vmatmul.mubr.f32.gmra.mrb[0].mxu0 %v2844
    %v2846 = vpop.f32.mrb[0].mxu0
    %v2847 = vadd.f32 %v2752, %v2846
    %v2848 = vpop.f32.mrb[0].mxu0
    %2849 = vdwg.mxu0
    %2850 = vmatprep.subr.mxu0 0.0
    %v2851 = vand.u32 %v2378, 4294901760
    %2852 = vmatpush1.msra.mxu0 %v2851
    %2853 = vmatprep.subr.mxu0 0.0
    %v2854 = vand.u32 %v2379, 4294901760
    %2855 = vmatpush1.msra.mxu0 %v2854
    %2856 = vmatprep.subr.mxu0 0.0
    %v2857 = vand.u32 %v2380, 4294901760
    %2858 = vmatpush1.msra.mxu0 %v2857
    %2859 = vmatprep.subr.mxu0 0.0
    %v2860 = vand.u32 %v2381, 4294901760
    %2861 = vmatpush1.msra.mxu0 %v2860
    %2862 = vmatprep.subr.mxu0 0.0
    %v2863 = vand.u32 %v2382, 4294901760
    %2864 = vmatpush1.msra.mxu0 %v2863
    %2865 = vmatprep.subr.mxu0 0.0
    %v2866 = vand.u32 %v2383, 4294901760
    %2867 = vmatpush1.msra.mxu0 %v2866
    %2868 = vmatprep.subr.mxu0 0.0
    %v2869 = vand.u32 %v2384, 4294901760
    %2870 = vmatpush1.msra.mxu0 %v2869
    %2871 = vmatprep.subr.mxu0 0.0
    %v2872 = vand.u32 %v2385, 4294901760
    %2873 = vmatpush1.msra.mxu0 %v2872
    %2874 = vmatprep.subr.mxu0 0.0
    %2875 = vmatpush1.msra.mxu0 0.0
    %2876 = vmatprep.subr.mxu0 0.0
    %2877 = vmatpush1.msra.mxu0 0.0
    %2878 = vmatprep.subr.mxu0 0.0
    %2879 = vmatpush1.msra.mxu0 0.0
    %2880 = vmatprep.subr.mxu0 0.0
    %2881 = vmatpush1.msra.mxu0 0.0
    %2882 = vmatprep.subr.mxu0 0.0
    %2883 = vmatpush1.msra.mxu0 0.0
    %2884 = vmatprep.subr.mxu0 0.0
    %2885 = vmatpush1.msra.mxu0 0.0
    %2886 = vmatprep.subr.mxu0 0.0
    %2887 = vmatpush1.msra.mxu0 0.0
    %2888 = vmatprep.subr.mxu0 0.0
    %2889 = vmatpush1.msra.mxu0 0.0
    %2890 = vmatprep.subr.mxu0 0.0
    %2891 = vmatpush1.msra.mxu0 0.0
    %2892 = vmatprep.subr.mxu0 0.0
    %2893 = vmatpush1.msra.mxu0 0.0
    %2894 = vmatprep.subr.mxu0 0.0
    %2895 = vmatpush1.msra.mxu0 0.0
    %2896 = vmatprep.subr.mxu0 0.0
    %2897 = vmatpush1.msra.mxu0 0.0
    %2898 = vmatprep.subr.mxu0 0.0
    %2899 = vmatpush1.msra.mxu0 0.0
    %2900 = vmatprep.subr.mxu0 0.0
    %2901 = vmatpush1.msra.mxu0 0.0
    %2902 = vmatprep.subr.mxu0 0.0
    %2903 = vmatpush1.msra.mxu0 0.0
    %2904 = vmatprep.subr.mxu0 0.0
    %2905 = vmatpush1.msra.mxu0 0.0
    %2906 = vmatprep.subr.mxu0 0.0
    %2907 = vmatpush1.msra.mxu0 0.0
    %2908 = vmatprep.subr.mxu0 0.0
    %2909 = vmatpush1.msra.mxu0 0.0
    %2910 = vmatprep.subr.mxu0 0.0
    %2911 = vmatpush1.msra.mxu0 0.0
    %2912 = vmatprep.subr.mxu0 0.0
    %2913 = vmatpush1.msra.mxu0 0.0
    %2914 = vmatprep.subr.mxu0 0.0
    %2915 = vmatpush1.msra.mxu0 0.0
    %2916 = vmatprep.subr.mxu0 0.0
    %2917 = vmatpush1.msra.mxu0 0.0
    %2918 = vmatprep.subr.mxu0 0.0
    %2919 = vmatpush1.msra.mxu0 0.0
    %2920 = vmatprep.subr.mxu0 0.0
    %2921 = vmatpush1.msra.mxu0 0.0
    %2922 = vmatprep.mubr.f32.mxu0 0.0
    %v2923 = vand.u32 %v2390, 4294901760
    %2924 = vmatmul.mubr.f32.gmra.mrb[0].mxu0 %v2923
    %v2925 = vpop.f32.mrb[0].mxu0
    %v2926 = vadd.f32 %v2847, %v2925
    %v2927 = vpop.f32.mrb[0].mxu0
    %2928 = vdwg.mxu0
    %v2929 = vld [vmem:[%s11] sm:$0xff]
    %v2930 = vld [vmem:[%s11 + $0x8] sm:$0xff]
    %v2931 = vld [vmem:[%s2] sm:$0xff]
    %v2932 = vld [vmem:[%s2 + $0x8] sm:$0xff]
    %v2933 = vld [vmem:[%s2 + $0x10] sm:$0xff]
    %v2934 = vld [vmem:[%s2 + $0x18] sm:$0xff]
    %v2935 = vld [vmem:[%s2 + $0x20] sm:$0xff]
    %v2936 = vld [vmem:[%s2 + $0x28] sm:$0xff]
    %v2937 = vld [vmem:[%s2 + $0x30] sm:$0xff]
    %v2938 = vld [vmem:[%s2 + $0x38] sm:$0xff]
    %v2939 = vld [vmem:[%s12] sm:$0xff]
    %v2940 = vld [vmem:[%s12 + $0x8] sm:$0xff]
    %2942 = vset.pattern.permute.xlu0 0
    %2943 = vperm.xlu0 %2942, %v2939
    %v2944 = vpop.permute.xlu0 %2943
    %2947 = vset.pattern.permute.xlu0 0
    %2948 = vperm.xlu0 %2947, %v2940
    %v2949 = vpop.permute.xlu0 %2948
    %v2952 = vsel %vm2388, %v2929, 0
    %v2955 = vsel %vm2388, %v2930, 0
    %2957 = vmatprep.subr.mxu0 0.0
    %v2958 = vand.u32 %v2931, 4294901760
    %2959 = vmatpush1.msra.mxu0 %v2958
    %2960 = vmatprep.subr.mxu0 0.0
    %v2961 = vand.u32 %v2932, 4294901760
    %2962 = vmatpush1.msra.mxu0 %v2961
    %2963 = vmatprep.subr.mxu0 0.0
    %v2964 = vand.u32 %v2933, 4294901760
    %2965 = vmatpush1.msra.mxu0 %v2964
    %2966 = vmatprep.subr.mxu0 0.0
    %v2967 = vand.u32 %v2934, 4294901760
    %2968 = vmatpush1.msra.mxu0 %v2967
    %2969 = vmatprep.subr.mxu0 0.0
    %v2970 = vand.u32 %v2935, 4294901760
    %2971 = vmatpush1.msra.mxu0 %v2970
    %2972 = vmatprep.subr.mxu0 0.0
    %v2973 = vand.u32 %v2936, 4294901760
    %2974 = vmatpush1.msra.mxu0 %v2973
    %2975 = vmatprep.subr.mxu0 0.0
    %v2976 = vand.u32 %v2937, 4294901760
    %2977 = vmatpush1.msra.mxu0 %v2976
    %2978 = vmatprep.subr.mxu0 0.0
    %v2979 = vand.u32 %v2938, 4294901760
    %2980 = vmatpush1.msra.mxu0 %v2979
    %2981 = vmatprep.subr.mxu0 0.0
    %2982 = vmatpush1.msra.mxu0 0.0
    %2983 = vmatprep.subr.mxu0 0.0
    %2984 = vmatpush1.msra.mxu0 0.0
    %2985 = vmatprep.subr.mxu0 0.0
    %2986 = vmatpush1.msra.mxu0 0.0
    %2987 = vmatprep.subr.mxu0 0.0
    %2988 = vmatpush1.msra.mxu0 0.0
    %2989 = vmatprep.subr.mxu0 0.0
    %2990 = vmatpush1.msra.mxu0 0.0
    %2991 = vmatprep.subr.mxu0 0.0
    %2992 = vmatpush1.msra.mxu0 0.0
    %2993 = vmatprep.subr.mxu0 0.0
    %2994 = vmatpush1.msra.mxu0 0.0
    %2995 = vmatprep.subr.mxu0 0.0
    %2996 = vmatpush1.msra.mxu0 0.0
    %2997 = vmatprep.subr.mxu0 0.0
    %2998 = vmatpush1.msra.mxu0 0.0
    %2999 = vmatprep.subr.mxu0 0.0
    %3000 = vmatpush1.msra.mxu0 0.0
    %3001 = vmatprep.subr.mxu0 0.0
    %3002 = vmatpush1.msra.mxu0 0.0
    %3003 = vmatprep.subr.mxu0 0.0
    %3004 = vmatpush1.msra.mxu0 0.0
    %3005 = vmatprep.subr.mxu0 0.0
    %3006 = vmatpush1.msra.mxu0 0.0
    %3007 = vmatprep.subr.mxu0 0.0
    %3008 = vmatpush1.msra.mxu0 0.0
    %3009 = vmatprep.subr.mxu0 0.0
    %3010 = vmatpush1.msra.mxu0 0.0
    %3011 = vmatprep.subr.mxu0 0.0
    %3012 = vmatpush1.msra.mxu0 0.0
    %3013 = vmatprep.subr.mxu0 0.0
    %3014 = vmatpush1.msra.mxu0 0.0
    %3015 = vmatprep.subr.mxu0 0.0
    %3016 = vmatpush1.msra.mxu0 0.0
    %3017 = vmatprep.subr.mxu0 0.0
    %3018 = vmatpush1.msra.mxu0 0.0
    %3019 = vmatprep.subr.mxu0 0.0
    %3020 = vmatpush1.msra.mxu0 0.0
    %3021 = vmatprep.subr.mxu0 0.0
    %3022 = vmatpush1.msra.mxu0 0.0
    %3023 = vmatprep.subr.mxu0 0.0
    %3024 = vmatpush1.msra.mxu0 0.0
    %3025 = vmatprep.subr.mxu0 0.0
    %3026 = vmatpush1.msra.mxu0 0.0
    %3027 = vmatprep.subr.mxu0 0.0
    %3028 = vmatpush1.msra.mxu0 0.0
    %3029 = vmatprep.mubr.f32.mxu0 0.0
    %v3030 = vand.u32 %v2952, 4294901760
    %v3031 = vsub.f32 %v2952, %v3030
    %v3032 = vand.u32 %v3031, 4294901760
    %v3033 = vsub.f32 %v3031, %v3032
    %v3034 = vand.u32 %v3033, 4294901760
    %3035 = vmatmul.mubr.f32.gmra.mrb[0].mxu0 %v3034
    %v3036 = vpop.f32.mrb[0].mxu0
    %v3037 = vadd.f32 %v2944, %v3036
    %v3038 = vpop.f32.mrb[0].mxu0
    %3039 = vmatprep.mubr.f32.mxu0 0.0
    %v3040 = vand.u32 %v2955, 4294901760
    %v3041 = vsub.f32 %v2955, %v3040
    %v3042 = vand.u32 %v3041, 4294901760
    %v3043 = vsub.f32 %v3041, %v3042
    %v3044 = vand.u32 %v3043, 4294901760
    %3045 = vmatmul.mubr.f32.gmra.mrb[0].mxu0 %v3044
    %v3046 = vpop.f32.mrb[0].mxu0
    %v3047 = vadd.f32 %v2949, %v3046
    %v3048 = vpop.f32.mrb[0].mxu0
    %3049 = vdwg.mxu0
    %3050 = vmatprep.subr.mxu0 0.0
    %v3051 = vand.u32 %v2931, 4294901760
    %v3052 = vsub.f32 %v2931, %v3051
    %v3053 = vand.u32 %v3052, 4294901760
    %v3054 = vsub.f32 %v3052, %v3053
    %v3055 = vand.u32 %v3054, 4294901760
    %3056 = vmatpush1.msra.mxu0 %v3055
    %3057 = vmatprep.subr.mxu0 0.0
    %v3058 = vand.u32 %v2932, 4294901760
    %v3059 = vsub.f32 %v2932, %v3058
    %v3060 = vand.u32 %v3059, 4294901760
    %v3061 = vsub.f32 %v3059, %v3060
    %v3062 = vand.u32 %v3061, 4294901760
    %3063 = vmatpush1.msra.mxu0 %v3062
    %3064 = vmatprep.subr.mxu0 0.0
    %v3065 = vand.u32 %v2933, 4294901760
    %v3066 = vsub.f32 %v2933, %v3065
    %v3067 = vand.u32 %v3066, 4294901760
    %v3068 = vsub.f32 %v3066, %v3067
    %v3069 = vand.u32 %v3068, 4294901760
    %3070 = vmatpush1.msra.mxu0 %v3069
    %3071 = vmatprep.subr.mxu0 0.0
    %v3072 = vand.u32 %v2934, 4294901760
    %v3073 = vsub.f32 %v2934, %v3072
    %v3074 = vand.u32 %v3073, 4294901760
    %v3075 = vsub.f32 %v3073, %v3074
    %v3076 = vand.u32 %v3075, 4294901760
    %3077 = vmatpush1.msra.mxu0 %v3076
    %3078 = vmatprep.subr.mxu0 0.0
    %v3079 = vand.u32 %v2935, 4294901760
    %v3080 = vsub.f32 %v2935, %v3079
    %v3081 = vand.u32 %v3080, 4294901760
    %v3082 = vsub.f32 %v3080, %v3081
    %v3083 = vand.u32 %v3082, 4294901760
    %3084 = vmatpush1.msra.mxu0 %v3083
    %3085 = vmatprep.subr.mxu0 0.0
    %v3086 = vand.u32 %v2936, 4294901760
    %v3087 = vsub.f32 %v2936, %v3086
    %v3088 = vand.u32 %v3087, 4294901760
    %v3089 = vsub.f32 %v3087, %v3088
    %v3090 = vand.u32 %v3089, 4294901760
    %3091 = vmatpush1.msra.mxu0 %v3090
    %3092 = vmatprep.subr.mxu0 0.0
    %v3093 = vand.u32 %v2937, 4294901760
    %v3094 = vsub.f32 %v2937, %v3093
    %v3095 = vand.u32 %v3094, 4294901760
    %v3096 = vsub.f32 %v3094, %v3095
    %v3097 = vand.u32 %v3096, 4294901760
    %3098 = vmatpush1.msra.mxu0 %v3097
    %3099 = vmatprep.subr.mxu0 0.0
    %v3100 = vand.u32 %v2938, 4294901760
    %v3101 = vsub.f32 %v2938, %v3100
    %v3102 = vand.u32 %v3101, 4294901760
    %v3103 = vsub.f32 %v3101, %v3102
    %v3104 = vand.u32 %v3103, 4294901760
    %3105 = vmatpush1.msra.mxu0 %v3104
    %3106 = vmatprep.subr.mxu0 0.0
    %3107 = vmatpush1.msra.mxu0 0.0
    %3108 = vmatprep.subr.mxu0 0.0
    %3109 = vmatpush1.msra.mxu0 0.0
    %3110 = vmatprep.subr.mxu0 0.0
    %3111 = vmatpush1.msra.mxu0 0.0
    %3112 = vmatprep.subr.mxu0 0.0
    %3113 = vmatpush1.msra.mxu0 0.0
    %3114 = vmatprep.subr.mxu0 0.0
    %3115 = vmatpush1.msra.mxu0 0.0
    %3116 = vmatprep.subr.mxu0 0.0
    %3117 = vmatpush1.msra.mxu0 0.0
    %3118 = vmatprep.subr.mxu0 0.0
    %3119 = vmatpush1.msra.mxu0 0.0
    %3120 = vmatprep.subr.mxu0 0.0
    %3121 = vmatpush1.msra.mxu0 0.0
    %3122 = vmatprep.subr.mxu0 0.0
    %3123 = vmatpush1.msra.mxu0 0.0
    %3124 = vmatprep.subr.mxu0 0.0
    %3125 = vmatpush1.msra.mxu0 0.0
    %3126 = vmatprep.subr.mxu0 0.0
    %3127 = vmatpush1.msra.mxu0 0.0
    %3128 = vmatprep.subr.mxu0 0.0
    %3129 = vmatpush1.msra.mxu0 0.0
    %3130 = vmatprep.subr.mxu0 0.0
    %3131 = vmatpush1.msra.mxu0 0.0
    %3132 = vmatprep.subr.mxu0 0.0
    %3133 = vmatpush1.msra.mxu0 0.0
    %3134 = vmatprep.subr.mxu0 0.0
    %3135 = vmatpush1.msra.mxu0 0.0
    %3136 = vmatprep.subr.mxu0 0.0
    %3137 = vmatpush1.msra.mxu0 0.0
    %3138 = vmatprep.subr.mxu0 0.0
    %3139 = vmatpush1.msra.mxu0 0.0
    %3140 = vmatprep.subr.mxu0 0.0
    %3141 = vmatpush1.msra.mxu0 0.0
    %3142 = vmatprep.subr.mxu0 0.0
    %3143 = vmatpush1.msra.mxu0 0.0
    %3144 = vmatprep.subr.mxu0 0.0
    %3145 = vmatpush1.msra.mxu0 0.0
    %3146 = vmatprep.subr.mxu0 0.0
    %3147 = vmatpush1.msra.mxu0 0.0
    %3148 = vmatprep.subr.mxu0 0.0
    %3149 = vmatpush1.msra.mxu0 0.0
    %3150 = vmatprep.subr.mxu0 0.0
    %3151 = vmatpush1.msra.mxu0 0.0
    %3152 = vmatprep.subr.mxu0 0.0
    %3153 = vmatpush1.msra.mxu0 0.0
    %3154 = vmatprep.mubr.f32.mxu0 0.0
    %v3155 = vand.u32 %v2952, 4294901760
    %3156 = vmatmul.mubr.f32.gmra.mrb[0].mxu0 %v3155
    %v3157 = vpop.f32.mrb[0].mxu0
    %v3158 = vadd.f32 %v3037, %v3157
    %v3159 = vpop.f32.mrb[0].mxu0
    %3160 = vmatprep.mubr.f32.mxu0 0.0
    %v3161 = vand.u32 %v2955, 4294901760
    %3162 = vmatmul.mubr.f32.gmra.mrb[0].mxu0 %v3161
    %v3163 = vpop.f32.mrb[0].mxu0
    %v3164 = vadd.f32 %v3047, %v3163
    %v3165 = vpop.f32.mrb[0].mxu0
    %3166 = vdwg.mxu0
    %3167 = vmatprep.subr.mxu0 0.0
    %v3168 = vand.u32 %v2931, 4294901760
    %v3169 = vsub.f32 %v2931, %v3168
    %3170 = vmatpush1.msra.mxu0 %v3169
    %3171 = vmatprep.subr.mxu0 0.0
    %v3172 = vand.u32 %v2932, 4294901760
    %v3173 = vsub.f32 %v2932, %v3172
    %3174 = vmatpush1.msra.mxu0 %v3173
    %3175 = vmatprep.subr.mxu0 0.0
    %v3176 = vand.u32 %v2933, 4294901760
    %v3177 = vsub.f32 %v2933, %v3176
    %3178 = vmatpush1.msra.mxu0 %v3177
    %3179 = vmatprep.subr.mxu0 0.0
    %v3180 = vand.u32 %v2934, 4294901760
    %v3181 = vsub.f32 %v2934, %v3180
    %3182 = vmatpush1.msra.mxu0 %v3181
    %3183 = vmatprep.subr.mxu0 0.0
    %v3184 = vand.u32 %v2935, 4294901760
    %v3185 = vsub.f32 %v2935, %v3184
    %3186 = vmatpush1.msra.mxu0 %v3185
    %3187 = vmatprep.subr.mxu0 0.0
    %v3188 = vand.u32 %v2936, 4294901760
    %v3189 = vsub.f32 %v2936, %v3188
    %3190 = vmatpush1.msra.mxu0 %v3189
    %3191 = vmatprep.subr.mxu0 0.0
    %v3192 = vand.u32 %v2937, 4294901760
    %v3193 = vsub.f32 %v2937, %v3192
    %3194 = vmatpush1.msra.mxu0 %v3193
    %3195 = vmatprep.subr.mxu0 0.0
    %v3196 = vand.u32 %v2938, 4294901760
    %v3197 = vsub.f32 %v2938, %v3196
    %3198 = vmatpush1.msra.mxu0 %v3197
    %3199 = vmatprep.subr.mxu0 0.0
    %3200 = vmatpush1.msra.mxu0 0.0
    %3201 = vmatprep.subr.mxu0 0.0
    %3202 = vmatpush1.msra.mxu0 0.0
    %3203 = vmatprep.subr.mxu0 0.0
    %3204 = vmatpush1.msra.mxu0 0.0
    %3205 = vmatprep.subr.mxu0 0.0
    %3206 = vmatpush1.msra.mxu0 0.0
    %3207 = vmatprep.subr.mxu0 0.0
    %3208 = vmatpush1.msra.mxu0 0.0
    %3209 = vmatprep.subr.mxu0 0.0
    %3210 = vmatpush1.msra.mxu0 0.0
    %3211 = vmatprep.subr.mxu0 0.0
    %3212 = vmatpush1.msra.mxu0 0.0
    %3213 = vmatprep.subr.mxu0 0.0
    %3214 = vmatpush1.msra.mxu0 0.0
    %3215 = vmatprep.subr.mxu0 0.0
    %3216 = vmatpush1.msra.mxu0 0.0
    %3217 = vmatprep.subr.mxu0 0.0
    %3218 = vmatpush1.msra.mxu0 0.0
    %3219 = vmatprep.subr.mxu0 0.0
    %3220 = vmatpush1.msra.mxu0 0.0
    %3221 = vmatprep.subr.mxu0 0.0
    %3222 = vmatpush1.msra.mxu0 0.0
    %3223 = vmatprep.subr.mxu0 0.0
    %3224 = vmatpush1.msra.mxu0 0.0
    %3225 = vmatprep.subr.mxu0 0.0
    %3226 = vmatpush1.msra.mxu0 0.0
    %3227 = vmatprep.subr.mxu0 0.0
    %3228 = vmatpush1.msra.mxu0 0.0
    %3229 = vmatprep.subr.mxu0 0.0
    %3230 = vmatpush1.msra.mxu0 0.0
    %3231 = vmatprep.subr.mxu0 0.0
    %3232 = vmatpush1.msra.mxu0 0.0
    %3233 = vmatprep.subr.mxu0 0.0
    %3234 = vmatpush1.msra.mxu0 0.0
    %3235 = vmatprep.subr.mxu0 0.0
    %3236 = vmatpush1.msra.mxu0 0.0
    %3237 = vmatprep.subr.mxu0 0.0
    %3238 = vmatpush1.msra.mxu0 0.0
    %3239 = vmatprep.subr.mxu0 0.0
    %3240 = vmatpush1.msra.mxu0 0.0
    %3241 = vmatprep.subr.mxu0 0.0
    %3242 = vmatpush1.msra.mxu0 0.0
    %3243 = vmatprep.subr.mxu0 0.0
    %3244 = vmatpush1.msra.mxu0 0.0
    %3245 = vmatprep.subr.mxu0 0.0
    %3246 = vmatpush1.msra.mxu0 0.0
    %3247 = vmatprep.mubr.f32.mxu0 0.0
    %v3248 = vand.u32 %v2952, 4294901760
    %v3249 = vsub.f32 %v2952, %v3248
    %3250 = vmatmul.mubr.f32.gmra.mrb[0].mxu0 %v3249
    %v3251 = vpop.f32.mrb[0].mxu0
    %v3252 = vadd.f32 %v3158, %v3251
    %v3253 = vpop.f32.mrb[0].mxu0
    %3254 = vmatprep.mubr.f32.mxu0 0.0
    %v3255 = vand.u32 %v2955, 4294901760
    %v3256 = vsub.f32 %v2955, %v3255
    %3257 = vmatmul.mubr.f32.gmra.mrb[0].mxu0 %v3256
    %v3258 = vpop.f32.mrb[0].mxu0
    %v3259 = vadd.f32 %v3164, %v3258
    %v3260 = vpop.f32.mrb[0].mxu0
    %3261 = vdwg.mxu0
    %3262 = vmatprep.subr.mxu0 0.0
    %v3263 = vand.u32 %v2931, 4294901760
    %3264 = vmatpush1.msra.mxu0 %v3263
    %3265 = vmatprep.subr.mxu0 0.0
    %v3266 = vand.u32 %v2932, 4294901760
    %3267 = vmatpush1.msra.mxu0 %v3266
    %3268 = vmatprep.subr.mxu0 0.0
    %v3269 = vand.u32 %v2933, 4294901760
    %3270 = vmatpush1.msra.mxu0 %v3269
    %3271 = vmatprep.subr.mxu0 0.0
    %v3272 = vand.u32 %v2934, 4294901760
    %3273 = vmatpush1.msra.mxu0 %v3272
    %3274 = vmatprep.subr.mxu0 0.0
    %v3275 = vand.u32 %v2935, 4294901760
    %3276 = vmatpush1.msra.mxu0 %v3275
    %3277 = vmatprep.subr.mxu0 0.0
    %v3278 = vand.u32 %v2936, 4294901760
    %3279 = vmatpush1.msra.mxu0 %v3278
    %3280 = vmatprep.subr.mxu0 0.0
    %v3281 = vand.u32 %v2937, 4294901760
    %3282 = vmatpush1.msra.mxu0 %v3281
    %3283 = vmatprep.subr.mxu0 0.0
    %v3284 = vand.u32 %v2938, 4294901760
    %3285 = vmatpush1.msra.mxu0 %v3284
    %3286 = vmatprep.subr.mxu0 0.0
    %3287 = vmatpush1.msra.mxu0 0.0
    %3288 = vmatprep.subr.mxu0 0.0
    %3289 = vmatpush1.msra.mxu0 0.0
    %3290 = vmatprep.subr.mxu0 0.0
    %3291 = vmatpush1.msra.mxu0 0.0
    %3292 = vmatprep.subr.mxu0 0.0
    %3293 = vmatpush1.msra.mxu0 0.0
    %3294 = vmatprep.subr.mxu0 0.0
    %3295 = vmatpush1.msra.mxu0 0.0
    %3296 = vmatprep.subr.mxu0 0.0
    %3297 = vmatpush1.msra.mxu0 0.0
    %3298 = vmatprep.subr.mxu0 0.0
    %3299 = vmatpush1.msra.mxu0 0.0
    %3300 = vmatprep.subr.mxu0 0.0
    %3301 = vmatpush1.msra.mxu0 0.0
    %3302 = vmatprep.subr.mxu0 0.0
    %3303 = vmatpush1.msra.mxu0 0.0
    %3304 = vmatprep.subr.mxu0 0.0
    %3305 = vmatpush1.msra.mxu0 0.0
    %3306 = vmatprep.subr.mxu0 0.0
    %3307 = vmatpush1.msra.mxu0 0.0
    %3308 = vmatprep.subr.mxu0 0.0
    %3309 = vmatpush1.msra.mxu0 0.0
    %3310 = vmatprep.subr.mxu0 0.0
    %3311 = vmatpush1.msra.mxu0 0.0
    %3312 = vmatprep.subr.mxu0 0.0
    %3313 = vmatpush1.msra.mxu0 0.0
    %3314 = vmatprep.subr.mxu0 0.0
    %3315 = vmatpush1.msra.mxu0 0.0
    %3316 = vmatprep.subr.mxu0 0.0
    %3317 = vmatpush1.msra.mxu0 0.0
    %3318 = vmatprep.subr.mxu0 0.0
    %3319 = vmatpush1.msra.mxu0 0.0
    %3320 = vmatprep.subr.mxu0 0.0
    %3321 = vmatpush1.msra.mxu0 0.0
    %3322 = vmatprep.subr.mxu0 0.0
    %3323 = vmatpush1.msra.mxu0 0.0
    %3324 = vmatprep.subr.mxu0 0.0
    %3325 = vmatpush1.msra.mxu0 0.0
    %3326 = vmatprep.subr.mxu0 0.0
    %3327 = vmatpush1.msra.mxu0 0.0
    %3328 = vmatprep.subr.mxu0 0.0
    %3329 = vmatpush1.msra.mxu0 0.0
    %3330 = vmatprep.subr.mxu0 0.0
    %3331 = vmatpush1.msra.mxu0 0.0
    %3332 = vmatprep.subr.mxu0 0.0
    %3333 = vmatpush1.msra.mxu0 0.0
    %3334 = vmatprep.mubr.f32.mxu0 0.0
    %v3335 = vand.u32 %v2952, 4294901760
    %v3336 = vsub.f32 %v2952, %v3335
    %v3337 = vand.u32 %v3336, 4294901760
    %3338 = vmatmul.mubr.f32.gmra.mrb[0].mxu0 %v3337
    %v3339 = vpop.f32.mrb[0].mxu0
    %v3340 = vadd.f32 %v3252, %v3339
    %v3341 = vpop.f32.mrb[0].mxu0
    %3342 = vmatprep.mubr.f32.mxu0 0.0
    %v3343 = vand.u32 %v2955, 4294901760
    %v3344 = vsub.f32 %v2955, %v3343
    %v3345 = vand.u32 %v3344, 4294901760
    %3346 = vmatmul.mubr.f32.gmra.mrb[0].mxu0 %v3345
    %v3347 = vpop.f32.mrb[0].mxu0
    %v3348 = vadd.f32 %v3259, %v3347
    %v3349 = vpop.f32.mrb[0].mxu0
    %3350 = vdwg.mxu0
    %3351 = vmatprep.subr.mxu0 0.0
    %v3352 = vand.u32 %v2931, 4294901760
    %v3353 = vsub.f32 %v2931, %v3352
    %v3354 = vand.u32 %v3353, 4294901760
    %3355 = vmatpush1.msra.mxu0 %v3354
    %3356 = vmatprep.subr.mxu0 0.0
    %v3357 = vand.u32 %v2932, 4294901760
    %v3358 = vsub.f32 %v2932, %v3357
    %v3359 = vand.u32 %v3358, 4294901760
    %3360 = vmatpush1.msra.mxu0 %v3359
    %3361 = vmatprep.subr.mxu0 0.0
    %v3362 = vand.u32 %v2933, 4294901760
    %v3363 = vsub.f32 %v2933, %v3362
    %v3364 = vand.u32 %v3363, 4294901760
    %3365 = vmatpush1.msra.mxu0 %v3364
    %3366 = vmatprep.subr.mxu0 0.0
    %v3367 = vand.u32 %v2934, 4294901760
    %v3368 = vsub.f32 %v2934, %v3367
    %v3369 = vand.u32 %v3368, 4294901760
    %3370 = vmatpush1.msra.mxu0 %v3369
    %3371 = vmatprep.subr.mxu0 0.0
    %v3372 = vand.u32 %v2935, 4294901760
    %v3373 = vsub.f32 %v2935, %v3372
    %v3374 = vand.u32 %v3373, 4294901760
    %3375 = vmatpush1.msra.mxu0 %v3374
    %3376 = vmatprep.subr.mxu0 0.0
    %v3377 = vand.u32 %v2936, 4294901760
    %v3378 = vsub.f32 %v2936, %v3377
    %v3379 = vand.u32 %v3378, 4294901760
    %3380 = vmatpush1.msra.mxu0 %v3379
    %3381 = vmatprep.subr.mxu0 0.0
    %v3382 = vand.u32 %v2937, 4294901760
    %v3383 = vsub.f32 %v2937, %v3382
    %v3384 = vand.u32 %v3383, 4294901760
    %3385 = vmatpush1.msra.mxu0 %v3384
    %3386 = vmatprep.subr.mxu0 0.0
    %v3387 = vand.u32 %v2938, 4294901760
    %v3388 = vsub.f32 %v2938, %v3387
    %v3389 = vand.u32 %v3388, 4294901760
    %3390 = vmatpush1.msra.mxu0 %v3389
    %3391 = vmatprep.subr.mxu0 0.0
    %3392 = vmatpush1.msra.mxu0 0.0
    %3393 = vmatprep.subr.mxu0 0.0
    %3394 = vmatpush1.msra.mxu0 0.0
    %3395 = vmatprep.subr.mxu0 0.0
    %3396 = vmatpush1.msra.mxu0 0.0
    %3397 = vmatprep.subr.mxu0 0.0
    %3398 = vmatpush1.msra.mxu0 0.0
    %3399 = vmatprep.subr.mxu0 0.0
    %3400 = vmatpush1.msra.mxu0 0.0
    %3401 = vmatprep.subr.mxu0 0.0
    %3402 = vmatpush1.msra.mxu0 0.0
    %3403 = vmatprep.subr.mxu0 0.0
    %3404 = vmatpush1.msra.mxu0 0.0
    %3405 = vmatprep.subr.mxu0 0.0
    %3406 = vmatpush1.msra.mxu0 0.0
    %3407 = vmatprep.subr.mxu0 0.0
    %3408 = vmatpush1.msra.mxu0 0.0
    %3409 = vmatprep.subr.mxu0 0.0
    %3410 = vmatpush1.msra.mxu0 0.0
    %3411 = vmatprep.subr.mxu0 0.0
    %3412 = vmatpush1.msra.mxu0 0.0
    %3413 = vmatprep.subr.mxu0 0.0
    %3414 = vmatpush1.msra.mxu0 0.0
    %3415 = vmatprep.subr.mxu0 0.0
    %3416 = vmatpush1.msra.mxu0 0.0
    %3417 = vmatprep.subr.mxu0 0.0
    %3418 = vmatpush1.msra.mxu0 0.0
    %3419 = vmatprep.subr.mxu0 0.0
    %3420 = vmatpush1.msra.mxu0 0.0
    %3421 = vmatprep.subr.mxu0 0.0
    %3422 = vmatpush1.msra.mxu0 0.0
    %3423 = vmatprep.subr.mxu0 0.0
    %3424 = vmatpush1.msra.mxu0 0.0
    %3425 = vmatprep.subr.mxu0 0.0
    %3426 = vmatpush1.msra.mxu0 0.0
    %3427 = vmatprep.subr.mxu0 0.0
    %3428 = vmatpush1.msra.mxu0 0.0
    %3429 = vmatprep.subr.mxu0 0.0
    %3430 = vmatpush1.msra.mxu0 0.0
    %3431 = vmatprep.subr.mxu0 0.0
    %3432 = vmatpush1.msra.mxu0 0.0
    %3433 = vmatprep.subr.mxu0 0.0
    %3434 = vmatpush1.msra.mxu0 0.0
    %3435 = vmatprep.subr.mxu0 0.0
    %3436 = vmatpush1.msra.mxu0 0.0
    %3437 = vmatprep.subr.mxu0 0.0
    %3438 = vmatpush1.msra.mxu0 0.0
    %3439 = vmatprep.mubr.f32.mxu0 0.0
    %v3440 = vand.u32 %v2952, 4294901760
    %3441 = vmatmul.mubr.f32.gmra.mrb[0].mxu0 %v3440
    %v3442 = vpop.f32.mrb[0].mxu0
    %v3443 = vadd.f32 %v3340, %v3442
    %v3444 = vpop.f32.mrb[0].mxu0
    %3445 = vmatprep.mubr.f32.mxu0 0.0
    %v3446 = vand.u32 %v2955, 4294901760
    %3447 = vmatmul.mubr.f32.gmra.mrb[0].mxu0 %v3446
    %v3448 = vpop.f32.mrb[0].mxu0
    %v3449 = vadd.f32 %v3348, %v3448
    %v3450 = vpop.f32.mrb[0].mxu0
    %3451 = vdwg.mxu0
    %3452 = vmatprep.subr.mxu0 0.0
    %v3453 = vand.u32 %v2931, 4294901760
    %3454 = vmatpush1.msra.mxu0 %v3453
    %3455 = vmatprep.subr.mxu0 0.0
    %v3456 = vand.u32 %v2932, 4294901760
    %3457 = vmatpush1.msra.mxu0 %v3456
    %3458 = vmatprep.subr.mxu0 0.0
    %v3459 = vand.u32 %v2933, 4294901760
    %3460 = vmatpush1.msra.mxu0 %v3459
    %3461 = vmatprep.subr.mxu0 0.0
    %v3462 = vand.u32 %v2934, 4294901760
    %3463 = vmatpush1.msra.mxu0 %v3462
    %3464 = vmatprep.subr.mxu0 0.0
    %v3465 = vand.u32 %v2935, 4294901760
    %3466 = vmatpush1.msra.mxu0 %v3465
    %3467 = vmatprep.subr.mxu0 0.0
    %v3468 = vand.u32 %v2936, 4294901760
    %3469 = vmatpush1.msra.mxu0 %v3468
    %3470 = vmatprep.subr.mxu0 0.0
    %v3471 = vand.u32 %v2937, 4294901760
    %3472 = vmatpush1.msra.mxu0 %v3471
    %3473 = vmatprep.subr.mxu0 0.0
    %v3474 = vand.u32 %v2938, 4294901760
    %3475 = vmatpush1.msra.mxu0 %v3474
    %3476 = vmatprep.subr.mxu0 0.0
    %3477 = vmatpush1.msra.mxu0 0.0
    %3478 = vmatprep.subr.mxu0 0.0
    %3479 = vmatpush1.msra.mxu0 0.0
    %3480 = vmatprep.subr.mxu0 0.0
    %3481 = vmatpush1.msra.mxu0 0.0
    %3482 = vmatprep.subr.mxu0 0.0
    %3483 = vmatpush1.msra.mxu0 0.0
    %3484 = vmatprep.subr.mxu0 0.0
    %3485 = vmatpush1.msra.mxu0 0.0
    %3486 = vmatprep.subr.mxu0 0.0
    %3487 = vmatpush1.msra.mxu0 0.0
    %3488 = vmatprep.subr.mxu0 0.0
    %3489 = vmatpush1.msra.mxu0 0.0
    %3490 = vmatprep.subr.mxu0 0.0
    %3491 = vmatpush1.msra.mxu0 0.0
    %3492 = vmatprep.subr.mxu0 0.0
    %3493 = vmatpush1.msra.mxu0 0.0
    %3494 = vmatprep.subr.mxu0 0.0
    %3495 = vmatpush1.msra.mxu0 0.0
    %3496 = vmatprep.subr.mxu0 0.0
    %3497 = vmatpush1.msra.mxu0 0.0
    %3498 = vmatprep.subr.mxu0 0.0
    %3499 = vmatpush1.msra.mxu0 0.0
    %3500 = vmatprep.subr.mxu0 0.0
    %3501 = vmatpush1.msra.mxu0 0.0
    %3502 = vmatprep.subr.mxu0 0.0
    %3503 = vmatpush1.msra.mxu0 0.0
    %3504 = vmatprep.subr.mxu0 0.0
    %3505 = vmatpush1.msra.mxu0 0.0
    %3506 = vmatprep.subr.mxu0 0.0
    %3507 = vmatpush1.msra.mxu0 0.0
    %3508 = vmatprep.subr.mxu0 0.0
    %3509 = vmatpush1.msra.mxu0 0.0
    %3510 = vmatprep.subr.mxu0 0.0
    %3511 = vmatpush1.msra.mxu0 0.0
    %3512 = vmatprep.subr.mxu0 0.0
    %3513 = vmatpush1.msra.mxu0 0.0
    %3514 = vmatprep.subr.mxu0 0.0
    %3515 = vmatpush1.msra.mxu0 0.0
    %3516 = vmatprep.subr.mxu0 0.0
    %3517 = vmatpush1.msra.mxu0 0.0
    %3518 = vmatprep.subr.mxu0 0.0
    %3519 = vmatpush1.msra.mxu0 0.0
    %3520 = vmatprep.subr.mxu0 0.0
    %3521 = vmatpush1.msra.mxu0 0.0
    %3522 = vmatprep.subr.mxu0 0.0
    %3523 = vmatpush1.msra.mxu0 0.0
    %3524 = vmatprep.mubr.f32.mxu0 0.0
    %v3525 = vand.u32 %v2952, 4294901760
    %3526 = vmatmul.mubr.f32.gmra.mrb[0].mxu0 %v3525
    %v3527 = vpop.f32.mrb[0].mxu0
    %v3528 = vadd.f32 %v3443, %v3527
    %v3529 = vpop.f32.mrb[0].mxu0
    %3530 = vmatprep.mubr.f32.mxu0 0.0
    %v3531 = vand.u32 %v2955, 4294901760
    %3532 = vmatmul.mubr.f32.gmra.mrb[0].mxu0 %v3531
    %v3533 = vpop.f32.mrb[0].mxu0
    %v3534 = vadd.f32 %v3449, %v3533
    %v3535 = vpop.f32.mrb[0].mxu0
    %3536 = vdwg.mxu0
    %v3537 = vld [vmem:[%s13] sm:$0xff]
    %v3538 = vld [vmem:[%s13 + $0x8] sm:$0xff]
    %v3539 = vld [vmem:[%s3] sm:$0xff]
    %v3540 = vld [vmem:[%s3 + $0x8] sm:$0xff]
    %v3541 = vld [vmem:[%s3 + $0x10] sm:$0xff]
    %v3542 = vld [vmem:[%s3 + $0x18] sm:$0xff]
    %v3543 = vld [vmem:[%s3 + $0x20] sm:$0xff]
    %v3544 = vld [vmem:[%s3 + $0x28] sm:$0xff]
    %v3545 = vld [vmem:[%s3 + $0x30] sm:$0xff]
    %v3546 = vld [vmem:[%s3 + $0x38] sm:$0xff]
    %v3547 = vld [vmem:[%s3 + $0x40] sm:$0xff]
    %v3548 = vld [vmem:[%s3 + $0x48] sm:$0xff]
    %v3549 = vld [vmem:[%s14] sm:$0xff]
    %v3550 = vld [vmem:[%s14 + $0x8] sm:$0xff]
    %3552 = vset.pattern.permute.xlu0 0
    %3553 = vperm.xlu0 %3552, %v3549
    %v3554 = vpop.permute.xlu0 %3553
    %3557 = vset.pattern.permute.xlu0 0
    %3558 = vperm.xlu0 %3557, %v3550
    %v3559 = vpop.permute.xlu0 %3558
    %vm3561 = vcmask 654336
    %v3563 = vsel %vm3561, %v3537, 0
    %v3566 = vsel %vm3561, %v3538, 0
    %3568 = vmatprep.subr.mxu0 0.0
    %v3569 = vand.u32 %v3539, 4294901760
    %3570 = vmatpush1.msra.mxu0 %v3569
    %3571 = vmatprep.subr.mxu0 0.0
    %v3572 = vand.u32 %v3540, 4294901760
    %3573 = vmatpush1.msra.mxu0 %v3572
    %3574 = vmatprep.subr.mxu0 0.0
    %v3575 = vand.u32 %v3541, 4294901760
    %3576 = vmatpush1.msra.mxu0 %v3575
    %3577 = vmatprep.subr.mxu0 0.0
    %v3578 = vand.u32 %v3542, 4294901760
    %3579 = vmatpush1.msra.mxu0 %v3578
    %3580 = vmatprep.subr.mxu0 0.0
    %v3581 = vand.u32 %v3543, 4294901760
    %3582 = vmatpush1.msra.mxu0 %v3581
    %3583 = vmatprep.subr.mxu0 0.0
    %v3584 = vand.u32 %v3544, 4294901760
    %3585 = vmatpush1.msra.mxu0 %v3584
    %3586 = vmatprep.subr.mxu0 0.0
    %v3587 = vand.u32 %v3545, 4294901760
    %3588 = vmatpush1.msra.mxu0 %v3587
    %3589 = vmatprep.subr.mxu0 0.0
    %v3590 = vand.u32 %v3546, 4294901760
    %3591 = vmatpush1.msra.mxu0 %v3590
    %3592 = vmatprep.subr.mxu0 0.0
    %v3593 = vand.u32 %v3547, 4294901760
    %3594 = vmatpush1.msra.mxu0 %v3593
    %3595 = vmatprep.subr.mxu0 0.0
    %v3596 = vand.u32 %v3548, 4294901760
    %3597 = vmatpush1.msra.mxu0 %v3596
    %3598 = vmatprep.subr.mxu0 0.0
    %3599 = vmatpush1.msra.mxu0 0.0
    %3600 = vmatprep.subr.mxu0 0.0
    %3601 = vmatpush1.msra.mxu0 0.0
    %3602 = vmatprep.subr.mxu0 0.0
    %3603 = vmatpush1.msra.mxu0 0.0
    %3604 = vmatprep.subr.mxu0 0.0
    %3605 = vmatpush1.msra.mxu0 0.0
    %3606 = vmatprep.subr.mxu0 0.0
    %3607 = vmatpush1.msra.mxu0 0.0
    %3608 = vmatprep.subr.mxu0 0.0
    %3609 = vmatpush1.msra.mxu0 0.0
    %3610 = vmatprep.subr.mxu0 0.0
    %3611 = vmatpush1.msra.mxu0 0.0
    %3612 = vmatprep.subr.mxu0 0.0
    %3613 = vmatpush1.msra.mxu0 0.0
    %3614 = vmatprep.subr.mxu0 0.0
    %3615 = vmatpush1.msra.mxu0 0.0
    %3616 = vmatprep.subr.mxu0 0.0
    %3617 = vmatpush1.msra.mxu0 0.0
    %3618 = vmatprep.subr.mxu0 0.0
    %3619 = vmatpush1.msra.mxu0 0.0
    %3620 = vmatprep.subr.mxu0 0.0
    %3621 = vmatpush1.msra.mxu0 0.0
    %3622 = vmatprep.subr.mxu0 0.0
    %3623 = vmatpush1.msra.mxu0 0.0
    %3624 = vmatprep.subr.mxu0 0.0
    %3625 = vmatpush1.msra.mxu0 0.0
    %3626 = vmatprep.subr.mxu0 0.0
    %3627 = vmatpush1.msra.mxu0 0.0
    %3628 = vmatprep.subr.mxu0 0.0
    %3629 = vmatpush1.msra.mxu0 0.0
    %3630 = vmatprep.subr.mxu0 0.0
    %3631 = vmatpush1.msra.mxu0 0.0
    %3632 = vmatprep.subr.mxu0 0.0
    %3633 = vmatpush1.msra.mxu0 0.0
    %3634 = vmatprep.subr.mxu0 0.0
    %3635 = vmatpush1.msra.mxu0 0.0
    %3636 = vmatprep.subr.mxu0 0.0
    %3637 = vmatpush1.msra.mxu0 0.0
    %3638 = vmatprep.subr.mxu0 0.0
    %3639 = vmatpush1.msra.mxu0 0.0
    %3640 = vmatprep.subr.mxu0 0.0
    %3641 = vmatpush1.msra.mxu0 0.0
    %3642 = vmatprep.mubr.f32.mxu0 0.0
    %v3643 = vand.u32 %v3563, 4294901760
    %v3644 = vsub.f32 %v3563, %v3643
    %v3645 = vand.u32 %v3644, 4294901760
    %v3646 = vsub.f32 %v3644, %v3645
    %v3647 = vand.u32 %v3646, 4294901760
    %3648 = vmatmul.mubr.f32.gmra.mrb[0].mxu0 %v3647
    %v3649 = vpop.f32.mrb[0].mxu0
    %v3650 = vadd.f32 %v3554, %v3649
    %v3651 = vpop.f32.mrb[0].mxu0
    %3652 = vmatprep.mubr.f32.mxu0 0.0
    %v3653 = vand.u32 %v3566, 4294901760
    %v3654 = vsub.f32 %v3566, %v3653
    %v3655 = vand.u32 %v3654, 4294901760
    %v3656 = vsub.f32 %v3654, %v3655
    %v3657 = vand.u32 %v3656, 4294901760
    %3658 = vmatmul.mubr.f32.gmra.mrb[0].mxu0 %v3657
    %v3659 = vpop.f32.mrb[0].mxu0
    %v3660 = vadd.f32 %v3559, %v3659
    %v3661 = vpop.f32.mrb[0].mxu0
    %3662 = vdwg.mxu0
    %3663 = vmatprep.subr.mxu0 0.0
    %v3664 = vand.u32 %v3539, 4294901760
    %v3665 = vsub.f32 %v3539, %v3664
    %v3666 = vand.u32 %v3665, 4294901760
    %v3667 = vsub.f32 %v3665, %v3666
    %v3668 = vand.u32 %v3667, 4294901760
    %3669 = vmatpush1.msra.mxu0 %v3668
    %3670 = vmatprep.subr.mxu0 0.0
    %v3671 = vand.u32 %v3540, 4294901760
    %v3672 = vsub.f32 %v3540, %v3671
    %v3673 = vand.u32 %v3672, 4294901760
    %v3674 = vsub.f32 %v3672, %v3673
    %v3675 = vand.u32 %v3674, 4294901760
    %3676 = vmatpush1.msra.mxu0 %v3675
    %3677 = vmatprep.subr.mxu0 0.0
    %v3678 = vand.u32 %v3541, 4294901760
    %v3679 = vsub.f32 %v3541, %v3678
    %v3680 = vand.u32 %v3679, 4294901760
    %v3681 = vsub.f32 %v3679, %v3680
    %v3682 = vand.u32 %v3681, 4294901760
    %3683 = vmatpush1.msra.mxu0 %v3682
    %3684 = vmatprep.subr.mxu0 0.0
    %v3685 = vand.u32 %v3542, 4294901760
    %v3686 = vsub.f32 %v3542, %v3685
    %v3687 = vand.u32 %v3686, 4294901760
    %v3688 = vsub.f32 %v3686, %v3687
    %v3689 = vand.u32 %v3688, 4294901760
    %3690 = vmatpush1.msra.mxu0 %v3689
    %3691 = vmatprep.subr.mxu0 0.0
    %v3692 = vand.u32 %v3543, 4294901760
    %v3693 = vsub.f32 %v3543, %v3692
    %v3694 = vand.u32 %v3693, 4294901760
    %v3695 = vsub.f32 %v3693, %v3694
    %v3696 = vand.u32 %v3695, 4294901760
    %3697 = vmatpush1.msra.mxu0 %v3696
    %3698 = vmatprep.subr.mxu0 0.0
    %v3699 = vand.u32 %v3544, 4294901760
    %v3700 = vsub.f32 %v3544, %v3699
    %v3701 = vand.u32 %v3700, 4294901760
    %v3702 = vsub.f32 %v3700, %v3701
    %v3703 = vand.u32 %v3702, 4294901760
    %3704 = vmatpush1.msra.mxu0 %v3703
    %3705 = vmatprep.subr.mxu0 0.0
    %v3706 = vand.u32 %v3545, 4294901760
    %v3707 = vsub.f32 %v3545, %v3706
    %v3708 = vand.u32 %v3707, 4294901760
    %v3709 = vsub.f32 %v3707, %v3708
    %v3710 = vand.u32 %v3709, 4294901760
    %3711 = vmatpush1.msra.mxu0 %v3710
    %3712 = vmatprep.subr.mxu0 0.0
    %v3713 = vand.u32 %v3546, 4294901760
    %v3714 = vsub.f32 %v3546, %v3713
    %v3715 = vand.u32 %v3714, 4294901760
    %v3716 = vsub.f32 %v3714, %v3715
    %v3717 = vand.u32 %v3716, 4294901760
    %3718 = vmatpush1.msra.mxu0 %v3717
    %3719 = vmatprep.subr.mxu0 0.0
    %v3720 = vand.u32 %v3547, 4294901760
    %v3721 = vsub.f32 %v3547, %v3720
    %v3722 = vand.u32 %v3721, 4294901760
    %v3723 = vsub.f32 %v3721, %v3722
    %v3724 = vand.u32 %v3723, 4294901760
    %3725 = vmatpush1.msra.mxu0 %v3724
    %3726 = vmatprep.subr.mxu0 0.0
    %v3727 = vand.u32 %v3548, 4294901760
    %v3728 = vsub.f32 %v3548, %v3727
    %v3729 = vand.u32 %v3728, 4294901760
    %v3730 = vsub.f32 %v3728, %v3729
    %v3731 = vand.u32 %v3730, 4294901760
    %3732 = vmatpush1.msra.mxu0 %v3731
    %3733 = vmatprep.subr.mxu0 0.0
    %3734 = vmatpush1.msra.mxu0 0.0
    %3735 = vmatprep.subr.mxu0 0.0
    %3736 = vmatpush1.msra.mxu0 0.0
    %3737 = vmatprep.subr.mxu0 0.0
    %3738 = vmatpush1.msra.mxu0 0.0
    %3739 = vmatprep.subr.mxu0 0.0
    %3740 = vmatpush1.msra.mxu0 0.0
    %3741 = vmatprep.subr.mxu0 0.0
    %3742 = vmatpush1.msra.mxu0 0.0
    %3743 = vmatprep.subr.mxu0 0.0
    %3744 = vmatpush1.msra.mxu0 0.0
    %3745 = vmatprep.subr.mxu0 0.0
    %3746 = vmatpush1.msra.mxu0 0.0
    %3747 = vmatprep.subr.mxu0 0.0
    %3748 = vmatpush1.msra.mxu0 0.0
    %3749 = vmatprep.subr.mxu0 0.0
    %3750 = vmatpush1.msra.mxu0 0.0
    %3751 = vmatprep.subr.mxu0 0.0
    %3752 = vmatpush1.msra.mxu0 0.0
    %3753 = vmatprep.subr.mxu0 0.0
    %3754 = vmatpush1.msra.mxu0 0.0
    %3755 = vmatprep.subr.mxu0 0.0
    %3756 = vmatpush1.msra.mxu0 0.0
    %3757 = vmatprep.subr.mxu0 0.0
    %3758 = vmatpush1.msra.mxu0 0.0
    %3759 = vmatprep.subr.mxu0 0.0
    %3760 = vmatpush1.msra.mxu0 0.0
    %3761 = vmatprep.subr.mxu0 0.0
    %3762 = vmatpush1.msra.mxu0 0.0
    %3763 = vmatprep.subr.mxu0 0.0
    %3764 = vmatpush1.msra.mxu0 0.0
    %3765 = vmatprep.subr.mxu0 0.0
    %3766 = vmatpush1.msra.mxu0 0.0
    %3767 = vmatprep.subr.mxu0 0.0
    %3768 = vmatpush1.msra.mxu0 0.0
    %3769 = vmatprep.subr.mxu0 0.0
    %3770 = vmatpush1.msra.mxu0 0.0
    %3771 = vmatprep.subr.mxu0 0.0
    %3772 = vmatpush1.msra.mxu0 0.0
    %3773 = vmatprep.subr.mxu0 0.0
    %3774 = vmatpush1.msra.mxu0 0.0
    %3775 = vmatprep.subr.mxu0 0.0
    %3776 = vmatpush1.msra.mxu0 0.0
    %3777 = vmatprep.mubr.f32.mxu0 0.0
    %v3778 = vand.u32 %v3563, 4294901760
    %3779 = vmatmul.mubr.f32.gmra.mrb[0].mxu0 %v3778
    %v3780 = vpop.f32.mrb[0].mxu0
    %v3781 = vadd.f32 %v3650, %v3780
    %v3782 = vpop.f32.mrb[0].mxu0
    %3783 = vmatprep.mubr.f32.mxu0 0.0
    %v3784 = vand.u32 %v3566, 4294901760
    %3785 = vmatmul.mubr.f32.gmra.mrb[0].mxu0 %v3784
    %v3786 = vpop.f32.mrb[0].mxu0
    %v3787 = vadd.f32 %v3660, %v3786
    %v3788 = vpop.f32.mrb[0].mxu0
    %3789 = vdwg.mxu0
    %3790 = vmatprep.subr.mxu0 0.0
    %v3791 = vand.u32 %v3539, 4294901760
    %v3792 = vsub.f32 %v3539, %v3791
    %3793 = vmatpush1.msra.mxu0 %v3792
    %3794 = vmatprep.subr.mxu0 0.0
    %v3795 = vand.u32 %v3540, 4294901760
    %v3796 = vsub.f32 %v3540, %v3795
    %3797 = vmatpush1.msra.mxu0 %v3796
    %3798 = vmatprep.subr.mxu0 0.0
    %v3799 = vand.u32 %v3541, 4294901760
    %v3800 = vsub.f32 %v3541, %v3799
    %3801 = vmatpush1.msra.mxu0 %v3800
    %3802 = vmatprep.subr.mxu0 0.0
    %v3803 = vand.u32 %v3542, 4294901760
    %v3804 = vsub.f32 %v3542, %v3803
    %3805 = vmatpush1.msra.mxu0 %v3804
    %3806 = vmatprep.subr.mxu0 0.0
    %v3807 = vand.u32 %v3543, 4294901760
    %v3808 = vsub.f32 %v3543, %v3807
    %3809 = vmatpush1.msra.mxu0 %v3808
    %3810 = vmatprep.subr.mxu0 0.0
    %v3811 = vand.u32 %v3544, 4294901760
    %v3812 = vsub.f32 %v3544, %v3811
    %3813 = vmatpush1.msra.mxu0 %v3812
    %3814 = vmatprep.subr.mxu0 0.0
    %v3815 = vand.u32 %v3545, 4294901760
    %v3816 = vsub.f32 %v3545, %v3815
    %3817 = vmatpush1.msra.mxu0 %v3816
    %3818 = vmatprep.subr.mxu0 0.0
    %v3819 = vand.u32 %v3546, 4294901760
    %v3820 = vsub.f32 %v3546, %v3819
    %3821 = vmatpush1.msra.mxu0 %v3820
    %3822 = vmatprep.subr.mxu0 0.0
    %v3823 = vand.u32 %v3547, 4294901760
    %v3824 = vsub.f32 %v3547, %v3823
    %3825 = vmatpush1.msra.mxu0 %v3824
    %3826 = vmatprep.subr.mxu0 0.0
    %v3827 = vand.u32 %v3548, 4294901760
    %v3828 = vsub.f32 %v3548, %v3827
    %3829 = vmatpush1.msra.mxu0 %v3828
    %3830 = vmatprep.subr.mxu0 0.0
    %3831 = vmatpush1.msra.mxu0 0.0
    %3832 = vmatprep.subr.mxu0 0.0
    %3833 = vmatpush1.msra.mxu0 0.0
    %3834 = vmatprep.subr.mxu0 0.0
    %3835 = vmatpush1.msra.mxu0 0.0
    %3836 = vmatprep.subr.mxu0 0.0
    %3837 = vmatpush1.msra.mxu0 0.0
    %3838 = vmatprep.subr.mxu0 0.0
    %3839 = vmatpush1.msra.mxu0 0.0
    %3840 = vmatprep.subr.mxu0 0.0
    %3841 = vmatpush1.msra.mxu0 0.0
    %3842 = vmatprep.subr.mxu0 0.0
    %3843 = vmatpush1.msra.mxu0 0.0
    %3844 = vmatprep.subr.mxu0 0.0
    %3845 = vmatpush1.msra.mxu0 0.0
    %3846 = vmatprep.subr.mxu0 0.0
    %3847 = vmatpush1.msra.mxu0 0.0
    %3848 = vmatprep.subr.mxu0 0.0
    %3849 = vmatpush1.msra.mxu0 0.0
    %3850 = vmatprep.subr.mxu0 0.0
    %3851 = vmatpush1.msra.mxu0 0.0
    %3852 = vmatprep.subr.mxu0 0.0
    %3853 = vmatpush1.msra.mxu0 0.0
    %3854 = vmatprep.subr.mxu0 0.0
    %3855 = vmatpush1.msra.mxu0 0.0
    %3856 = vmatprep.subr.mxu0 0.0
    %3857 = vmatpush1.msra.mxu0 0.0
    %3858 = vmatprep.subr.mxu0 0.0
    %3859 = vmatpush1.msra.mxu0 0.0
    %3860 = vmatprep.subr.mxu0 0.0
    %3861 = vmatpush1.msra.mxu0 0.0
    %3862 = vmatprep.subr.mxu0 0.0
    %3863 = vmatpush1.msra.mxu0 0.0
    %3864 = vmatprep.subr.mxu0 0.0
    %3865 = vmatpush1.msra.mxu0 0.0
    %3866 = vmatprep.subr.mxu0 0.0
    %3867 = vmatpush1.msra.mxu0 0.0
    %3868 = vmatprep.subr.mxu0 0.0
    %3869 = vmatpush1.msra.mxu0 0.0
    %3870 = vmatprep.subr.mxu0 0.0
    %3871 = vmatpush1.msra.mxu0 0.0
    %3872 = vmatprep.subr.mxu0 0.0
    %3873 = vmatpush1.msra.mxu0 0.0
    %3874 = vmatprep.mubr.f32.mxu0 0.0
    %v3875 = vand.u32 %v3563, 4294901760
    %v3876 = vsub.f32 %v3563, %v3875
    %3877 = vmatmul.mubr.f32.gmra.mrb[0].mxu0 %v3876
    %v3878 = vpop.f32.mrb[0].mxu0
    %v3879 = vadd.f32 %v3781, %v3878
    %v3880 = vpop.f32.mrb[0].mxu0
    %3881 = vmatprep.mubr.f32.mxu0 0.0
    %v3882 = vand.u32 %v3566, 4294901760
    %v3883 = vsub.f32 %v3566, %v3882
    %3884 = vmatmul.mubr.f32.gmra.mrb[0].mxu0 %v3883
    %v3885 = vpop.f32.mrb[0].mxu0
    %v3886 = vadd.f32 %v3787, %v3885
    %v3887 = vpop.f32.mrb[0].mxu0
    %3888 = vdwg.mxu0
    %3889 = vmatprep.subr.mxu0 0.0
    %v3890 = vand.u32 %v3539, 4294901760
    %3891 = vmatpush1.msra.mxu0 %v3890
    %3892 = vmatprep.subr.mxu0 0.0
    %v3893 = vand.u32 %v3540, 4294901760
    %3894 = vmatpush1.msra.mxu0 %v3893
    %3895 = vmatprep.subr.mxu0 0.0
    %v3896 = vand.u32 %v3541, 4294901760
    %3897 = vmatpush1.msra.mxu0 %v3896
    %3898 = vmatprep.subr.mxu0 0.0
    %v3899 = vand.u32 %v3542, 4294901760
    %3900 = vmatpush1.msra.mxu0 %v3899
    %3901 = vmatprep.subr.mxu0 0.0
    %v3902 = vand.u32 %v3543, 4294901760
    %3903 = vmatpush1.msra.mxu0 %v3902
    %3904 = vmatprep.subr.mxu0 0.0
    %v3905 = vand.u32 %v3544, 4294901760
    %3906 = vmatpush1.msra.mxu0 %v3905
    %3907 = vmatprep.subr.mxu0 0.0
    %v3908 = vand.u32 %v3545, 4294901760
    %3909 = vmatpush1.msra.mxu0 %v3908
    %3910 = vmatprep.subr.mxu0 0.0
    %v3911 = vand.u32 %v3546, 4294901760
    %3912 = vmatpush1.msra.mxu0 %v3911
    %3913 = vmatprep.subr.mxu0 0.0
    %v3914 = vand.u32 %v3547, 4294901760
    %3915 = vmatpush1.msra.mxu0 %v3914
    %3916 = vmatprep.subr.mxu0 0.0
    %v3917 = vand.u32 %v3548, 4294901760
    %3918 = vmatpush1.msra.mxu0 %v3917
    %3919 = vmatprep.subr.mxu0 0.0
    %3920 = vmatpush1.msra.mxu0 0.0
    %3921 = vmatprep.subr.mxu0 0.0
    %3922 = vmatpush1.msra.mxu0 0.0
    %3923 = vmatprep.subr.mxu0 0.0
    %3924 = vmatpush1.msra.mxu0 0.0
    %3925 = vmatprep.subr.mxu0 0.0
    %3926 = vmatpush1.msra.mxu0 0.0
    %3927 = vmatprep.subr.mxu0 0.0
    %3928 = vmatpush1.msra.mxu0 0.0
    %3929 = vmatprep.subr.mxu0 0.0
    %3930 = vmatpush1.msra.mxu0 0.0
    %3931 = vmatprep.subr.mxu0 0.0
    %3932 = vmatpush1.msra.mxu0 0.0
    %3933 = vmatprep.subr.mxu0 0.0
    %3934 = vmatpush1.msra.mxu0 0.0
    %3935 = vmatprep.subr.mxu0 0.0
    %3936 = vmatpush1.msra.mxu0 0.0
    %3937 = vmatprep.subr.mxu0 0.0
    %3938 = vmatpush1.msra.mxu0 0.0
    %3939 = vmatprep.subr.mxu0 0.0
    %3940 = vmatpush1.msra.mxu0 0.0
    %3941 = vmatprep.subr.mxu0 0.0
    %3942 = vmatpush1.msra.mxu0 0.0
    %3943 = vmatprep.subr.mxu0 0.0
    %3944 = vmatpush1.msra.mxu0 0.0
    %3945 = vmatprep.subr.mxu0 0.0
    %3946 = vmatpush1.msra.mxu0 0.0
    %3947 = vmatprep.subr.mxu0 0.0
    %3948 = vmatpush1.msra.mxu0 0.0
    %3949 = vmatprep.subr.mxu0 0.0
    %3950 = vmatpush1.msra.mxu0 0.0
    %3951 = vmatprep.subr.mxu0 0.0
    %3952 = vmatpush1.msra.mxu0 0.0
    %3953 = vmatprep.subr.mxu0 0.0
    %3954 = vmatpush1.msra.mxu0 0.0
    %3955 = vmatprep.subr.mxu0 0.0
    %3956 = vmatpush1.msra.mxu0 0.0
    %3957 = vmatprep.subr.mxu0 0.0
    %3958 = vmatpush1.msra.mxu0 0.0
    %3959 = vmatprep.subr.mxu0 0.0
    %3960 = vmatpush1.msra.mxu0 0.0
    %3961 = vmatprep.subr.mxu0 0.0
    %3962 = vmatpush1.msra.mxu0 0.0
    %3963 = vmatprep.mubr.f32.mxu0 0.0
    %v3964 = vand.u32 %v3563, 4294901760
    %v3965 = vsub.f32 %v3563, %v3964
    %v3966 = vand.u32 %v3965, 4294901760
    %3967 = vmatmul.mubr.f32.gmra.mrb[0].mxu0 %v3966
    %v3968 = vpop.f32.mrb[0].mxu0
    %v3969 = vadd.f32 %v3879, %v3968
    %v3970 = vpop.f32.mrb[0].mxu0
    %3971 = vmatprep.mubr.f32.mxu0 0.0
    %v3972 = vand.u32 %v3566, 4294901760
    %v3973 = vsub.f32 %v3566, %v3972
    %v3974 = vand.u32 %v3973, 4294901760
    %3975 = vmatmul.mubr.f32.gmra.mrb[0].mxu0 %v3974
    %v3976 = vpop.f32.mrb[0].mxu0
    %v3977 = vadd.f32 %v3886, %v3976
    %v3978 = vpop.f32.mrb[0].mxu0
    %3979 = vdwg.mxu0
    %3980 = vmatprep.subr.mxu0 0.0
    %v3981 = vand.u32 %v3539, 4294901760
    %v3982 = vsub.f32 %v3539, %v3981
    %v3983 = vand.u32 %v3982, 4294901760
    %3984 = vmatpush1.msra.mxu0 %v3983
    %3985 = vmatprep.subr.mxu0 0.0
    %v3986 = vand.u32 %v3540, 4294901760
    %v3987 = vsub.f32 %v3540, %v3986
    %v3988 = vand.u32 %v3987, 4294901760
    %3989 = vmatpush1.msra.mxu0 %v3988
    %3990 = vmatprep.subr.mxu0 0.0
    %v3991 = vand.u32 %v3541, 4294901760
    %v3992 = vsub.f32 %v3541, %v3991
    %v3993 = vand.u32 %v3992, 4294901760
    %3994 = vmatpush1.msra.mxu0 %v3993
    %3995 = vmatprep.subr.mxu0 0.0
    %v3996 = vand.u32 %v3542, 4294901760
    %v3997 = vsub.f32 %v3542, %v3996
    %v3998 = vand.u32 %v3997, 4294901760
    %3999 = vmatpush1.msra.mxu0 %v3998
    %4000 = vmatprep.subr.mxu0 0.0
    %v4001 = vand.u32 %v3543, 4294901760
    %v4002 = vsub.f32 %v3543, %v4001
    %v4003 = vand.u32 %v4002, 4294901760
    %4004 = vmatpush1.msra.mxu0 %v4003
    %4005 = vmatprep.subr.mxu0 0.0
    %v4006 = vand.u32 %v3544, 4294901760
    %v4007 = vsub.f32 %v3544, %v4006
    %v4008 = vand.u32 %v4007, 4294901760
    %4009 = vmatpush1.msra.mxu0 %v4008
    %4010 = vmatprep.subr.mxu0 0.0
    %v4011 = vand.u32 %v3545, 4294901760
    %v4012 = vsub.f32 %v3545, %v4011
    %v4013 = vand.u32 %v4012, 4294901760
    %4014 = vmatpush1.msra.mxu0 %v4013
    %4015 = vmatprep.subr.mxu0 0.0
    %v4016 = vand.u32 %v3546, 4294901760
    %v4017 = vsub.f32 %v3546, %v4016
    %v4018 = vand.u32 %v4017, 4294901760
    %4019 = vmatpush1.msra.mxu0 %v4018
    %4020 = vmatprep.subr.mxu0 0.0
    %v4021 = vand.u32 %v3547, 4294901760
    %v4022 = vsub.f32 %v3547, %v4021
    %v4023 = vand.u32 %v4022, 4294901760
    %4024 = vmatpush1.msra.mxu0 %v4023
    %4025 = vmatprep.subr.mxu0 0.0
    %v4026 = vand.u32 %v3548, 4294901760
    %v4027 = vsub.f32 %v3548, %v4026
    %v4028 = vand.u32 %v4027, 4294901760
    %4029 = vmatpush1.msra.mxu0 %v4028
    %4030 = vmatprep.subr.mxu0 0.0
    %4031 = vmatpush1.msra.mxu0 0.0
    %4032 = vmatprep.subr.mxu0 0.0
    %4033 = vmatpush1.msra.mxu0 0.0
    %4034 = vmatprep.subr.mxu0 0.0
    %4035 = vmatpush1.msra.mxu0 0.0
    %4036 = vmatprep.subr.mxu0 0.0
    %4037 = vmatpush1.msra.mxu0 0.0
    %4038 = vmatprep.subr.mxu0 0.0
    %4039 = vmatpush1.msra.mxu0 0.0
    %4040 = vmatprep.subr.mxu0 0.0
    %4041 = vmatpush1.msra.mxu0 0.0
    %4042 = vmatprep.subr.mxu0 0.0
    %4043 = vmatpush1.msra.mxu0 0.0
    %4044 = vmatprep.subr.mxu0 0.0
    %4045 = vmatpush1.msra.mxu0 0.0
    %4046 = vmatprep.subr.mxu0 0.0
    %4047 = vmatpush1.msra.mxu0 0.0
    %4048 = vmatprep.subr.mxu0 0.0
    %4049 = vmatpush1.msra.mxu0 0.0
    %4050 = vmatprep.subr.mxu0 0.0
    %4051 = vmatpush1.msra.mxu0 0.0
    %4052 = vmatprep.subr.mxu0 0.0
    %4053 = vmatpush1.msra.mxu0 0.0
    %4054 = vmatprep.subr.mxu0 0.0
    %4055 = vmatpush1.msra.mxu0 0.0
    %4056 = vmatprep.subr.mxu0 0.0
    %4057 = vmatpush1.msra.mxu0 0.0
    %4058 = vmatprep.subr.mxu0 0.0
    %4059 = vmatpush1.msra.mxu0 0.0
    %4060 = vmatprep.subr.mxu0 0.0
    %4061 = vmatpush1.msra.mxu0 0.0
    %4062 = vmatprep.subr.mxu0 0.0
    %4063 = vmatpush1.msra.mxu0 0.0
    %4064 = vmatprep.subr.mxu0 0.0
    %4065 = vmatpush1.msra.mxu0 0.0
    %4066 = vmatprep.subr.mxu0 0.0
    %4067 = vmatpush1.msra.mxu0 0.0
    %4068 = vmatprep.subr.mxu0 0.0
    %4069 = vmatpush1.msra.mxu0 0.0
    %4070 = vmatprep.subr.mxu0 0.0
    %4071 = vmatpush1.msra.mxu0 0.0
    %4072 = vmatprep.subr.mxu0 0.0
    %4073 = vmatpush1.msra.mxu0 0.0
    %4074 = vmatprep.mubr.f32.mxu0 0.0
    %v4075 = vand.u32 %v3563, 4294901760
    %4076 = vmatmul.mubr.f32.gmra.mrb[0].mxu0 %v4075
    %v4077 = vpop.f32.mrb[0].mxu0
    %v4078 = vadd.f32 %v3969, %v4077
    %v4079 = vpop.f32.mrb[0].mxu0
    %4080 = vmatprep.mubr.f32.mxu0 0.0
    %v4081 = vand.u32 %v3566, 4294901760
    %4082 = vmatmul.mubr.f32.gmra.mrb[0].mxu0 %v4081
    %v4083 = vpop.f32.mrb[0].mxu0
    %v4084 = vadd.f32 %v3977, %v4083
    %v4085 = vpop.f32.mrb[0].mxu0
    %4086 = vdwg.mxu0
    %4087 = vmatprep.subr.mxu0 0.0
    %v4088 = vand.u32 %v3539, 4294901760
    %4089 = vmatpush1.msra.mxu0 %v4088
    %4090 = vmatprep.subr.mxu0 0.0
    %v4091 = vand.u32 %v3540, 4294901760
    %4092 = vmatpush1.msra.mxu0 %v4091
    %4093 = vmatprep.subr.mxu0 0.0
    %v4094 = vand.u32 %v3541, 4294901760
    %4095 = vmatpush1.msra.mxu0 %v4094
    %4096 = vmatprep.subr.mxu0 0.0
    %v4097 = vand.u32 %v3542, 4294901760
    %4098 = vmatpush1.msra.mxu0 %v4097
    %4099 = vmatprep.subr.mxu0 0.0
    %v4100 = vand.u32 %v3543, 4294901760
    %4101 = vmatpush1.msra.mxu0 %v4100
    %4102 = vmatprep.subr.mxu0 0.0
    %v4103 = vand.u32 %v3544, 4294901760
    %4104 = vmatpush1.msra.mxu0 %v4103
    %4105 = vmatprep.subr.mxu0 0.0
    %v4106 = vand.u32 %v3545, 4294901760
    %4107 = vmatpush1.msra.mxu0 %v4106
    %4108 = vmatprep.subr.mxu0 0.0
    %v4109 = vand.u32 %v3546, 4294901760
    %4110 = vmatpush1.msra.mxu0 %v4109
    %4111 = vmatprep.subr.mxu0 0.0
    %v4112 = vand.u32 %v3547, 4294901760
    %4113 = vmatpush1.msra.mxu0 %v4112
    %4114 = vmatprep.subr.mxu0 0.0
    %v4115 = vand.u32 %v3548, 4294901760
    %4116 = vmatpush1.msra.mxu0 %v4115
    %4117 = vmatprep.subr.mxu0 0.0
    %4118 = vmatpush1.msra.mxu0 0.0
    %4119 = vmatprep.subr.mxu0 0.0
    %4120 = vmatpush1.msra.mxu0 0.0
    %4121 = vmatprep.subr.mxu0 0.0
    %4122 = vmatpush1.msra.mxu0 0.0
    %4123 = vmatprep.subr.mxu0 0.0
    %4124 = vmatpush1.msra.mxu0 0.0
    %4125 = vmatprep.subr.mxu0 0.0
    %4126 = vmatpush1.msra.mxu0 0.0
    %4127 = vmatprep.subr.mxu0 0.0
    %4128 = vmatpush1.msra.mxu0 0.0
    %4129 = vmatprep.subr.mxu0 0.0
    %4130 = vmatpush1.msra.mxu0 0.0
    %4131 = vmatprep.subr.mxu0 0.0
    %4132 = vmatpush1.msra.mxu0 0.0
    %4133 = vmatprep.subr.mxu0 0.0
    %4134 = vmatpush1.msra.mxu0 0.0
    %4135 = vmatprep.subr.mxu0 0.0
    %4136 = vmatpush1.msra.mxu0 0.0
    %4137 = vmatprep.subr.mxu0 0.0
    %4138 = vmatpush1.msra.mxu0 0.0
    %4139 = vmatprep.subr.mxu0 0.0
    %4140 = vmatpush1.msra.mxu0 0.0
    %4141 = vmatprep.subr.mxu0 0.0
    %4142 = vmatpush1.msra.mxu0 0.0
    %4143 = vmatprep.subr.mxu0 0.0
    %4144 = vmatpush1.msra.mxu0 0.0
    %4145 = vmatprep.subr.mxu0 0.0
    %4146 = vmatpush1.msra.mxu0 0.0
    %4147 = vmatprep.subr.mxu0 0.0
    %4148 = vmatpush1.msra.mxu0 0.0
    %4149 = vmatprep.subr.mxu0 0.0
    %4150 = vmatpush1.msra.mxu0 0.0
    %4151 = vmatprep.subr.mxu0 0.0
    %4152 = vmatpush1.msra.mxu0 0.0
    %4153 = vmatprep.subr.mxu0 0.0
    %4154 = vmatpush1.msra.mxu0 0.0
    %4155 = vmatprep.subr.mxu0 0.0
    %4156 = vmatpush1.msra.mxu0 0.0
    %4157 = vmatprep.subr.mxu0 0.0
    %4158 = vmatpush1.msra.mxu0 0.0
    %4159 = vmatprep.subr.mxu0 0.0
    %4160 = vmatpush1.msra.mxu0 0.0
    %4161 = vmatprep.mubr.f32.mxu0 0.0
    %v4162 = vand.u32 %v3563, 4294901760
    %4163 = vmatmul.mubr.f32.gmra.mrb[0].mxu0 %v4162
    %v4164 = vpop.f32.mrb[0].mxu0
    %v4165 = vadd.f32 %v4078, %v4164
    %v4166 = vpop.f32.mrb[0].mxu0
    %4167 = vmatprep.mubr.f32.mxu0 0.0
    %v4168 = vand.u32 %v3566, 4294901760
    %4169 = vmatmul.mubr.f32.gmra.mrb[0].mxu0 %v4168
    %v4170 = vpop.f32.mrb[0].mxu0
    %v4171 = vadd.f32 %v4084, %v4170
    %v4172 = vpop.f32.mrb[0].mxu0
    %4173 = vdwg.mxu0
    %vm4174 = vcmask 123904
    %v4175 = vsel %vm4174, %v2374, 0.0
    %4176 = vadd.xlane.f32.xlu0 %v4175
    %v4177 = vpop.xlane.xlu0 %4176
    %v4178 = vrcp.pop 16.0
    %v4179 = vmul.f32 %v4177, %v4178
    %s4180 = sld [smem:[#allocation2 + $0x3]]
    %v4181 = vstv %s4180
    %v4182 = vmul.f32 %v4179, %v4181
    %v4183 = vsel %vm4174, %v2926, 0.0
    %4184 = vadd.xlane.f32.xlu0 %v4183
    %v4185 = vpop.xlane.xlu0 %4184
    %v4186 = vmul.f32 %v4185, %v4178
    %s4187 = sld [smem:[#allocation2 + $0x4]]
    %v4188 = vstv %s4187
    %v4189 = vmul.f32 %v4186, %v4188
    %v4190 = vadd.f32 %v4182, %v4189
    %v4191 = vmul.f32 %v4190, 0.5
    %v4192 = vmul.f32 %v4190, 0.70710677
    %vm4193 = vcmp.ge.f32.partialorder %v4192, 0.0
    %v4194 = vsel %vm4193, 1.0, -1.0
    %v4195 = vand.u32 2147483647, %v4192
    %v4196 = vmul.f32 %v4195, 0.3275911
    %v4197 = vadd.f32 %v4196, 1.0
    %v4198 = vrcp.pop %v4197
    %v4199 = vmul.f32 1.0, %v4198
    %v4200 = vmul.f32 %v4199, 1.0614054
    %v4201 = vadd.f32 %v4200, -1.4531521
    %v4202 = vmul.f32 %v4201, %v4199
    %v4203 = vadd.f32 %v4202, 1.4214138
    %v4204 = vmul.f32 %v4203, %v4199
    %v4205 = vadd.f32 %v4204, -0.28449672
    %v4206 = vmul.f32 %v4205, %v4199
    %v4207 = vadd.f32 %v4206, 0.2548296
    %v4208 = vmul.f32 %v4207, %v4199
    %v4209 = vsub.f32 0.0, %v4195
    %v4210 = vmul.f32 %v4209, %v4195
    %v4211 = vmul.f32 %v4210, 1.442695
    %v4212 = vpow.pop %v4211
    %v4213 = vmul.f32 %v4208, %v4212
    %v4214 = vsub.f32 1.0, %v4213
    %v4215 = vmul.f32 %v4194, %v4214
    %v4216 = vadd.f32 %v4215, 1.0
    %v4217 = vmul.f32 %v4191, %v4216
    %s4218 = sld [smem:[#allocation2 + $0x5]]
    %v4219 = vstv %s4218
    %v4220 = vmul.f32 %v4217, %v4219
    %v4221 = vxor.u32 %v4220, 2147483648
    %v4222 = vmul.f32 %v4221, 1.442695
    %v4223 = vpow.pop %v4222
    %v4224 = vadd.f32 %v4223, 1.0
    %v4225 = vrcp.pop %v4224
    %v4226 = vmul.f32 1.0, %v4225
    %s4227 = sld [smem:[#allocation2 + $0x6]]
    %v4228 = vstv %s4227
    %v4229 = vmul.f32 %v4217, %v4228
    %v4230 = vxor.u32 %v4229, 2147483648
    %v4231 = vmul.f32 %v4230, 1.442695
    %v4232 = vpow.pop %v4231
    %v4233 = vadd.f32 %v4232, 1.0
    %v4234 = vrcp.pop %v4233
    %v4235 = vmul.f32 1.0, %v4234
    %v4237 = vrot.slane %v2926, 6
    %vm4239 = vcmask 1041408
    %v4240 = vsel %vm4239, %v2374, %v4237
    %v4241 = vmul.f32 %v4240, %v4240
    %vm4242 = vcmask 125952
    %v4243 = vsel %vm4242, %v4241, 0.0
    %4244 = vadd.xlane.f32.xlu0 %v4243
    %v4245 = vpop.xlane.xlu0 %4244
    %v4246 = vrsqrt.pop %v4245
    %v4247 = vmul.f32 %v3528, %v3528
    %v4248 = vmul.f32 %v3534, %v3534
    %v4249 = vsel %vm3561, %v4247, 0.0
    %v4250 = vsel %vm3561, %v4248, 0.0
    %v4251 = vadd.f32 %v4249, %v4250
    %v4252 = vrot.slane %v4251, 4
    %v4253 = vadd.f32 %v4251, %v4252
    %v4254 = vrot.slane %v4253, 2
    %v4255 = vadd.f32 %v4253, %v4254
    %v4256 = vrot.slane %v4255, 1
    %v4257 = vadd.f32 %v4255, %v4256
    %v4258 = vrsqrt.pop %v4257
    %v4259 = vmul.f32 %v4165, %v4165
    %v4260 = vmul.f32 %v4171, %v4171
    %v4261 = vsel %vm3561, %v4259, 0.0
    %v4262 = vsel %vm3561, %v4260, 0.0
    %v4263 = vadd.f32 %v4261, %v4262
    %v4264 = vrot.slane %v4263, 4
    %v4265 = vadd.f32 %v4263, %v4264
    %v4266 = vrot.slane %v4265, 2
    %v4267 = vadd.f32 %v4265, %v4266
    %v4268 = vrot.slane %v4267, 1
    %v4269 = vadd.f32 %v4267, %v4268
    %v4270 = vrsqrt.pop %v4269
    %v4272 = vsel %vm86, %v4240, 0
    %4274 = vmatprep.subr.mxu0 0.0
    %v4275 = vand.u32 %v3528, 4294901760
    %4276 = vmatpush1.msra.mxu0 %v4275
    %4277 = vmatprep.subr.mxu0 0.0
    %v4278 = vand.u32 %v3534, 4294901760
    %4279 = vmatpush1.msra.mxu0 %v4278
    %4280 = vmatprep.subr.mxu0 0.0
    %4281 = vmatpush1.msra.mxu0 0.0
    %4282 = vmatprep.subr.mxu0 0.0
    %4283 = vmatpush1.msra.mxu0 0.0
    %4284 = vmatprep.subr.mxu0 0.0
    %4285 = vmatpush1.msra.mxu0 0.0
    %4286 = vmatprep.subr.mxu0 0.0
    %4287 = vmatpush1.msra.mxu0 0.0
    %4288 = vmatprep.subr.mxu0 0.0
    %4289 = vmatpush1.msra.mxu0 0.0
    %4290 = vmatprep.subr.mxu0 0.0
    %4291 = vmatpush1.msra.mxu0 0.0
    %4292 = vmatprep.subr.mxu0 0.0
    %4293 = vmatpush1.msra.mxu0 0.0
    %4294 = vmatprep.subr.mxu0 0.0
    %4295 = vmatpush1.msra.mxu0 0.0
    %4296 = vmatprep.subr.mxu0 0.0
    %4297 = vmatpush1.msra.mxu0 0.0
    %4298 = vmatprep.subr.mxu0 0.0
    %4299 = vmatpush1.msra.mxu0 0.0
    %4300 = vmatprep.subr.mxu0 0.0
    %4301 = vmatpush1.msra.mxu0 0.0
    %4302 = vmatprep.subr.mxu0 0.0
    %4303 = vmatpush1.msra.mxu0 0.0
    %4304 = vmatprep.subr.mxu0 0.0
    %4305 = vmatpush1.msra.mxu0 0.0
    %4306 = vmatprep.subr.mxu0 0.0
    %4307 = vmatpush1.msra.mxu0 0.0
    %4308 = vmatprep.subr.mxu0 0.0
    %4309 = vmatpush1.msra.mxu0 0.0
    %4310 = vmatprep.subr.mxu0 0.0
    %4311 = vmatpush1.msra.mxu0 0.0
    %4312 = vmatprep.subr.mxu0 0.0
    %4313 = vmatpush1.msra.mxu0 0.0
    %4314 = vmatprep.subr.mxu0 0.0
    %4315 = vmatpush1.msra.mxu0 0.0
    %4316 = vmatprep.subr.mxu0 0.0
    %4317 = vmatpush1.msra.mxu0 0.0
    %4318 = vmatprep.subr.mxu0 0.0
    %4319 = vmatpush1.msra.mxu0 0.0
    %4320 = vmatprep.subr.mxu0 0.0
    %4321 = vmatpush1.msra.mxu0 0.0
    %4322 = vmatprep.subr.mxu0 0.0
    %4323 = vmatpush1.msra.mxu0 0.0
    %4324 = vmatprep.subr.mxu0 0.0
    %4325 = vmatpush1.msra.mxu0 0.0
    %4326 = vmatprep.subr.mxu0 0.0
    %4327 = vmatpush1.msra.mxu0 0.0
    %4328 = vmatprep.subr.mxu0 0.0
    %4329 = vmatpush1.msra.mxu0 0.0
    %4330 = vmatprep.subr.mxu0 0.0
    %4331 = vmatpush1.msra.mxu0 0.0
    %4332 = vmatprep.subr.mxu0 0.0
    %4333 = vmatpush1.msra.mxu0 0.0
    %4334 = vmatprep.subr.mxu0 0.0
    %4335 = vmatpush1.msra.mxu0 0.0
    %4336 = vmatprep.subr.mxu0 0.0
    %4337 = vmatpush1.msra.mxu0 0.0
    %4338 = vmatprep.subr.mxu0 0.0
    %4339 = vmatpush1.msra.mxu0 0.0
    %4340 = vmatprep.mubr.f32.mxu0 0.0
    %v4341 = vand.u32 %v4272, 4294901760
    %v4342 = vsub.f32 %v4272, %v4341
    %v4343 = vand.u32 %v4342, 4294901760
    %v4344 = vsub.f32 %v4342, %v4343
    %v4345 = vand.u32 %v4344, 4294901760
    %4346 = vmatmul.mubr.f32.gmra.mrb[0].mxu0 %v4345
    %v4347 = vpop.f32.mrb[0].mxu0
    %v4348 = vadd.f32 0.0, %v4347
    %v4349 = vpop.f32.mrb[0].mxu0
    %4350 = vdwg.mxu0
    %4351 = vmatprep.subr.mxu0 0.0
    %v4352 = vand.u32 %v3528, 4294901760
    %v4353 = vsub.f32 %v3528, %v4352
    %v4354 = vand.u32 %v4353, 4294901760
    %v4355 = vsub.f32 %v4353, %v4354
    %v4356 = vand.u32 %v4355, 4294901760
    %4357 = vmatpush1.msra.mxu0 %v4356
    %4358 = vmatprep.subr.mxu0 0.0
    %v4359 = vand.u32 %v3534, 4294901760
    %v4360 = vsub.f32 %v3534, %v4359
    %v4361 = vand.u32 %v4360, 4294901760
    %v4362 = vsub.f32 %v4360, %v4361
    %v4363 = vand.u32 %v4362, 4294901760
    %4364 = vmatpush1.msra.mxu0 %v4363
    %4365 = vmatprep.subr.mxu0 0.0
    %4366 = vmatpush1.msra.mxu0 0.0
    %4367 = vmatprep.subr.mxu0 0.0
    %4368 = vmatpush1.msra.mxu0 0.0
    %4369 = vmatprep.subr.mxu0 0.0
    %4370 = vmatpush1.msra.mxu0 0.0
    %4371 = vmatprep.subr.mxu0 0.0
    %4372 = vmatpush1.msra.mxu0 0.0
    %4373 = vmatprep.subr.mxu0 0.0
    %4374 = vmatpush1.msra.mxu0 0.0
    %4375 = vmatprep.subr.mxu0 0.0
    %4376 = vmatpush1.msra.mxu0 0.0
    %4377 = vmatprep.subr.mxu0 0.0
    %4378 = vmatpush1.msra.mxu0 0.0
    %4379 = vmatprep.subr.mxu0 0.0
    %4380 = vmatpush1.msra.mxu0 0.0
    %4381 = vmatprep.subr.mxu0 0.0
    %4382 = vmatpush1.msra.mxu0 0.0
    %4383 = vmatprep.subr.mxu0 0.0
    %4384 = vmatpush1.msra.mxu0 0.0
    %4385 = vmatprep.subr.mxu0 0.0
    %4386 = vmatpush1.msra.mxu0 0.0
    %4387 = vmatprep.subr.mxu0 0.0
    %4388 = vmatpush1.msra.mxu0 0.0
    %4389 = vmatprep.subr.mxu0 0.0
    %4390 = vmatpush1.msra.mxu0 0.0
    %4391 = vmatprep.subr.mxu0 0.0
    %4392 = vmatpush1.msra.mxu0 0.0
    %4393 = vmatprep.subr.mxu0 0.0
    %4394 = vmatpush1.msra.mxu0 0.0
    %4395 = vmatprep.subr.mxu0 0.0
    %4396 = vmatpush1.msra.mxu0 0.0
    %4397 = vmatprep.subr.mxu0 0.0
    %4398 = vmatpush1.msra.mxu0 0.0
    %4399 = vmatprep.subr.mxu0 0.0
    %4400 = vmatpush1.msra.mxu0 0.0
    %4401 = vmatprep.subr.mxu0 0.0
    %4402 = vmatpush1.msra.mxu0 0.0
    %4403 = vmatprep.subr.mxu0 0.0
    %4404 = vmatpush1.msra.mxu0 0.0
    %4405 = vmatprep.subr.mxu0 0.0
    %4406 = vmatpush1.msra.mxu0 0.0
    %4407 = vmatprep.subr.mxu0 0.0
    %4408 = vmatpush1.msra.mxu0 0.0
    %4409 = vmatprep.subr.mxu0 0.0
    %4410 = vmatpush1.msra.mxu0 0.0
    %4411 = vmatprep.subr.mxu0 0.0
    %4412 = vmatpush1.msra.mxu0 0.0
    %4413 = vmatprep.subr.mxu0 0.0
    %4414 = vmatpush1.msra.mxu0 0.0
    %4415 = vmatprep.subr.mxu0 0.0
    %4416 = vmatpush1.msra.mxu0 0.0
    %4417 = vmatprep.subr.mxu0 0.0
    %4418 = vmatpush1.msra.mxu0 0.0
    %4419 = vmatprep.subr.mxu0 0.0
    %4420 = vmatpush1.msra.mxu0 0.0
    %4421 = vmatprep.subr.mxu0 0.0
    %4422 = vmatpush1.msra.mxu0 0.0
    %4423 = vmatprep.subr.mxu0 0.0
    %4424 = vmatpush1.msra.mxu0 0.0
    %4425 = vmatprep.mubr.f32.mxu0 0.0
    %v4426 = vand.u32 %v4272, 4294901760
    %4427 = vmatmul.mubr.f32.gmra.mrb[0].mxu0 %v4426
    %v4428 = vpop.f32.mrb[0].mxu0
    %v4429 = vadd.f32 %v4348, %v4428
    %v4430 = vpop.f32.mrb[0].mxu0
    %4431 = vdwg.mxu0
    %4432 = vmatprep.subr.mxu0 0.0
    %v4433 = vand.u32 %v3528, 4294901760
    %v4434 = vsub.f32 %v3528, %v4433
    %4435 = vmatpush1.msra.mxu0 %v4434
    %4436 = vmatprep.subr.mxu0 0.0
    %v4437 = vand.u32 %v3534, 4294901760
    %v4438 = vsub.f32 %v3534, %v4437
    %4439 = vmatpush1.msra.mxu0 %v4438
    %4440 = vmatprep.subr.mxu0 0.0
    %4441 = vmatpush1.msra.mxu0 0.0
    %4442 = vmatprep.subr.mxu0 0.0
    %4443 = vmatpush1.msra.mxu0 0.0
    %4444 = vmatprep.subr.mxu0 0.0
    %4445 = vmatpush1.msra.mxu0 0.0
    %4446 = vmatprep.subr.mxu0 0.0
    %4447 = vmatpush1.msra.mxu0 0.0
    %4448 = vmatprep.subr.mxu0 0.0
    %4449 = vmatpush1.msra.mxu0 0.0
    %4450 = vmatprep.subr.mxu0 0.0
    %4451 = vmatpush1.msra.mxu0 0.0
    %4452 = vmatprep.subr.mxu0 0.0
    %4453 = vmatpush1.msra.mxu0 0.0
    %4454 = vmatprep.subr.mxu0 0.0
    %4455 = vmatpush1.msra.mxu0 0.0
    %4456 = vmatprep.subr.mxu0 0.0
    %4457 = vmatpush1.msra.mxu0 0.0
    %4458 = vmatprep.subr.mxu0 0.0
    %4459 = vmatpush1.msra.mxu0 0.0
    %4460 = vmatprep.subr.mxu0 0.0
    %4461 = vmatpush1.msra.mxu0 0.0
    %4462 = vmatprep.subr.mxu0 0.0
    %4463 = vmatpush1.msra.mxu0 0.0
    %4464 = vmatprep.subr.mxu0 0.0
    %4465 = vmatpush1.msra.mxu0 0.0
    %4466 = vmatprep.subr.mxu0 0.0
    %4467 = vmatpush1.msra.mxu0 0.0
    %4468 = vmatprep.subr.mxu0 0.0
    %4469 = vmatpush1.msra.mxu0 0.0
    %4470 = vmatprep.subr.mxu0 0.0
    %4471 = vmatpush1.msra.mxu0 0.0
    %4472 = vmatprep.subr.mxu0 0.0
    %4473 = vmatpush1.msra.mxu0 0.0
    %4474 = vmatprep.subr.mxu0 0.0
    %4475 = vmatpush1.msra.mxu0 0.0
    %4476 = vmatprep.subr.mxu0 0.0
    %4477 = vmatpush1.msra.mxu0 0.0
    %4478 = vmatprep.subr.mxu0 0.0
    %4479 = vmatpush1.msra.mxu0 0.0
    %4480 = vmatprep.subr.mxu0 0.0
    %4481 = vmatpush1.msra.mxu0 0.0
    %4482 = vmatprep.subr.mxu0 0.0
    %4483 = vmatpush1.msra.mxu0 0.0
    %4484 = vmatprep.subr.mxu0 0.0
    %4485 = vmatpush1.msra.mxu0 0.0
    %4486 = vmatprep.subr.mxu0 0.0
    %4487 = vmatpush1.msra.mxu0 0.0
    %4488 = vmatprep.subr.mxu0 0.0
    %4489 = vmatpush1.msra.mxu0 0.0
    %4490 = vmatprep.subr.mxu0 0.0
    %4491 = vmatpush1.msra.mxu0 0.0
    %4492 = vmatprep.subr.mxu0 0.0
    %4493 = vmatpush1.msra.mxu0 0.0
    %4494 = vmatprep.subr.mxu0 0.0
    %4495 = vmatpush1.msra.mxu0 0.0
    %4496 = vmatprep.subr.mxu0 0.0
    %4497 = vmatpush1.msra.mxu0 0.0
    %4498 = vmatprep.subr.mxu0 0.0
    %4499 = vmatpush1.msra.mxu0 0.0
    %4500 = vmatprep.mubr.f32.mxu0 0.0
    %v4501 = vand.u32 %v4272, 4294901760
    %v4502 = vsub.f32 %v4272, %v4501
    %4503 = vmatmul.mubr.f32.gmra.mrb[0].mxu0 %v4502
    %v4504 = vpop.f32.mrb[0].mxu0
    %v4505 = vadd.f32 %v4429, %v4504
    %v4506 = vpop.f32.mrb[0].mxu0
    %4507 = vdwg.mxu0
    %4508 = vmatprep.subr.mxu0 0.0
    %v4509 = vand.u32 %v3528, 4294901760
    %4510 = vmatpush1.msra.mxu0 %v4509
    %4511 = vmatprep.subr.mxu0 0.0
    %v4512 = vand.u32 %v3534, 4294901760
    %4513 = vmatpush1.msra.mxu0 %v4512
    %4514 = vmatprep.subr.mxu0 0.0
    %4515 = vmatpush1.msra.mxu0 0.0
    %4516 = vmatprep.subr.mxu0 0.0
    %4517 = vmatpush1.msra.mxu0 0.0
    %4518 = vmatprep.subr.mxu0 0.0
    %4519 = vmatpush1.msra.mxu0 0.0
    %4520 = vmatprep.subr.mxu0 0.0
    %4521 = vmatpush1.msra.mxu0 0.0
    %4522 = vmatprep.subr.mxu0 0.0
    %4523 = vmatpush1.msra.mxu0 0.0
    %4524 = vmatprep.subr.mxu0 0.0
    %4525 = vmatpush1.msra.mxu0 0.0
    %4526 = vmatprep.subr.mxu0 0.0
    %4527 = vmatpush1.msra.mxu0 0.0
    %4528 = vmatprep.subr.mxu0 0.0
    %4529 = vmatpush1.msra.mxu0 0.0
    %4530 = vmatprep.subr.mxu0 0.0
    %4531 = vmatpush1.msra.mxu0 0.0
    %4532 = vmatprep.subr.mxu0 0.0
    %4533 = vmatpush1.msra.mxu0 0.0
    %4534 = vmatprep.subr.mxu0 0.0
    %4535 = vmatpush1.msra.mxu0 0.0
    %4536 = vmatprep.subr.mxu0 0.0
    %4537 = vmatpush1.msra.mxu0 0.0
    %4538 = vmatprep.subr.mxu0 0.0
    %4539 = vmatpush1.msra.mxu0 0.0
    %4540 = vmatprep.subr.mxu0 0.0
    %4541 = vmatpush1.msra.mxu0 0.0
    %4542 = vmatprep.subr.mxu0 0.0
    %4543 = vmatpush1.msra.mxu0 0.0
    %4544 = vmatprep.subr.mxu0 0.0
    %4545 = vmatpush1.msra.mxu0 0.0
    %4546 = vmatprep.subr.mxu0 0.0
    %4547 = vmatpush1.msra.mxu0 0.0
    %4548 = vmatprep.subr.mxu0 0.0
    %4549 = vmatpush1.msra.mxu0 0.0
    %4550 = vmatprep.subr.mxu0 0.0
    %4551 = vmatpush1.msra.mxu0 0.0
    %4552 = vmatprep.subr.mxu0 0.0
    %4553 = vmatpush1.msra.mxu0 0.0
    %4554 = vmatprep.subr.mxu0 0.0
    %4555 = vmatpush1.msra.mxu0 0.0
    %4556 = vmatprep.subr.mxu0 0.0
    %4557 = vmatpush1.msra.mxu0 0.0
    %4558 = vmatprep.subr.mxu0 0.0
    %4559 = vmatpush1.msra.mxu0 0.0
    %4560 = vmatprep.subr.mxu0 0.0
    %4561 = vmatpush1.msra.mxu0 0.0
    %4562 = vmatprep.subr.mxu0 0.0
    %4563 = vmatpush1.msra.mxu0 0.0
    %4564 = vmatprep.subr.mxu0 0.0
    %4565 = vmatpush1.msra.mxu0 0.0
    %4566 = vmatprep.subr.mxu0 0.0
    %4567 = vmatpush1.msra.mxu0 0.0
    %4568 = vmatprep.subr.mxu0 0.0
    %4569 = vmatpush1.msra.mxu0 0.0
    %4570 = vmatprep.subr.mxu0 0.0
    %4571 = vmatpush1.msra.mxu0 0.0
    %4572 = vmatprep.subr.mxu0 0.0
    %4573 = vmatpush1.msra.mxu0 0.0
    %4574 = vmatprep.mubr.f32.mxu0 0.0
    %v4575 = vand.u32 %v4272, 4294901760
    %v4576 = vsub.f32 %v4272, %v4575
    %v4577 = vand.u32 %v4576, 4294901760
    %4578 = vmatmul.mubr.f32.gmra.mrb[0].mxu0 %v4577
    %v4579 = vpop.f32.mrb[0].mxu0
    %v4580 = vadd.f32 %v4505, %v4579
    %v4581 = vpop.f32.mrb[0].mxu0
    %4582 = vdwg.mxu0
    %4583 = vmatprep.subr.mxu0 0.0
    %v4584 = vand.u32 %v3528, 4294901760
    %v4585 = vsub.f32 %v3528, %v4584
    %v4586 = vand.u32 %v4585, 4294901760
    %4587 = vmatpush1.msra.mxu0 %v4586
    %4588 = vmatprep.subr.mxu0 0.0
    %v4589 = vand.u32 %v3534, 4294901760
    %v4590 = vsub.f32 %v3534, %v4589
    %v4591 = vand.u32 %v4590, 4294901760
    %4592 = vmatpush1.msra.mxu0 %v4591
    %4593 = vmatprep.subr.mxu0 0.0
    %4594 = vmatpush1.msra.mxu0 0.0
    %4595 = vmatprep.subr.mxu0 0.0
    %4596 = vmatpush1.msra.mxu0 0.0
    %4597 = vmatprep.subr.mxu0 0.0
    %4598 = vmatpush1.msra.mxu0 0.0
    %4599 = vmatprep.subr.mxu0 0.0
    %4600 = vmatpush1.msra.mxu0 0.0
    %4601 = vmatprep.subr.mxu0 0.0
    %4602 = vmatpush1.msra.mxu0 0.0
    %4603 = vmatprep.subr.mxu0 0.0
    %4604 = vmatpush1.msra.mxu0 0.0
    %4605 = vmatprep.subr.mxu0 0.0
    %4606 = vmatpush1.msra.mxu0 0.0
    %4607 = vmatprep.subr.mxu0 0.0
    %4608 = vmatpush1.msra.mxu0 0.0
    %4609 = vmatprep.subr.mxu0 0.0
    %4610 = vmatpush1.msra.mxu0 0.0
    %4611 = vmatprep.subr.mxu0 0.0
    %4612 = vmatpush1.msra.mxu0 0.0
    %4613 = vmatprep.subr.mxu0 0.0
    %4614 = vmatpush1.msra.mxu0 0.0
    %4615 = vmatprep.subr.mxu0 0.0
    %4616 = vmatpush1.msra.mxu0 0.0
    %4617 = vmatprep.subr.mxu0 0.0
    %4618 = vmatpush1.msra.mxu0 0.0
    %4619 = vmatprep.subr.mxu0 0.0
    %4620 = vmatpush1.msra.mxu0 0.0
    %4621 = vmatprep.subr.mxu0 0.0
    %4622 = vmatpush1.msra.mxu0 0.0
    %4623 = vmatprep.subr.mxu0 0.0
    %4624 = vmatpush1.msra.mxu0 0.0
    %4625 = vmatprep.subr.mxu0 0.0
    %4626 = vmatpush1.msra.mxu0 0.0
    %4627 = vmatprep.subr.mxu0 0.0
    %4628 = vmatpush1.msra.mxu0 0.0
    %4629 = vmatprep.subr.mxu0 0.0
    %4630 = vmatpush1.msra.mxu0 0.0
    %4631 = vmatprep.subr.mxu0 0.0
    %4632 = vmatpush1.msra.mxu0 0.0
    %4633 = vmatprep.subr.mxu0 0.0
    %4634 = vmatpush1.msra.mxu0 0.0
    %4635 = vmatprep.subr.mxu0 0.0
    %4636 = vmatpush1.msra.mxu0 0.0
    %4637 = vmatprep.subr.mxu0 0.0
    %4638 = vmatpush1.msra.mxu0 0.0
    %4639 = vmatprep.subr.mxu0 0.0
    %4640 = vmatpush1.msra.mxu0 0.0
    %4641 = vmatprep.subr.mxu0 0.0
    %4642 = vmatpush1.msra.mxu0 0.0
    %4643 = vmatprep.subr.mxu0 0.0
    %4644 = vmatpush1.msra.mxu0 0.0
    %4645 = vmatprep.subr.mxu0 0.0
    %4646 = vmatpush1.msra.mxu0 0.0
    %4647 = vmatprep.subr.mxu0 0.0
    %4648 = vmatpush1.msra.mxu0 0.0
    %4649 = vmatprep.subr.mxu0 0.0
    %4650 = vmatpush1.msra.mxu0 0.0
    %4651 = vmatprep.subr.mxu0 0.0
    %4652 = vmatpush1.msra.mxu0 0.0
    %4653 = vmatprep.mubr.f32.mxu0 0.0
    %v4654 = vand.u32 %v4272, 4294901760
    %4655 = vmatmul.mubr.f32.gmra.mrb[0].mxu0 %v4654
    %v4656 = vpop.f32.mrb[0].mxu0
    %v4657 = vadd.f32 %v4580, %v4656
    %v4658 = vpop.f32.mrb[0].mxu0
    %4659 = vdwg.mxu0
    %4660 = vmatprep.subr.mxu0 0.0
    %v4661 = vand.u32 %v3528, 4294901760
    %4662 = vmatpush1.msra.mxu0 %v4661
    %4663 = vmatprep.subr.mxu0 0.0
    %v4664 = vand.u32 %v3534, 4294901760
    %4665 = vmatpush1.msra.mxu0 %v4664
    %4666 = vmatprep.subr.mxu0 0.0
    %4667 = vmatpush1.msra.mxu0 0.0
    %4668 = vmatprep.subr.mxu0 0.0
    %4669 = vmatpush1.msra.mxu0 0.0
    %4670 = vmatprep.subr.mxu0 0.0
    %4671 = vmatpush1.msra.mxu0 0.0
    %4672 = vmatprep.subr.mxu0 0.0
    %4673 = vmatpush1.msra.mxu0 0.0
    %4674 = vmatprep.subr.mxu0 0.0
    %4675 = vmatpush1.msra.mxu0 0.0
    %4676 = vmatprep.subr.mxu0 0.0
    %4677 = vmatpush1.msra.mxu0 0.0
    %4678 = vmatprep.subr.mxu0 0.0
    %4679 = vmatpush1.msra.mxu0 0.0
    %4680 = vmatprep.subr.mxu0 0.0
    %4681 = vmatpush1.msra.mxu0 0.0
    %4682 = vmatprep.subr.mxu0 0.0
    %4683 = vmatpush1.msra.mxu0 0.0
    %4684 = vmatprep.subr.mxu0 0.0
    %4685 = vmatpush1.msra.mxu0 0.0
    %4686 = vmatprep.subr.mxu0 0.0
    %4687 = vmatpush1.msra.mxu0 0.0
    %4688 = vmatprep.subr.mxu0 0.0
    %4689 = vmatpush1.msra.mxu0 0.0
    %4690 = vmatprep.subr.mxu0 0.0
    %4691 = vmatpush1.msra.mxu0 0.0
    %4692 = vmatprep.subr.mxu0 0.0
    %4693 = vmatpush1.msra.mxu0 0.0
    %4694 = vmatprep.subr.mxu0 0.0
    %4695 = vmatpush1.msra.mxu0 0.0
    %4696 = vmatprep.subr.mxu0 0.0
    %4697 = vmatpush1.msra.mxu0 0.0
    %4698 = vmatprep.subr.mxu0 0.0
    %4699 = vmatpush1.msra.mxu0 0.0
    %4700 = vmatprep.subr.mxu0 0.0
    %4701 = vmatpush1.msra.mxu0 0.0
    %4702 = vmatprep.subr.mxu0 0.0
    %4703 = vmatpush1.msra.mxu0 0.0
    %4704 = vmatprep.subr.mxu0 0.0
    %4705 = vmatpush1.msra.mxu0 0.0
    %4706 = vmatprep.subr.mxu0 0.0
    %4707 = vmatpush1.msra.mxu0 0.0
    %4708 = vmatprep.subr.mxu0 0.0
    %4709 = vmatpush1.msra.mxu0 0.0
    %4710 = vmatprep.subr.mxu0 0.0
    %4711 = vmatpush1.msra.mxu0 0.0
    %4712 = vmatprep.subr.mxu0 0.0
    %4713 = vmatpush1.msra.mxu0 0.0
    %4714 = vmatprep.subr.mxu0 0.0
    %4715 = vmatpush1.msra.mxu0 0.0
    %4716 = vmatprep.subr.mxu0 0.0
    %4717 = vmatpush1.msra.mxu0 0.0
    %4718 = vmatprep.subr.mxu0 0.0
    %4719 = vmatpush1.msra.mxu0 0.0
    %4720 = vmatprep.subr.mxu0 0.0
    %4721 = vmatpush1.msra.mxu0 0.0
    %4722 = vmatprep.subr.mxu0 0.0
    %4723 = vmatpush1.msra.mxu0 0.0
    %4724 = vmatprep.subr.mxu0 0.0
    %4725 = vmatpush1.msra.mxu0 0.0
    %4726 = vmatprep.mubr.f32.mxu0 0.0
    %v4727 = vand.u32 %v4272, 4294901760
    %4728 = vmatmul.mubr.f32.gmra.mrb[0].mxu0 %v4727
    %v4729 = vpop.f32.mrb[0].mxu0
    %v4730 = vadd.f32 %v4657, %v4729
    %v4731 = vpop.f32.mrb[0].mxu0
    %4732 = vdwg.mxu0
    %4733 = vmatprep.subr.mxu0 0.0
    %v4734 = vand.u32 %v4165, 4294901760
    %4735 = vmatpush1.msra.mxu0 %v4734
    %4736 = vmatprep.subr.mxu0 0.0
    %v4737 = vand.u32 %v4171, 4294901760
    %4738 = vmatpush1.msra.mxu0 %v4737
    %4739 = vmatprep.subr.mxu0 0.0
    %4740 = vmatpush1.msra.mxu0 0.0
    %4741 = vmatprep.subr.mxu0 0.0
    %4742 = vmatpush1.msra.mxu0 0.0
    %4743 = vmatprep.subr.mxu0 0.0
    %4744 = vmatpush1.msra.mxu0 0.0
    %4745 = vmatprep.subr.mxu0 0.0
    %4746 = vmatpush1.msra.mxu0 0.0
    %4747 = vmatprep.subr.mxu0 0.0
    %4748 = vmatpush1.msra.mxu0 0.0
    %4749 = vmatprep.subr.mxu0 0.0
    %4750 = vmatpush1.msra.mxu0 0.0
    %4751 = vmatprep.subr.mxu0 0.0
    %4752 = vmatpush1.msra.mxu0 0.0
    %4753 = vmatprep.subr.mxu0 0.0
    %4754 = vmatpush1.msra.mxu0 0.0
    %4755 = vmatprep.subr.mxu0 0.0
    %4756 = vmatpush1.msra.mxu0 0.0
    %4757 = vmatprep.subr.mxu0 0.0
    %4758 = vmatpush1.msra.mxu0 0.0
    %4759 = vmatprep.subr.mxu0 0.0
    %4760 = vmatpush1.msra.mxu0 0.0
    %4761 = vmatprep.subr.mxu0 0.0
    %4762 = vmatpush1.msra.mxu0 0.0
    %4763 = vmatprep.subr.mxu0 0.0
    %4764 = vmatpush1.msra.mxu0 0.0
    %4765 = vmatprep.subr.mxu0 0.0
    %4766 = vmatpush1.msra.mxu0 0.0
    %4767 = vmatprep.subr.mxu0 0.0
    %4768 = vmatpush1.msra.mxu0 0.0
    %4769 = vmatprep.subr.mxu0 0.0
    %4770 = vmatpush1.msra.mxu0 0.0
    %4771 = vmatprep.subr.mxu0 0.0
    %4772 = vmatpush1.msra.mxu0 0.0
    %4773 = vmatprep.subr.mxu0 0.0
    %4774 = vmatpush1.msra.mxu0 0.0
    %4775 = vmatprep.subr.mxu0 0.0
    %4776 = vmatpush1.msra.mxu0 0.0
    %4777 = vmatprep.subr.mxu0 0.0
    %4778 = vmatpush1.msra.mxu0 0.0
    %4779 = vmatprep.subr.mxu0 0.0
    %4780 = vmatpush1.msra.mxu0 0.0
    %4781 = vmatprep.subr.mxu0 0.0
    %4782 = vmatpush1.msra.mxu0 0.0
    %4783 = vmatprep.subr.mxu0 0.0
    %4784 = vmatpush1.msra.mxu0 0.0
    %4785 = vmatprep.subr.mxu0 0.0
    %4786 = vmatpush1.msra.mxu0 0.0
    %4787 = vmatprep.subr.mxu0 0.0
    %4788 = vmatpush1.msra.mxu0 0.0
    %4789 = vmatprep.subr.mxu0 0.0
    %4790 = vmatpush1.msra.mxu0 0.0
    %4791 = vmatprep.subr.mxu0 0.0
    %4792 = vmatpush1.msra.mxu0 0.0
    %4793 = vmatprep.subr.mxu0 0.0
    %4794 = vmatpush1.msra.mxu0 0.0
    %4795 = vmatprep.subr.mxu0 0.0
    %4796 = vmatpush1.msra.mxu0 0.0
    %4797 = vmatprep.subr.mxu0 0.0
    %4798 = vmatpush1.msra.mxu0 0.0
    %4799 = vmatprep.mubr.f32.mxu0 0.0
    %v4800 = vand.u32 %v4272, 4294901760
    %v4801 = vsub.f32 %v4272, %v4800
    %v4802 = vand.u32 %v4801, 4294901760
    %v4803 = vsub.f32 %v4801, %v4802
    %v4804 = vand.u32 %v4803, 4294901760
    %4805 = vmatmul.mubr.f32.gmra.mrb[0].mxu0 %v4804
    %v4806 = vpop.f32.mrb[0].mxu0
    %v4807 = vadd.f32 0.0, %v4806
    %v4808 = vpop.f32.mrb[0].mxu0
    %4809 = vdwg.mxu0
    %4810 = vmatprep.subr.mxu0 0.0
    %v4811 = vand.u32 %v4165, 4294901760
    %v4812 = vsub.f32 %v4165, %v4811
    %v4813 = vand.u32 %v4812, 4294901760
    %v4814 = vsub.f32 %v4812, %v4813
    %v4815 = vand.u32 %v4814, 4294901760
    %4816 = vmatpush1.msra.mxu0 %v4815
    %4817 = vmatprep.subr.mxu0 0.0
    %v4818 = vand.u32 %v4171, 4294901760
    %v4819 = vsub.f32 %v4171, %v4818
    %v4820 = vand.u32 %v4819, 4294901760
    %v4821 = vsub.f32 %v4819, %v4820
    %v4822 = vand.u32 %v4821, 4294901760
    %4823 = vmatpush1.msra.mxu0 %v4822
    %4824 = vmatprep.subr.mxu0 0.0
    %4825 = vmatpush1.msra.mxu0 0.0
    %4826 = vmatprep.subr.mxu0 0.0
    %4827 = vmatpush1.msra.mxu0 0.0
    %4828 = vmatprep.subr.mxu0 0.0
    %4829 = vmatpush1.msra.mxu0 0.0
    %4830 = vmatprep.subr.mxu0 0.0
    %4831 = vmatpush1.msra.mxu0 0.0
    %4832 = vmatprep.subr.mxu0 0.0
    %4833 = vmatpush1.msra.mxu0 0.0
    %4834 = vmatprep.subr.mxu0 0.0
    %4835 = vmatpush1.msra.mxu0 0.0
    %4836 = vmatprep.subr.mxu0 0.0
    %4837 = vmatpush1.msra.mxu0 0.0
    %4838 = vmatprep.subr.mxu0 0.0
    %4839 = vmatpush1.msra.mxu0 0.0
    %4840 = vmatprep.subr.mxu0 0.0
    %4841 = vmatpush1.msra.mxu0 0.0
    %4842 = vmatprep.subr.mxu0 0.0
    %4843 = vmatpush1.msra.mxu0 0.0
    %4844 = vmatprep.subr.mxu0 0.0
    %4845 = vmatpush1.msra.mxu0 0.0
    %4846 = vmatprep.subr.mxu0 0.0
    %4847 = vmatpush1.msra.mxu0 0.0
    %4848 = vmatprep.subr.mxu0 0.0
    %4849 = vmatpush1.msra.mxu0 0.0
    %4850 = vmatprep.subr.mxu0 0.0
    %4851 = vmatpush1.msra.mxu0 0.0
    %4852 = vmatprep.subr.mxu0 0.0
    %4853 = vmatpush1.msra.mxu0 0.0
    %4854 = vmatprep.subr.mxu0 0.0
    %4855 = vmatpush1.msra.mxu0 0.0
    %4856 = vmatprep.subr.mxu0 0.0
    %4857 = vmatpush1.msra.mxu0 0.0
    %4858 = vmatprep.subr.mxu0 0.0
    %4859 = vmatpush1.msra.mxu0 0.0
    %4860 = vmatprep.subr.mxu0 0.0
    %4861 = vmatpush1.msra.mxu0 0.0
    %4862 = vmatprep.subr.mxu0 0.0
    %4863 = vmatpush1.msra.mxu0 0.0
    %4864 = vmatprep.subr.mxu0 0.0
    %4865 = vmatpush1.msra.mxu0 0.0
    %4866 = vmatprep.subr.mxu0 0.0
    %4867 = vmatpush1.msra.mxu0 0.0
    %4868 = vmatprep.subr.mxu0 0.0
    %4869 = vmatpush1.msra.mxu0 0.0
    %4870 = vmatprep.subr.mxu0 0.0
    %4871 = vmatpush1.msra.mxu0 0.0
    %4872 = vmatprep.subr.mxu0 0.0
    %4873 = vmatpush1.msra.mxu0 0.0
    %4874 = vmatprep.subr.mxu0 0.0
    %4875 = vmatpush1.msra.mxu0 0.0
    %4876 = vmatprep.subr.mxu0 0.0
    %4877 = vmatpush1.msra.mxu0 0.0
    %4878 = vmatprep.subr.mxu0 0.0
    %4879 = vmatpush1.msra.mxu0 0.0
    %4880 = vmatprep.subr.mxu0 0.0
    %4881 = vmatpush1.msra.mxu0 0.0
    %4882 = vmatprep.subr.mxu0 0.0
    %4883 = vmatpush1.msra.mxu0 0.0
    %4884 = vmatprep.mubr.f32.mxu0 0.0
    %v4885 = vand.u32 %v4272, 4294901760
    %4886 = vmatmul.mubr.f32.gmra.mrb[0].mxu0 %v4885
    %v4887 = vpop.f32.mrb[0].mxu0
    %v4888 = vadd.f32 %v4807, %v4887
    %v4889 = vpop.f32.mrb[0].mxu0
    %4890 = vdwg.mxu0
    %4891 = vmatprep.subr.mxu0 0.0
    %v4892 = vand.u32 %v4165, 4294901760
    %v4893 = vsub.f32 %v4165, %v4892
    %4894 = vmatpush1.msra.mxu0 %v4893
    %4895 = vmatprep.subr.mxu0 0.0
    %v4896 = vand.u32 %v4171, 4294901760
    %v4897 = vsub.f32 %v4171, %v4896
    %4898 = vmatpush1.msra.mxu0 %v4897
    %4899 = vmatprep.subr.mxu0 0.0
    %4900 = vmatpush1.msra.mxu0 0.0
    %4901 = vmatprep.subr.mxu0 0.0
    %4902 = vmatpush1.msra.mxu0 0.0
    %4903 = vmatprep.subr.mxu0 0.0
    %4904 = vmatpush1.msra.mxu0 0.0
    %4905 = vmatprep.subr.mxu0 0.0
    %4906 = vmatpush1.msra.mxu0 0.0
    %4907 = vmatprep.subr.mxu0 0.0
    %4908 = vmatpush1.msra.mxu0 0.0
    %4909 = vmatprep.subr.mxu0 0.0
    %4910 = vmatpush1.msra.mxu0 0.0
    %4911 = vmatprep.subr.mxu0 0.0
    %4912 = vmatpush1.msra.mxu0 0.0
    %4913 = vmatprep.subr.mxu0 0.0
    %4914 = vmatpush1.msra.mxu0 0.0
    %4915 = vmatprep.subr.mxu0 0.0
    %4916 = vmatpush1.msra.mxu0 0.0
    %4917 = vmatprep.subr.mxu0 0.0
    %4918 = vmatpush1.msra.mxu0 0.0
    %4919 = vmatprep.subr.mxu0 0.0
    %4920 = vmatpush1.msra.mxu0 0.0
    %4921 = vmatprep.subr.mxu0 0.0
    %4922 = vmatpush1.msra.mxu0 0.0
    %4923 = vmatprep.subr.mxu0 0.0
    %4924 = vmatpush1.msra.mxu0 0.0
    %4925 = vmatprep.subr.mxu0 0.0
    %4926 = vmatpush1.msra.mxu0 0.0
    %4927 = vmatprep.subr.mxu0 0.0
    %4928 = vmatpush1.msra.mxu0 0.0
    %4929 = vmatprep.subr.mxu0 0.0
    %4930 = vmatpush1.msra.mxu0 0.0
    %4931 = vmatprep.subr.mxu0 0.0
    %4932 = vmatpush1.msra.mxu0 0.0
    %4933 = vmatprep.subr.mxu0 0.0
    %4934 = vmatpush1.msra.mxu0 0.0
    %4935 = vmatprep.subr.mxu0 0.0
    %4936 = vmatpush1.msra.mxu0 0.0
    %4937 = vmatprep.subr.mxu0 0.0
    %4938 = vmatpush1.msra.mxu0 0.0
    %4939 = vmatprep.subr.mxu0 0.0
    %4940 = vmatpush1.msra.mxu0 0.0
    %4941 = vmatprep.subr.mxu0 0.0
    %4942 = vmatpush1.msra.mxu0 0.0
    %4943 = vmatprep.subr.mxu0 0.0
    %4944 = vmatpush1.msra.mxu0 0.0
    %4945 = vmatprep.subr.mxu0 0.0
    %4946 = vmatpush1.msra.mxu0 0.0
    %4947 = vmatprep.subr.mxu0 0.0
    %4948 = vmatpush1.msra.mxu0 0.0
    %4949 = vmatprep.subr.mxu0 0.0
    %4950 = vmatpush1.msra.mxu0 0.0
    %4951 = vmatprep.subr.mxu0 0.0
    %4952 = vmatpush1.msra.mxu0 0.0
    %4953 = vmatprep.subr.mxu0 0.0
    %4954 = vmatpush1.msra.mxu0 0.0
    %4955 = vmatprep.subr.mxu0 0.0
    %4956 = vmatpush1.msra.mxu0 0.0
    %4957 = vmatprep.subr.mxu0 0.0
    %4958 = vmatpush1.msra.mxu0 0.0
    %4959 = vmatprep.mubr.f32.mxu0 0.0
    %v4960 = vand.u32 %v4272, 4294901760
    %v4961 = vsub.f32 %v4272, %v4960
    %4962 = vmatmul.mubr.f32.gmra.mrb[0].mxu0 %v4961
    %v4963 = vpop.f32.mrb[0].mxu0
    %v4964 = vadd.f32 %v4888, %v4963
    %v4965 = vpop.f32.mrb[0].mxu0
    %4966 = vdwg.mxu0
    %4967 = vmatprep.subr.mxu0 0.0
    %v4968 = vand.u32 %v4165, 4294901760
    %4969 = vmatpush1.msra.mxu0 %v4968
    %4970 = vmatprep.subr.mxu0 0.0
    %v4971 = vand.u32 %v4171, 4294901760
    %4972 = vmatpush1.msra.mxu0 %v4971
    %4973 = vmatprep.subr.mxu0 0.0
    %4974 = vmatpush1.msra.mxu0 0.0
    %4975 = vmatprep.subr.mxu0 0.0
    %4976 = vmatpush1.msra.mxu0 0.0
    %4977 = vmatprep.subr.mxu0 0.0
    %4978 = vmatpush1.msra.mxu0 0.0
    %4979 = vmatprep.subr.mxu0 0.0
    %4980 = vmatpush1.msra.mxu0 0.0
    %4981 = vmatprep.subr.mxu0 0.0
    %4982 = vmatpush1.msra.mxu0 0.0
    %4983 = vmatprep.subr.mxu0 0.0
    %4984 = vmatpush1.msra.mxu0 0.0
    %4985 = vmatprep.subr.mxu0 0.0
    %4986 = vmatpush1.msra.mxu0 0.0
    %4987 = vmatprep.subr.mxu0 0.0
    %4988 = vmatpush1.msra.mxu0 0.0
    %4989 = vmatprep.subr.mxu0 0.0
    %4990 = vmatpush1.msra.mxu0 0.0
    %4991 = vmatprep.subr.mxu0 0.0
    %4992 = vmatpush1.msra.mxu0 0.0
    %4993 = vmatprep.subr.mxu0 0.0
    %4994 = vmatpush1.msra.mxu0 0.0
    %4995 = vmatprep.subr.mxu0 0.0
    %4996 = vmatpush1.msra.mxu0 0.0
    %4997 = vmatprep.subr.mxu0 0.0
    %4998 = vmatpush1.msra.mxu0 0.0
    %4999 = vmatprep.subr.mxu0 0.0
    %5000 = vmatpush1.msra.mxu0 0.0
    %5001 = vmatprep.subr.mxu0 0.0
    %5002 = vmatpush1.msra.mxu0 0.0
    %5003 = vmatprep.subr.mxu0 0.0
    %5004 = vmatpush1.msra.mxu0 0.0
    %5005 = vmatprep.subr.mxu0 0.0
    %5006 = vmatpush1.msra.mxu0 0.0
    %5007 = vmatprep.subr.mxu0 0.0
    %5008 = vmatpush1.msra.mxu0 0.0
    %5009 = vmatprep.subr.mxu0 0.0
    %5010 = vmatpush1.msra.mxu0 0.0
    %5011 = vmatprep.subr.mxu0 0.0
    %5012 = vmatpush1.msra.mxu0 0.0
    %5013 = vmatprep.subr.mxu0 0.0
    %5014 = vmatpush1.msra.mxu0 0.0
    %5015 = vmatprep.subr.mxu0 0.0
    %5016 = vmatpush1.msra.mxu0 0.0
    %5017 = vmatprep.subr.mxu0 0.0
    %5018 = vmatpush1.msra.mxu0 0.0
    %5019 = vmatprep.subr.mxu0 0.0
    %5020 = vmatpush1.msra.mxu0 0.0
    %5021 = vmatprep.subr.mxu0 0.0
    %5022 = vmatpush1.msra.mxu0 0.0
    %5023 = vmatprep.subr.mxu0 0.0
    %5024 = vmatpush1.msra.mxu0 0.0
    %5025 = vmatprep.subr.mxu0 0.0
    %5026 = vmatpush1.msra.mxu0 0.0
    %5027 = vmatprep.subr.mxu0 0.0
    %5028 = vmatpush1.msra.mxu0 0.0
    %5029 = vmatprep.subr.mxu0 0.0
    %5030 = vmatpush1.msra.mxu0 0.0
    %5031 = vmatprep.subr.mxu0 0.0
    %5032 = vmatpush1.msra.mxu0 0.0
    %5033 = vmatprep.mubr.f32.mxu0 0.0
    %v5034 = vand.u32 %v4272, 4294901760
    %v5035 = vsub.f32 %v4272, %v5034
    %v5036 = vand.u32 %v5035, 4294901760
    %5037 = vmatmul.mubr.f32.gmra.mrb[0].mxu0 %v5036
    %v5038 = vpop.f32.mrb[0].mxu0
    %v5039 = vadd.f32 %v4964, %v5038
    %v5040 = vpop.f32.mrb[0].mxu0
    %5041 = vdwg.mxu0
    %5042 = vmatprep.subr.mxu0 0.0
    %v5043 = vand.u32 %v4165, 4294901760
    %v5044 = vsub.f32 %v4165, %v5043
    %v5045 = vand.u32 %v5044, 4294901760
    %5046 = vmatpush1.msra.mxu0 %v5045
    %5047 = vmatprep.subr.mxu0 0.0
    %v5048 = vand.u32 %v4171, 4294901760
    %v5049 = vsub.f32 %v4171, %v5048
    %v5050 = vand.u32 %v5049, 4294901760
    %5051 = vmatpush1.msra.mxu0 %v5050
    %5052 = vmatprep.subr.mxu0 0.0
    %5053 = vmatpush1.msra.mxu0 0.0
    %5054 = vmatprep.subr.mxu0 0.0
    %5055 = vmatpush1.msra.mxu0 0.0
    %5056 = vmatprep.subr.mxu0 0.0
    %5057 = vmatpush1.msra.mxu0 0.0
    %5058 = vmatprep.subr.mxu0 0.0
    %5059 = vmatpush1.msra.mxu0 0.0
    %5060 = vmatprep.subr.mxu0 0.0
    %5061 = vmatpush1.msra.mxu0 0.0
    %5062 = vmatprep.subr.mxu0 0.0
    %5063 = vmatpush1.msra.mxu0 0.0
    %5064 = vmatprep.subr.mxu0 0.0
    %5065 = vmatpush1.msra.mxu0 0.0
    %5066 = vmatprep.subr.mxu0 0.0
    %5067 = vmatpush1.msra.mxu0 0.0
    %5068 = vmatprep.subr.mxu0 0.0
    %5069 = vmatpush1.msra.mxu0 0.0
    %5070 = vmatprep.subr.mxu0 0.0
    %5071 = vmatpush1.msra.mxu0 0.0
    %5072 = vmatprep.subr.mxu0 0.0
    %5073 = vmatpush1.msra.mxu0 0.0
    %5074 = vmatprep.subr.mxu0 0.0
    %5075 = vmatpush1.msra.mxu0 0.0
    %5076 = vmatprep.subr.mxu0 0.0
    %5077 = vmatpush1.msra.mxu0 0.0
    %5078 = vmatprep.subr.mxu0 0.0
    %5079 = vmatpush1.msra.mxu0 0.0
    %5080 = vmatprep.subr.mxu0 0.0
    %5081 = vmatpush1.msra.mxu0 0.0
    %5082 = vmatprep.subr.mxu0 0.0
    %5083 = vmatpush1.msra.mxu0 0.0
    %5084 = vmatprep.subr.mxu0 0.0
    %5085 = vmatpush1.msra.mxu0 0.0
    %5086 = vmatprep.subr.mxu0 0.0
    %5087 = vmatpush1.msra.mxu0 0.0
    %5088 = vmatprep.subr.mxu0 0.0
    %5089 = vmatpush1.msra.mxu0 0.0
    %5090 = vmatprep.subr.mxu0 0.0
    %5091 = vmatpush1.msra.mxu0 0.0
    %5092 = vmatprep.subr.mxu0 0.0
    %5093 = vmatpush1.msra.mxu0 0.0
    %5094 = vmatprep.subr.mxu0 0.0
    %5095 = vmatpush1.msra.mxu0 0.0
    %5096 = vmatprep.subr.mxu0 0.0
    %5097 = vmatpush1.msra.mxu0 0.0
    %5098 = vmatprep.subr.mxu0 0.0
    %5099 = vmatpush1.msra.mxu0 0.0
    %5100 = vmatprep.subr.mxu0 0.0
    %5101 = vmatpush1.msra.mxu0 0.0
    %5102 = vmatprep.subr.mxu0 0.0
    %5103 = vmatpush1.msra.mxu0 0.0
    %5104 = vmatprep.subr.mxu0 0.0
    %5105 = vmatpush1.msra.mxu0 0.0
    %5106 = vmatprep.subr.mxu0 0.0
    %5107 = vmatpush1.msra.mxu0 0.0
    %5108 = vmatprep.subr.mxu0 0.0
    %5109 = vmatpush1.msra.mxu0 0.0
    %5110 = vmatprep.subr.mxu0 0.0
    %5111 = vmatpush1.msra.mxu0 0.0
    %5112 = vmatprep.mubr.f32.mxu0 0.0
    %v5113 = vand.u32 %v4272, 4294901760
    %5114 = vmatmul.mubr.f32.gmra.mrb[0].mxu0 %v5113
    %v5115 = vpop.f32.mrb[0].mxu0
    %v5116 = vadd.f32 %v5039, %v5115
    %v5117 = vpop.f32.mrb[0].mxu0
    %5118 = vdwg.mxu0
    %5119 = vmatprep.subr.mxu0 0.0
    %v5120 = vand.u32 %v4165, 4294901760
    %5121 = vmatpush1.msra.mxu0 %v5120
    %5122 = vmatprep.subr.mxu0 0.0
    %v5123 = vand.u32 %v4171, 4294901760
    %5124 = vmatpush1.msra.mxu0 %v5123
    %5125 = vmatprep.subr.mxu0 0.0
    %5126 = vmatpush1.msra.mxu0 0.0
    %5127 = vmatprep.subr.mxu0 0.0
    %5128 = vmatpush1.msra.mxu0 0.0
    %5129 = vmatprep.subr.mxu0 0.0
    %5130 = vmatpush1.msra.mxu0 0.0
    %5131 = vmatprep.subr.mxu0 0.0
    %5132 = vmatpush1.msra.mxu0 0.0
    %5133 = vmatprep.subr.mxu0 0.0
    %5134 = vmatpush1.msra.mxu0 0.0
    %5135 = vmatprep.subr.mxu0 0.0
    %5136 = vmatpush1.msra.mxu0 0.0
    %5137 = vmatprep.subr.mxu0 0.0
    %5138 = vmatpush1.msra.mxu0 0.0
    %5139 = vmatprep.subr.mxu0 0.0
    %5140 = vmatpush1.msra.mxu0 0.0
    %5141 = vmatprep.subr.mxu0 0.0
    %5142 = vmatpush1.msra.mxu0 0.0
    %5143 = vmatprep.subr.mxu0 0.0
    %5144 = vmatpush1.msra.mxu0 0.0
    %5145 = vmatprep.subr.mxu0 0.0
    %5146 = vmatpush1.msra.mxu0 0.0
    %5147 = vmatprep.subr.mxu0 0.0
    %5148 = vmatpush1.msra.mxu0 0.0
    %5149 = vmatprep.subr.mxu0 0.0
    %5150 = vmatpush1.msra.mxu0 0.0
    %5151 = vmatprep.subr.mxu0 0.0
    %5152 = vmatpush1.msra.mxu0 0.0
    %5153 = vmatprep.subr.mxu0 0.0
    %5154 = vmatpush1.msra.mxu0 0.0
    %5155 = vmatprep.subr.mxu0 0.0
    %5156 = vmatpush1.msra.mxu0 0.0
    %5157 = vmatprep.subr.mxu0 0.0
    %5158 = vmatpush1.msra.mxu0 0.0
    %5159 = vmatprep.subr.mxu0 0.0
    %5160 = vmatpush1.msra.mxu0 0.0
    %5161 = vmatprep.subr.mxu0 0.0
    %5162 = vmatpush1.msra.mxu0 0.0
    %5163 = vmatprep.subr.mxu0 0.0
    %5164 = vmatpush1.msra.mxu0 0.0
    %5165 = vmatprep.subr.mxu0 0.0
    %5166 = vmatpush1.msra.mxu0 0.0
    %5167 = vmatprep.subr.mxu0 0.0
    %5168 = vmatpush1.msra.mxu0 0.0
    %5169 = vmatprep.subr.mxu0 0.0
    %5170 = vmatpush1.msra.mxu0 0.0
    %5171 = vmatprep.subr.mxu0 0.0
    %5172 = vmatpush1.msra.mxu0 0.0
    %5173 = vmatprep.subr.mxu0 0.0
    %5174 = vmatpush1.msra.mxu0 0.0
    %5175 = vmatprep.subr.mxu0 0.0
    %5176 = vmatpush1.msra.mxu0 0.0
    %5177 = vmatprep.subr.mxu0 0.0
    %5178 = vmatpush1.msra.mxu0 0.0
    %5179 = vmatprep.subr.mxu0 0.0
    %5180 = vmatpush1.msra.mxu0 0.0
    %5181 = vmatprep.subr.mxu0 0.0
    %5182 = vmatpush1.msra.mxu0 0.0
    %5183 = vmatprep.subr.mxu0 0.0
    %5184 = vmatpush1.msra.mxu0 0.0
    %5185 = vmatprep.mubr.f32.mxu0 0.0
    %v5186 = vand.u32 %v4272, 4294901760
    %5187 = vmatmul.mubr.f32.gmra.mrb[0].mxu0 %v5186
    %v5188 = vpop.f32.mrb[0].mxu0
    %v5189 = vadd.f32 %v5116, %v5188
    %v5190 = vpop.f32.mrb[0].mxu0
    %5191 = vdwg.mxu0
    %s5192 = sld [smem:[#allocation2 + $0x2]]
    %v5193 = vmul.f32 %v4730, %v4258
    %v5194 = vstv %s5192
    %v5195 = vmul.f32 %v5194, %v5193
    %s5196 = ssub.f32 1.0, %s5192
    %v5197 = vmul.f32 %v5189, %v4270
    %v5198 = vstv %s5196
    %v5199 = vmul.f32 %v5198, %v5197
    %v5200 = vadd.f32 %v5195, %v5199
    %v5201 = vmul.f32 %v5200, %v4246
    %v5202 = vmul.f32 %v5201, %v4226
    %v5204 = vrot.slane %v4235, 6
    %v5206 = vmul.f32 %v5201, %v5204
    %v5208 = vrot.slane %v5206, 2
    %v5210 = vadd.f32 %v5202, %v5208
    %v5211 = vld [vmem:[%s17] sm:$0x3]
    %v5212 = vmul.f32 %v5210, %v5211
    %v5213 = vld [vmem:[%s15] sm:$0xff]
    %v5214 = vld [vmem:[%s15 + $0x8] sm:$0xff]
    %v5215 = vld [vmem:[%s15 + $0x10] sm:$0xff]
    %v5216 = vld [vmem:[%s15 + $0x18] sm:$0xff]
    %v5217 = vld [vmem:[%s15 + $0x20] sm:$0xff]
    %v5218 = vld [vmem:[%s15 + $0x28] sm:$0xff]
    %v5219 = vld [vmem:[%s15 + $0x30] sm:$0xff]
    %v5220 = vld [vmem:[%s15 + $0x38] sm:$0xff]
    %v5221 = vld [vmem:[%s15 + $0x40] sm:$0xff]
    %v5222 = vld [vmem:[%s15 + $0x48] sm:$0xff]
    %v5223 = vld [vmem:[%s16] sm:$0x1]
    %v5225 = vlaneseq
    %v5226 = vshrl.u32 %v5225, 7
    %v5227 = vsub.s32 0, %v5226
    %v5228 = vrot.slane %v5223, %v5227
    %v5231 = vsel %vm3561, %v5212, 0
    %5233 = vmatprep.subr.mxu0 0.0
    %v5234 = vand.u32 %v5213, 4294901760
    %5235 = vmatpush1.msra.mxu0 %v5234
    %5236 = vmatprep.subr.mxu0 0.0
    %v5237 = vand.u32 %v5214, 4294901760
    %5238 = vmatpush1.msra.mxu0 %v5237
    %5239 = vmatprep.subr.mxu0 0.0
    %v5240 = vand.u32 %v5215, 4294901760
    %5241 = vmatpush1.msra.mxu0 %v5240
    %5242 = vmatprep.subr.mxu0 0.0
    %v5243 = vand.u32 %v5216, 4294901760
    %5244 = vmatpush1.msra.mxu0 %v5243
    %5245 = vmatprep.subr.mxu0 0.0
    %v5246 = vand.u32 %v5217, 4294901760
    %5247 = vmatpush1.msra.mxu0 %v5246
    %5248 = vmatprep.subr.mxu0 0.0
    %v5249 = vand.u32 %v5218, 4294901760
    %5250 = vmatpush1.msra.mxu0 %v5249
    %5251 = vmatprep.subr.mxu0 0.0
    %v5252 = vand.u32 %v5219, 4294901760
    %5253 = vmatpush1.msra.mxu0 %v5252
    %5254 = vmatprep.subr.mxu0 0.0
    %v5255 = vand.u32 %v5220, 4294901760
    %5256 = vmatpush1.msra.mxu0 %v5255
    %5257 = vmatprep.subr.mxu0 0.0
    %v5258 = vand.u32 %v5221, 4294901760
    %5259 = vmatpush1.msra.mxu0 %v5258
    %5260 = vmatprep.subr.mxu0 0.0
    %v5261 = vand.u32 %v5222, 4294901760
    %5262 = vmatpush1.msra.mxu0 %v5261
    %5263 = vmatprep.subr.mxu0 0.0
    %5264 = vmatpush1.msra.mxu0 0.0
    %5265 = vmatprep.subr.mxu0 0.0
    %5266 = vmatpush1.msra.mxu0 0.0
    %5267 = vmatprep.subr.mxu0 0.0
    %5268 = vmatpush1.msra.mxu0 0.0
    %5269 = vmatprep.subr.mxu0 0.0
    %5270 = vmatpush1.msra.mxu0 0.0
    %5271 = vmatprep.subr.mxu0 0.0
    %5272 = vmatpush1.msra.mxu0 0.0
    %5273 = vmatprep.subr.mxu0 0.0
    %5274 = vmatpush1.msra.mxu0 0.0
    %5275 = vmatprep.subr.mxu0 0.0
    %5276 = vmatpush1.msra.mxu0 0.0
    %5277 = vmatprep.subr.mxu0 0.0
    %5278 = vmatpush1.msra.mxu0 0.0
    %5279 = vmatprep.subr.mxu0 0.0
    %5280 = vmatpush1.msra.mxu0 0.0
    %5281 = vmatprep.subr.mxu0 0.0
    %5282 = vmatpush1.msra.mxu0 0.0
    %5283 = vmatprep.subr.mxu0 0.0
    %5284 = vmatpush1.msra.mxu0 0.0
    %5285 = vmatprep.subr.mxu0 0.0
    %5286 = vmatpush1.msra.mxu0 0.0
    %5287 = vmatprep.subr.mxu0 0.0
    %5288 = vmatpush1.msra.mxu0 0.0
    %5289 = vmatprep.subr.mxu0 0.0
    %5290 = vmatpush1.msra.mxu0 0.0
    %5291 = vmatprep.subr.mxu0 0.0
    %5292 = vmatpush1.msra.mxu0 0.0
    %5293 = vmatprep.subr.mxu0 0.0
    %5294 = vmatpush1.msra.mxu0 0.0
    %5295 = vmatprep.subr.mxu0 0.0
    %5296 = vmatpush1.msra.mxu0 0.0
    %5297 = vmatprep.subr.mxu0 0.0
    %5298 = vmatpush1.msra.mxu0 0.0
    %5299 = vmatprep.subr.mxu0 0.0
    %5300 = vmatpush1.msra.mxu0 0.0
    %5301 = vmatprep.subr.mxu0 0.0
    %5302 = vmatpush1.msra.mxu0 0.0
    %5303 = vmatprep.subr.mxu0 0.0
    %5304 = vmatpush1.msra.mxu0 0.0
    %5305 = vmatprep.subr.mxu0 0.0
    %5306 = vmatpush1.msra.mxu0 0.0
    %5307 = vmatprep.mubr.f32.mxu0 0.0
    %v5308 = vand.u32 %v5231, 4294901760
    %v5309 = vsub.f32 %v5231, %v5308
    %v5310 = vand.u32 %v5309, 4294901760
    %v5311 = vsub.f32 %v5309, %v5310
    %v5312 = vand.u32 %v5311, 4294901760
    %5313 = vmatmul.mubr.f32.gmra.mrb[0].mxu0 %v5312
    %v5314 = vpop.f32.mrb[0].mxu0
    %v5315 = vadd.f32 %v5228, %v5314
    %v5316 = vpop.f32.mrb[0].mxu0
    %5317 = vdwg.mxu0
    %5318 = vmatprep.subr.mxu0 0.0
    %v5319 = vand.u32 %v5213, 4294901760
    %v5320 = vsub.f32 %v5213, %v5319
    %v5321 = vand.u32 %v5320, 4294901760
    %v5322 = vsub.f32 %v5320, %v5321
    %v5323 = vand.u32 %v5322, 4294901760
    %5324 = vmatpush1.msra.mxu0 %v5323
    %5325 = vmatprep.subr.mxu0 0.0
    %v5326 = vand.u32 %v5214, 4294901760
    %v5327 = vsub.f32 %v5214, %v5326
    %v5328 = vand.u32 %v5327, 4294901760
    %v5329 = vsub.f32 %v5327, %v5328
    %v5330 = vand.u32 %v5329, 4294901760
    %5331 = vmatpush1.msra.mxu0 %v5330
    %5332 = vmatprep.subr.mxu0 0.0
    %v5333 = vand.u32 %v5215, 4294901760
    %v5334 = vsub.f32 %v5215, %v5333
    %v5335 = vand.u32 %v5334, 4294901760
    %v5336 = vsub.f32 %v5334, %v5335
    %v5337 = vand.u32 %v5336, 4294901760
    %5338 = vmatpush1.msra.mxu0 %v5337
    %5339 = vmatprep.subr.mxu0 0.0
    %v5340 = vand.u32 %v5216, 4294901760
    %v5341 = vsub.f32 %v5216, %v5340
    %v5342 = vand.u32 %v5341, 4294901760
    %v5343 = vsub.f32 %v5341, %v5342
    %v5344 = vand.u32 %v5343, 4294901760
    %5345 = vmatpush1.msra.mxu0 %v5344
    %5346 = vmatprep.subr.mxu0 0.0
    %v5347 = vand.u32 %v5217, 4294901760
    %v5348 = vsub.f32 %v5217, %v5347
    %v5349 = vand.u32 %v5348, 4294901760
    %v5350 = vsub.f32 %v5348, %v5349
    %v5351 = vand.u32 %v5350, 4294901760
    %5352 = vmatpush1.msra.mxu0 %v5351
    %5353 = vmatprep.subr.mxu0 0.0
    %v5354 = vand.u32 %v5218, 4294901760
    %v5355 = vsub.f32 %v5218, %v5354
    %v5356 = vand.u32 %v5355, 4294901760
    %v5357 = vsub.f32 %v5355, %v5356
    %v5358 = vand.u32 %v5357, 4294901760
    %5359 = vmatpush1.msra.mxu0 %v5358
    %5360 = vmatprep.subr.mxu0 0.0
    %v5361 = vand.u32 %v5219, 4294901760
    %v5362 = vsub.f32 %v5219, %v5361
    %v5363 = vand.u32 %v5362, 4294901760
    %v5364 = vsub.f32 %v5362, %v5363
    %v5365 = vand.u32 %v5364, 4294901760
    %5366 = vmatpush1.msra.mxu0 %v5365
    %5367 = vmatprep.subr.mxu0 0.0
    %v5368 = vand.u32 %v5220, 4294901760
    %v5369 = vsub.f32 %v5220, %v5368
    %v5370 = vand.u32 %v5369, 4294901760
    %v5371 = vsub.f32 %v5369, %v5370
    %v5372 = vand.u32 %v5371, 4294901760
    %5373 = vmatpush1.msra.mxu0 %v5372
    %5374 = vmatprep.subr.mxu0 0.0
    %v5375 = vand.u32 %v5221, 4294901760
    %v5376 = vsub.f32 %v5221, %v5375
    %v5377 = vand.u32 %v5376, 4294901760
    %v5378 = vsub.f32 %v5376, %v5377
    %v5379 = vand.u32 %v5378, 4294901760
    %5380 = vmatpush1.msra.mxu0 %v5379
    %5381 = vmatprep.subr.mxu0 0.0
    %v5382 = vand.u32 %v5222, 4294901760
    %v5383 = vsub.f32 %v5222, %v5382
    %v5384 = vand.u32 %v5383, 4294901760
    %v5385 = vsub.f32 %v5383, %v5384
    %v5386 = vand.u32 %v5385, 4294901760
    %5387 = vmatpush1.msra.mxu0 %v5386
    %5388 = vmatprep.subr.mxu0 0.0
    %5389 = vmatpush1.msra.mxu0 0.0
    %5390 = vmatprep.subr.mxu0 0.0
    %5391 = vmatpush1.msra.mxu0 0.0
    %5392 = vmatprep.subr.mxu0 0.0
    %5393 = vmatpush1.msra.mxu0 0.0
    %5394 = vmatprep.subr.mxu0 0.0
    %5395 = vmatpush1.msra.mxu0 0.0
    %5396 = vmatprep.subr.mxu0 0.0
    %5397 = vmatpush1.msra.mxu0 0.0
    %5398 = vmatprep.subr.mxu0 0.0
    %5399 = vmatpush1.msra.mxu0 0.0
    %5400 = vmatprep.subr.mxu0 0.0
    %5401 = vmatpush1.msra.mxu0 0.0
    %5402 = vmatprep.subr.mxu0 0.0
    %5403 = vmatpush1.msra.mxu0 0.0
    %5404 = vmatprep.subr.mxu0 0.0
    %5405 = vmatpush1.msra.mxu0 0.0
    %5406 = vmatprep.subr.mxu0 0.0
    %5407 = vmatpush1.msra.mxu0 0.0
    %5408 = vmatprep.subr.mxu0 0.0
    %5409 = vmatpush1.msra.mxu0 0.0
    %5410 = vmatprep.subr.mxu0 0.0
    %5411 = vmatpush1.msra.mxu0 0.0
    %5412 = vmatprep.subr.mxu0 0.0
    %5413 = vmatpush1.msra.mxu0 0.0
    %5414 = vmatprep.subr.mxu0 0.0
    %5415 = vmatpush1.msra.mxu0 0.0
    %5416 = vmatprep.subr.mxu0 0.0
    %5417 = vmatpush1.msra.mxu0 0.0
    %5418 = vmatprep.subr.mxu0 0.0
    %5419 = vmatpush1.msra.mxu0 0.0
    %5420 = vmatprep.subr.mxu0 0.0
    %5421 = vmatpush1.msra.mxu0 0.0
    %5422 = vmatprep.subr.mxu0 0.0
    %5423 = vmatpush1.msra.mxu0 0.0
    %5424 = vmatprep.subr.mxu0 0.0
    %5425 = vmatpush1.msra.mxu0 0.0
    %5426 = vmatprep.subr.mxu0 0.0
    %5427 = vmatpush1.msra.mxu0 0.0
    %5428 = vmatprep.subr.mxu0 0.0
    %5429 = vmatpush1.msra.mxu0 0.0
    %5430 = vmatprep.subr.mxu0 0.0
    %5431 = vmatpush1.msra.mxu0 0.0
    %5432 = vmatprep.mubr.f32.mxu0 0.0
    %v5433 = vand.u32 %v5231, 4294901760
    %5434 = vmatmul.mubr.f32.gmra.mrb[0].mxu0 %v5433
    %v5435 = vpop.f32.mrb[0].mxu0
    %v5436 = vadd.f32 %v5315, %v5435
    %v5437 = vpop.f32.mrb[0].mxu0
    %5438 = vdwg.mxu0
    %5439 = vmatprep.subr.mxu0 0.0
    %v5440 = vand.u32 %v5213, 4294901760
    %v5441 = vsub.f32 %v5213, %v5440
    %5442 = vmatpush1.msra.mxu0 %v5441
    %5443 = vmatprep.subr.mxu0 0.0
    %v5444 = vand.u32 %v5214, 4294901760
    %v5445 = vsub.f32 %v5214, %v5444
    %5446 = vmatpush1.msra.mxu0 %v5445
    %5447 = vmatprep.subr.mxu0 0.0
    %v5448 = vand.u32 %v5215, 4294901760
    %v5449 = vsub.f32 %v5215, %v5448
    %5450 = vmatpush1.msra.mxu0 %v5449
    %5451 = vmatprep.subr.mxu0 0.0
    %v5452 = vand.u32 %v5216, 4294901760
    %v5453 = vsub.f32 %v5216, %v5452
    %5454 = vmatpush1.msra.mxu0 %v5453
    %5455 = vmatprep.subr.mxu0 0.0
    %v5456 = vand.u32 %v5217, 4294901760
    %v5457 = vsub.f32 %v5217, %v5456
    %5458 = vmatpush1.msra.mxu0 %v5457
    %5459 = vmatprep.subr.mxu0 0.0
    %v5460 = vand.u32 %v5218, 4294901760
    %v5461 = vsub.f32 %v5218, %v5460
    %5462 = vmatpush1.msra.mxu0 %v5461
    %5463 = vmatprep.subr.mxu0 0.0
    %v5464 = vand.u32 %v5219, 4294901760
    %v5465 = vsub.f32 %v5219, %v5464
    %5466 = vmatpush1.msra.mxu0 %v5465
    %5467 = vmatprep.subr.mxu0 0.0
    %v5468 = vand.u32 %v5220, 4294901760
    %v5469 = vsub.f32 %v5220, %v5468
    %5470 = vmatpush1.msra.mxu0 %v5469
    %5471 = vmatprep.subr.mxu0 0.0
    %v5472 = vand.u32 %v5221, 4294901760
    %v5473 = vsub.f32 %v5221, %v5472
    %5474 = vmatpush1.msra.mxu0 %v5473
    %5475 = vmatprep.subr.mxu0 0.0
    %v5476 = vand.u32 %v5222, 4294901760
    %v5477 = vsub.f32 %v5222, %v5476
    %5478 = vmatpush1.msra.mxu0 %v5477
    %5479 = vmatprep.subr.mxu0 0.0
    %5480 = vmatpush1.msra.mxu0 0.0
    %5481 = vmatprep.subr.mxu0 0.0
    %5482 = vmatpush1.msra.mxu0 0.0
    %5483 = vmatprep.subr.mxu0 0.0
    %5484 = vmatpush1.msra.mxu0 0.0
    %5485 = vmatprep.subr.mxu0 0.0
    %5486 = vmatpush1.msra.mxu0 0.0
    %5487 = vmatprep.subr.mxu0 0.0
    %5488 = vmatpush1.msra.mxu0 0.0
    %5489 = vmatprep.subr.mxu0 0.0
    %5490 = vmatpush1.msra.mxu0 0.0
    %5491 = vmatprep.subr.mxu0 0.0
    %5492 = vmatpush1.msra.mxu0 0.0
    %5493 = vmatprep.subr.mxu0 0.0
    %5494 = vmatpush1.msra.mxu0 0.0
    %5495 = vmatprep.subr.mxu0 0.0
    %5496 = vmatpush1.msra.mxu0 0.0
    %5497 = vmatprep.subr.mxu0 0.0
    %5498 = vmatpush1.msra.mxu0 0.0
    %5499 = vmatprep.subr.mxu0 0.0
    %5500 = vmatpush1.msra.mxu0 0.0
    %5501 = vmatprep.subr.mxu0 0.0
    %5502 = vmatpush1.msra.mxu0 0.0
    %5503 = vmatprep.subr.mxu0 0.0
    %5504 = vmatpush1.msra.mxu0 0.0
    %5505 = vmatprep.subr.mxu0 0.0
    %5506 = vmatpush1.msra.mxu0 0.0
    %5507 = vmatprep.subr.mxu0 0.0
    %5508 = vmatpush1.msra.mxu0 0.0
    %5509 = vmatprep.subr.mxu0 0.0
    %5510 = vmatpush1.msra.mxu0 0.0
    %5511 = vmatprep.subr.mxu0 0.0
    %5512 = vmatpush1.msra.mxu0 0.0
    %5513 = vmatprep.subr.mxu0 0.0
    %5514 = vmatpush1.msra.mxu0 0.0
    %5515 = vmatprep.subr.mxu0 0.0
    %5516 = vmatpush1.msra.mxu0 0.0
    %5517 = vmatprep.subr.mxu0 0.0
    %5518 = vmatpush1.msra.mxu0 0.0
    %5519 = vmatprep.subr.mxu0 0.0
    %5520 = vmatpush1.msra.mxu0 0.0
    %5521 = vmatprep.subr.mxu0 0.0
    %5522 = vmatpush1.msra.mxu0 0.0
    %5523 = vmatprep.mubr.f32.mxu0 0.0
    %v5524 = vand.u32 %v5231, 4294901760
    %v5525 = vsub.f32 %v5231, %v5524
    %5526 = vmatmul.mubr.f32.gmra.mrb[0].mxu0 %v5525
    %v5527 = vpop.f32.mrb[0].mxu0
    %v5528 = vadd.f32 %v5436, %v5527
    %v5529 = vpop.f32.mrb[0].mxu0
    %5530 = vdwg.mxu0
    %5531 = vmatprep.subr.mxu0 0.0
    %v5532 = vand.u32 %v5213, 4294901760
    %5533 = vmatpush1.msra.mxu0 %v5532
    %5534 = vmatprep.subr.mxu0 0.0
    %v5535 = vand.u32 %v5214, 4294901760
    %5536 = vmatpush1.msra.mxu0 %v5535
    %5537 = vmatprep.subr.mxu0 0.0
    %v5538 = vand.u32 %v5215, 4294901760
    %5539 = vmatpush1.msra.mxu0 %v5538
    %5540 = vmatprep.subr.mxu0 0.0
    %v5541 = vand.u32 %v5216, 4294901760
    %5542 = vmatpush1.msra.mxu0 %v5541
    %5543 = vmatprep.subr.mxu0 0.0
    %v5544 = vand.u32 %v5217, 4294901760
    %5545 = vmatpush1.msra.mxu0 %v5544
    %5546 = vmatprep.subr.mxu0 0.0
    %v5547 = vand.u32 %v5218, 4294901760
    %5548 = vmatpush1.msra.mxu0 %v5547
    %5549 = vmatprep.subr.mxu0 0.0
    %v5550 = vand.u32 %v5219, 4294901760
    %5551 = vmatpush1.msra.mxu0 %v5550
    %5552 = vmatprep.subr.mxu0 0.0
    %v5553 = vand.u32 %v5220, 4294901760
    %5554 = vmatpush1.msra.mxu0 %v5553
    %5555 = vmatprep.subr.mxu0 0.0
    %v5556 = vand.u32 %v5221, 4294901760
    %5557 = vmatpush1.msra.mxu0 %v5556
    %5558 = vmatprep.subr.mxu0 0.0
    %v5559 = vand.u32 %v5222, 4294901760
    %5560 = vmatpush1.msra.mxu0 %v5559
    %5561 = vmatprep.subr.mxu0 0.0
    %5562 = vmatpush1.msra.mxu0 0.0
    %5563 = vmatprep.subr.mxu0 0.0
    %5564 = vmatpush1.msra.mxu0 0.0
    %5565 = vmatprep.subr.mxu0 0.0
    %5566 = vmatpush1.msra.mxu0 0.0
    %5567 = vmatprep.subr.mxu0 0.0
    %5568 = vmatpush1.msra.mxu0 0.0
    %5569 = vmatprep.subr.mxu0 0.0
    %5570 = vmatpush1.msra.mxu0 0.0
    %5571 = vmatprep.subr.mxu0 0.0
    %5572 = vmatpush1.msra.mxu0 0.0
    %5573 = vmatprep.subr.mxu0 0.0
    %5574 = vmatpush1.msra.mxu0 0.0
    %5575 = vmatprep.subr.mxu0 0.0
    %5576 = vmatpush1.msra.mxu0 0.0
    %5577 = vmatprep.subr.mxu0 0.0
    %5578 = vmatpush1.msra.mxu0 0.0
    %5579 = vmatprep.subr.mxu0 0.0
    %5580 = vmatpush1.msra.mxu0 0.0
    %5581 = vmatprep.subr.mxu0 0.0
    %5582 = vmatpush1.msra.mxu0 0.0
    %5583 = vmatprep.subr.mxu0 0.0
    %5584 = vmatpush1.msra.mxu0 0.0
    %5585 = vmatprep.subr.mxu0 0.0
    %5586 = vmatpush1.msra.mxu0 0.0
    %5587 = vmatprep.subr.mxu0 0.0
    %5588 = vmatpush1.msra.mxu0 0.0
    %5589 = vmatprep.subr.mxu0 0.0
    %5590 = vmatpush1.msra.mxu0 0.0
    %5591 = vmatprep.subr.mxu0 0.0
    %5592 = vmatpush1.msra.mxu0 0.0
    %5593 = vmatprep.subr.mxu0 0.0
    %5594 = vmatpush1.msra.mxu0 0.0
    %5595 = vmatprep.subr.mxu0 0.0
    %5596 = vmatpush1.msra.mxu0 0.0
    %5597 = vmatprep.subr.mxu0 0.0
    %5598 = vmatpush1.msra.mxu0 0.0
    %5599 = vmatprep.subr.mxu0 0.0
    %5600 = vmatpush1.msra.mxu0 0.0
    %5601 = vmatprep.subr.mxu0 0.0
    %5602 = vmatpush1.msra.mxu0 0.0
    %5603 = vmatprep.subr.mxu0 0.0
    %5604 = vmatpush1.msra.mxu0 0.0
    %5605 = vmatprep.mubr.f32.mxu0 0.0
    %v5606 = vand.u32 %v5231, 4294901760
    %v5607 = vsub.f32 %v5231, %v5606
    %v5608 = vand.u32 %v5607, 4294901760
    %5609 = vmatmul.mubr.f32.gmra.mrb[0].mxu0 %v5608
    %v5610 = vpop.f32.mrb[0].mxu0
    %v5611 = vadd.f32 %v5528, %v5610
    %v5612 = vpop.f32.mrb[0].mxu0
    %5613 = vdwg.mxu0
    %5614 = vmatprep.subr.mxu0 0.0
    %v5615 = vand.u32 %v5213, 4294901760
    %v5616 = vsub.f32 %v5213, %v5615
    %v5617 = vand.u32 %v5616, 4294901760
    %5618 = vmatpush1.msra.mxu0 %v5617
    %5619 = vmatprep.subr.mxu0 0.0
    %v5620 = vand.u32 %v5214, 4294901760
    %v5621 = vsub.f32 %v5214, %v5620
    %v5622 = vand.u32 %v5621, 4294901760
    %5623 = vmatpush1.msra.mxu0 %v5622
    %5624 = vmatprep.subr.mxu0 0.0
    %v5625 = vand.u32 %v5215, 4294901760
    %v5626 = vsub.f32 %v5215, %v5625
    %v5627 = vand.u32 %v5626, 4294901760
    %5628 = vmatpush1.msra.mxu0 %v5627
    %5629 = vmatprep.subr.mxu0 0.0
    %v5630 = vand.u32 %v5216, 4294901760
    %v5631 = vsub.f32 %v5216, %v5630
    %v5632 = vand.u32 %v5631, 4294901760
    %5633 = vmatpush1.msra.mxu0 %v5632
    %5634 = vmatprep.subr.mxu0 0.0
    %v5635 = vand.u32 %v5217, 4294901760
    %v5636 = vsub.f32 %v5217, %v5635
    %v5637 = vand.u32 %v5636, 4294901760
    %5638 = vmatpush1.msra.mxu0 %v5637
    %5639 = vmatprep.subr.mxu0 0.0
    %v5640 = vand.u32 %v5218, 4294901760
    %v5641 = vsub.f32 %v5218, %v5640
    %v5642 = vand.u32 %v5641, 4294901760
    %5643 = vmatpush1.msra.mxu0 %v5642
    %5644 = vmatprep.subr.mxu0 0.0
    %v5645 = vand.u32 %v5219, 4294901760
    %v5646 = vsub.f32 %v5219, %v5645
    %v5647 = vand.u32 %v5646, 4294901760
    %5648 = vmatpush1.msra.mxu0 %v5647
    %5649 = vmatprep.subr.mxu0 0.0
    %v5650 = vand.u32 %v5220, 4294901760
    %v5651 = vsub.f32 %v5220, %v5650
    %v5652 = vand.u32 %v5651, 4294901760
    %5653 = vmatpush1.msra.mxu0 %v5652
    %5654 = vmatprep.subr.mxu0 0.0
    %v5655 = vand.u32 %v5221, 4294901760
    %v5656 = vsub.f32 %v5221, %v5655
    %v5657 = vand.u32 %v5656, 4294901760
    %5658 = vmatpush1.msra.mxu0 %v5657
    %5659 = vmatprep.subr.mxu0 0.0
    %v5660 = vand.u32 %v5222, 4294901760
    %v5661 = vsub.f32 %v5222, %v5660
    %v5662 = vand.u32 %v5661, 4294901760
    %5663 = vmatpush1.msra.mxu0 %v5662
    %5664 = vmatprep.subr.mxu0 0.0
    %5665 = vmatpush1.msra.mxu0 0.0
    %5666 = vmatprep.subr.mxu0 0.0
    %5667 = vmatpush1.msra.mxu0 0.0
    %5668 = vmatprep.subr.mxu0 0.0
    %5669 = vmatpush1.msra.mxu0 0.0
    %5670 = vmatprep.subr.mxu0 0.0
    %5671 = vmatpush1.msra.mxu0 0.0
    %5672 = vmatprep.subr.mxu0 0.0
    %5673 = vmatpush1.msra.mxu0 0.0
    %5674 = vmatprep.subr.mxu0 0.0
    %5675 = vmatpush1.msra.mxu0 0.0
    %5676 = vmatprep.subr.mxu0 0.0
    %5677 = vmatpush1.msra.mxu0 0.0
    %5678 = vmatprep.subr.mxu0 0.0
    %5679 = vmatpush1.msra.mxu0 0.0
    %5680 = vmatprep.subr.mxu0 0.0
    %5681 = vmatpush1.msra.mxu0 0.0
    %5682 = vmatprep.subr.mxu0 0.0
    %5683 = vmatpush1.msra.mxu0 0.0
    %5684 = vmatprep.subr.mxu0 0.0
    %5685 = vmatpush1.msra.mxu0 0.0
    %5686 = vmatprep.subr.mxu0 0.0
    %5687 = vmatpush1.msra.mxu0 0.0
    %5688 = vmatprep.subr.mxu0 0.0
    %5689 = vmatpush1.msra.mxu0 0.0
    %5690 = vmatprep.subr.mxu0 0.0
    %5691 = vmatpush1.msra.mxu0 0.0
    %5692 = vmatprep.subr.mxu0 0.0
    %5693 = vmatpush1.msra.mxu0 0.0
    %5694 = vmatprep.subr.mxu0 0.0
    %5695 = vmatpush1.msra.mxu0 0.0
    %5696 = vmatprep.subr.mxu0 0.0
    %5697 = vmatpush1.msra.mxu0 0.0
    %5698 = vmatprep.subr.mxu0 0.0
    %5699 = vmatpush1.msra.mxu0 0.0
    %5700 = vmatprep.subr.mxu0 0.0
    %5701 = vmatpush1.msra.mxu0 0.0
    %5702 = vmatprep.subr.mxu0 0.0
    %5703 = vmatpush1.msra.mxu0 0.0
    %5704 = vmatprep.subr.mxu0 0.0
    %5705 = vmatpush1.msra.mxu0 0.0
    %5706 = vmatprep.subr.mxu0 0.0
    %5707 = vmatpush1.msra.mxu0 0.0
    %5708 = vmatprep.mubr.f32.mxu0 0.0
    %v5709 = vand.u32 %v5231, 4294901760
    %5710 = vmatmul.mubr.f32.gmra.mrb[0].mxu0 %v5709
    %v5711 = vpop.f32.mrb[0].mxu0
    %v5712 = vadd.f32 %v5611, %v5711
    %v5713 = vpop.f32.mrb[0].mxu0
    %5714 = vdwg.mxu0
    %5715 = vmatprep.subr.mxu0 0.0
    %v5716 = vand.u32 %v5213, 4294901760
    %5717 = vmatpush1.msra.mxu0 %v5716
    %5718 = vmatprep.subr.mxu0 0.0
    %v5719 = vand.u32 %v5214, 4294901760
    %5720 = vmatpush1.msra.mxu0 %v5719
    %5721 = vmatprep.subr.mxu0 0.0
    %v5722 = vand.u32 %v5215, 4294901760
    %5723 = vmatpush1.msra.mxu0 %v5722
    %5724 = vmatprep.subr.mxu0 0.0
    %v5725 = vand.u32 %v5216, 4294901760
    %5726 = vmatpush1.msra.mxu0 %v5725
    %5727 = vmatprep.subr.mxu0 0.0
    %v5728 = vand.u32 %v5217, 4294901760
    %5729 = vmatpush1.msra.mxu0 %v5728
    %5730 = vmatprep.subr.mxu0 0.0
    %v5731 = vand.u32 %v5218, 4294901760
    %5732 = vmatpush1.msra.mxu0 %v5731
    %5733 = vmatprep.subr.mxu0 0.0
    %v5734 = vand.u32 %v5219, 4294901760
    %5735 = vmatpush1.msra.mxu0 %v5734
    %5736 = vmatprep.subr.mxu0 0.0
    %v5737 = vand.u32 %v5220, 4294901760
    %5738 = vmatpush1.msra.mxu0 %v5737
    %5739 = vmatprep.subr.mxu0 0.0
    %v5740 = vand.u32 %v5221, 4294901760
    %5741 = vmatpush1.msra.mxu0 %v5740
    %5742 = vmatprep.subr.mxu0 0.0
    %v5743 = vand.u32 %v5222, 4294901760
    %5744 = vmatpush1.msra.mxu0 %v5743
    %5745 = vmatprep.subr.mxu0 0.0
    %5746 = vmatpush1.msra.mxu0 0.0
    %5747 = vmatprep.subr.mxu0 0.0
    %5748 = vmatpush1.msra.mxu0 0.0
    %5749 = vmatprep.subr.mxu0 0.0
    %5750 = vmatpush1.msra.mxu0 0.0
    %5751 = vmatprep.subr.mxu0 0.0
    %5752 = vmatpush1.msra.mxu0 0.0
    %5753 = vmatprep.subr.mxu0 0.0
    %5754 = vmatpush1.msra.mxu0 0.0
    %5755 = vmatprep.subr.mxu0 0.0
    %5756 = vmatpush1.msra.mxu0 0.0
    %5757 = vmatprep.subr.mxu0 0.0
    %5758 = vmatpush1.msra.mxu0 0.0
    %5759 = vmatprep.subr.mxu0 0.0
    %5760 = vmatpush1.msra.mxu0 0.0
    %5761 = vmatprep.subr.mxu0 0.0
    %5762 = vmatpush1.msra.mxu0 0.0
    %5763 = vmatprep.subr.mxu0 0.0
    %5764 = vmatpush1.msra.mxu0 0.0
    %5765 = vmatprep.subr.mxu0 0.0
    %5766 = vmatpush1.msra.mxu0 0.0
    %5767 = vmatprep.subr.mxu0 0.0
    %5768 = vmatpush1.msra.mxu0 0.0
    %5769 = vmatprep.subr.mxu0 0.0
    %5770 = vmatpush1.msra.mxu0 0.0
    %5771 = vmatprep.subr.mxu0 0.0
    %5772 = vmatpush1.msra.mxu0 0.0
    %5773 = vmatprep.subr.mxu0 0.0
    %5774 = vmatpush1.msra.mxu0 0.0
    %5775 = vmatprep.subr.mxu0 0.0
    %5776 = vmatpush1.msra.mxu0 0.0
    %5777 = vmatprep.subr.mxu0 0.0
    %5778 = vmatpush1.msra.mxu0 0.0
    %5779 = vmatprep.subr.mxu0 0.0
    %5780 = vmatpush1.msra.mxu0 0.0
    %5781 = vmatprep.subr.mxu0 0.0
    %5782 = vmatpush1.msra.mxu0 0.0
    %5783 = vmatprep.subr.mxu0 0.0
    %5784 = vmatpush1.msra.mxu0 0.0
    %5785 = vmatprep.subr.mxu0 0.0
    %5786 = vmatpush1.msra.mxu0 0.0
    %5787 = vmatprep.subr.mxu0 0.0
    %5788 = vmatpush1.msra.mxu0 0.0
    %5789 = vmatprep.mubr.f32.mxu0 0.0
    %v5790 = vand.u32 %v5231, 4294901760
    %5791 = vmatmul.mubr.f32.gmra.mrb[0].mxu0 %v5790
    %v5792 = vpop.f32.mrb[0].mxu0
    %v5793 = vadd.f32 %v5712, %v5792
    %v5794 = vpop.f32.mrb[0].mxu0
    %5795 = vdwg.mxu0
    %5796 = vst [vmem:[#allocation5] sm:$0x3] %v5793
    // Predicated region
    $region82: #{conv_fft_ca_forward.1} parent=1 // pred_check
      _
    $region83: #{conv_fft_ca_forward.1} parent=1 // pred_check_branch
      %5798 = sbr.rel (0) target = $region85
    $region84: #{conv_fft_ca_forward.1} parent=1 // pred_region
      %s5800 = ssub.s32 32, 32
      %5801 = vsyncadd [#allocation3], %s5800
      %s5803 = sshll.u32 [#allocation5], 4
      %s5804 = int_to_ptr.vmem [resolvable:$true] %s5803
      %5806 = dma.vmem_to_hbm [thread:$0]  %s5804, 32, %s19, [#allocation3]
    $region85: #{conv_fft_ca_forward.1} parent=1 // pred_fallthru
      _
    // Predicated region
    $region86: #{conv_fft_ca_forward.1} parent=1 // pred_check
      _
    $region87: #{conv_fft_ca_forward.1} parent=1 // pred_check_branch
      %5808 = sbr.rel (0) target = $region89
    $region88: #{conv_fft_ca_forward.1} parent=1 // pred_region
      %5809 = dma.done [#allocation3], 32
    $region89: #{conv_fft_ca_forward.1} parent=1 // pred_fallthru
      _
    %5810 = vsyncpa [#allocation3], 1
    %5811 = vsyncpa [#allocation4], 1

</llo_original>
